<compile_context>
chip_gen: v5e
topology: v5e:2x2
jax: 0.10.0
libtpu: 0.0.40
codegen_flags: <defaults>
</compile_context>

<pallas_src>
import jax
import jax.numpy as jnp
from jax.experimental import pallas as pl
from jax.experimental.pallas import tpu as pltpu


ROW_PITCH = 16                      # image width == row pitch of the (b, i, j) flattening
IMG_ROWS = ROW_PITCH * ROW_PITCH    # rows per image = 256


# ------------------------------ fused kernel --------------------------------

def _cnn_fused_kernel(xcat_ref, w1e_ref, b1c_ref, w2c_ref, b2_ref,
                      fc1w_hbm, fc1b_ref, fc2w_ref, fc2b_ref,
                      o_ref,
                      y1cat_s, y2_s, pmax_s, fc1w_v, fc1_sem):
    # xcat_ref : (B*256, 45)  15-tap lane-concat of the NHWC input rows
    # y1cat_s  : (B*256, 96)  dx-expanded conv1 activations: [.., dx*32+c] = relu(conv1)[r+dx, c]
    # y2_s     : (B*256-32, 64) conv2 activations (16-pitch rows; tail/garbage rows unused)
    # pmax_s   : (LP, 64)      slab-wide 2x2-window max of y2 (valid at pooled rows only)
    # fc1w_v   : (2304, 128)   VMEM destination of the manual fc1 weight DMA
    B = o_ref.shape[0]
    L2 = y2_s.shape[0]
    LP = pmax_s.shape[0]
    f32 = jnp.float32

    # Kick off the big fc1 weight copy now; it overlaps with the conv / pool stages.
    fc1_copy = pltpu.make_async_copy(fc1w_hbm, fc1w_v, fc1_sem)
    fc1_copy.start()

    # ---- conv1 (3 -> 32, k=3) + dx expansion: ONE GEMM, bias+relu fused into the store.
    y1cat_s[...] = jnp.maximum(
        jnp.dot(xcat_ref[...], w1e_ref[...], preferred_element_type=f32)
        + b1c_ref[...], 0.0)

    # ---- conv2 (32 -> 64, k=3): 3 aligned GEMMs over dy with K = 96 (dx folded on lanes).
    acc = jnp.dot(y1cat_s[0:L2, :], w2c_ref[0:96, :], preferred_element_type=f32)
    acc = acc + jnp.dot(y1cat_s[ROW_PITCH:ROW_PITCH + L2, :],
                        w2c_ref[96:192, :], preferred_element_type=f32)
    acc = acc + jnp.dot(y1cat_s[2 * ROW_PITCH:2 * ROW_PITCH + L2, :],
                        w2c_ref[192:288, :], preferred_element_type=f32)
    y2_s[...] = jnp.maximum(acc + b2_ref[...], 0.0)

    # ---- 2x2 max-pool, vectorized: one slab-wide 4-way max (window = +0, +1, +16, +17).
    pmax_s[...] = jnp.maximum(
        jnp.maximum(y2_s[0:LP, :], y2_s[1:LP + 1, :]),
        jnp.maximum(y2_s[ROW_PITCH:ROW_PITCH + LP, :],
                    y2_s[ROW_PITCH + 1:ROW_PITCH + LP + 1, :]))

    # fc1 weights must be resident from here on.
    fc1_copy.wait()

    # ---- fc1 (2304 -> 128): 36 accumulating (B,64)x(64,128) GEMMs, lhs gathered
    #      directly from the pooled-max slab (rows b*256 + 32*io + 2*jo).
    h = None
    for r in range(36):
        io, jo = divmod(r, 6)
        rr = 2 * io * ROW_PITCH + 2 * jo
        rows = [pmax_s[b * IMG_ROWS + rr: b * IMG_ROWS + rr + 1, :] for b in range(B)]
        lhs = rows[0] if B == 1 else jnp.concatenate(rows, axis=0)
        t = jnp.dot(lhs, fc1w_v[r * 64:(r + 1) * 64, :], preferred_element_type=f32)
        h = t if h is None else h + t
    h = jnp.maximum(h + fc1b_ref[...], 0.0)

    # ---- fc2 (128 -> 10) + numerically stable log_softmax ----
    z = jnp.dot(h, fc2w_ref[...], preferred_element_type=f32) + fc2b_ref[...]
    m = jnp.max(z, axis=-1, keepdims=True)
    s = z - m
    lse = jnp.log(jnp.sum(jnp.exp(s), axis=-1, keepdims=True))
    o_ref[...] = (s - lse).astype(o_ref.dtype)


# ----------------------------- wrapper / layout ------------------------------

def _vmem():
    return pl.BlockSpec(memory_space=pltpu.MemorySpace.VMEM)


def prepare_params(params):
    """One-time (hoisted) weight relayout into the GEMM layouts the kernel consumes."""
    w1 = params["w1"]        # (32, 3, 3, 3)  = (co, ci, kh, kw)
    w2 = params["w2"]        # (64, 32, 3, 3)
    fc1w = params["fc1_w"]   # (128, 2304), PyTorch in-index = c*36 + io*6 + jo

    # conv1 weights, dx-expanded: W1e[(dy*5+dxx)*3+ci, dx*32+co] = w1[co,ci,dy,dxx-dx]
    # (zero where dxx-dx is outside 0..2).  One GEMM then yields the 96-lane y1cat.
    w1_t = jnp.transpose(w1, (2, 3, 1, 0))               # (dy, dxp, ci, co)
    w1e = jnp.zeros((3, 5, 3, 3, 32), jnp.float32)       # (dy, dxx, ci, dx, co)
    for dx in range(3):
        w1e = w1e.at[:, dx:dx + 3, :, dx, :].set(w1_t)
    w1e = w1e.reshape(45, 96)

    return {
        "w1e": w1e,
        "b1c": jnp.tile(params["b1"].reshape(1, 32), (1, 3)),       # (1, 96)
        "w2c": jnp.transpose(w2, (2, 3, 1, 0)).reshape(288, 64),    # [dy*96+dx*32+ci, co]
        "b2":  params["b2"].reshape(1, 64),
        # fc1 columns permuted from PyTorch's (c, h, w) flatten order to (h, w, c).
        "fc1_w": jnp.transpose(fc1w.reshape(128, 64, 6, 6),
                               (2, 3, 1, 0)).reshape(2304, 128),    # [(io*6+jo)*64+c, n]
        "fc1_b": params["fc1_b"].reshape(1, 128),
        "fc2_w": params["fc2_w"].T,                                 # (128, 10)
        "fc2_b": params["fc2_b"].reshape(1, 10),
    }


@jax.jit
def cnn_forward(x, prepped):
    """x: (B, 3, 16, 16) NCHW float32, identical to the PyTorch module's input."""
    B, C, H, W = x.shape
    assert (C, H, W) == (3, ROW_PITCH, ROW_PITCH)

    nrows = B * IMG_ROWS
    # Per-call glue: NCHW -> NHWC rows, then the 15-tap (dy, dxx) lane concat for conv1.
    x2d = jnp.transpose(x, (0, 2, 3, 1)).reshape(nrows, 3)
    xpad = jnp.concatenate([x2d, jnp.zeros((2 * ROW_PITCH + 4, 3), x2d.dtype)], axis=0)
    offs = [dy * ROW_PITCH + dxx for dy in range(3) for dxx in range(5)]
    xcat = jnp.concatenate([xpad[k:k + nrows, :] for k in offs], axis=1)   # (nrows, 45)

    L2 = nrows - 2 * ROW_PITCH           # conv2 rows computed (valid wherever later read)
    LP = (B - 1) * IMG_ROWS + 176        # pooled-max slab rows, 8-aligned

    # Static guards for the garbage-tail-row invariant (see header comment).
    assert L2 % 8 == 0 and LP % 8 == 0
    assert LP + ROW_PITCH + 1 <= L2                         # pool reads stay inside y2_s
    assert (B - 1) * IMG_ROWS + 10 * ROW_PITCH + 10 < LP    # last pooled row inside pmax_s

    flops = 2 * (nrows * 45 * 96 + 3 * L2 * 96 * 64 + B * 2304 * 128 + B * 128 * 10)
    bytes_accessed = 4 * (xcat.size + 45 * 96 + 96 + 288 * 64 + 64
                          + 2304 * 128 + 128 + 128 * 10 + 10 + B * 10)

    return pl.pallas_call(
        _cnn_fused_kernel,
        out_shape=jax.ShapeDtypeStruct((B, 10), jnp.float32),
        in_specs=[_vmem(), _vmem(), _vmem(), _vmem(), _vmem(),
                  pl.BlockSpec(memory_space=pl.ANY),   # fc1_w stays in HBM; DMA'd manually
                  _vmem(), _vmem(), _vmem()],
        out_specs=_vmem(),
        scratch_shapes=[
            pltpu.VMEM((nrows, 96), jnp.float32),      # dx-expanded conv1 activations
            pltpu.VMEM((L2, 64), jnp.float32),         # conv2 activations
            pltpu.VMEM((LP, 64), jnp.float32),         # 2x2-window max slab
            pltpu.VMEM((2304, 128), jnp.float32),      # fc1 weights (manual DMA dest)
            pltpu.SemaphoreType.DMA(()),               # fc1 weight copy semaphore
        ],
        cost_estimate=pl.CostEstimate(flops=flops, transcendentals=11 * B,
                                      bytes_accessed=bytes_accessed),
    )(xcat, prepped["w1e"], prepped["b1c"], prepped["w2c"], prepped["b2"],
      prepped["fc1_w"], prepped["fc1_b"], prepped["fc2_w"], prepped["fc2_b"])


# ---------------------- pure-JAX reference (for checking) --------------------

def _reference_forward(x, params):
    """Plain-JAX mirror of the PyTorch module (correctness check only)."""
    hp = jax.lax.Precision.HIGHEST
    B = x.shape[0]

    def im2col(xn, k):
        Bn, C, H, W = xn.shape
        Ho, Wo = H - k + 1, W - k + 1
        cols = [xn[:, :, dy:dy + Ho, dx:dx + Wo] for dy in range(k) for dx in range(k)]
        p = jnp.stack(cols, axis=2)                 # (B, C, k*k, Ho, Wo)
        p = p.transpose(0, 3, 4, 1, 2)              # (B, Ho, Wo, C, k*k)
        return p.reshape(Bn * Ho * Wo, C * k * k)

    p1 = im2col(x, 3)
    y1 = jnp.maximum(jnp.matmul(p1, params["w1"].reshape(32, 27).T, precision=hp)
                     + params["b1"], 0.0)
    y1 = y1.reshape(B, 14, 14, 32).transpose(0, 3, 1, 2)

    p2 = im2col(y1, 3)
    y2 = jnp.maximum(jnp.matmul(p2, params["w2"].reshape(64, 288).T, precision=hp)
                     + params["b2"], 0.0)
    y2 = y2.reshape(B, 12, 12, 64).transpose(0, 3, 1, 2)

    v = jnp.maximum(jnp.maximum(y2[:, :, 0::2, 0::2], y2[:, :, 0::2, 1::2]),
                    jnp.maximum(y2[:, :, 1::2, 0::2], y2[:, :, 1::2, 1::2]))
    flat = v.reshape(B, -1)                          # (c, h, w) flatten, like PyTorch

    h = jnp.maximum(jnp.matmul(flat, params["fc1_w"].T, precision=hp)
                    + params["fc1_b"], 0.0)
    z = jnp.matmul(h, params["fc2_w"].T, precision=hp) + params["fc2_b"]
    return jax.nn.log_softmax(z, axis=-1)


# --------------------------- deterministic params ---------------------------

def init_params(key):
    def unif(k, shape, fan_in):
        bound = 1.0 / jnp.sqrt(jnp.float32(fan_in))
        return jax.random.uniform(k, shape, jnp.float32, -bound, bound)

    ks = jax.random.split(key, 8)
    return {
        "w1":    unif(ks[0], (32, 3, 3, 3),   3 * 3 * 3),
        "b1":    unif(ks[1], (32,),           3 * 3 * 3),
        "w2":    unif(ks[2], (64, 32, 3, 3),  32 * 3 * 3),
        "b2":    unif(ks[3], (64,),           32 * 3 * 3),
        "fc1_w": unif(ks[4], (128, 2304),     2304),
        "fc1_b": unif(ks[5], (128,),          2304),
        "fc2_w": unif(ks[6], (10, 128),       128),
        "fc2_b": unif(ks[7], (10,),           128),
    }


if __name__ == "__main__":
    key = jax.random.PRNGKey(0)
    pkey, xkey = jax.random.split(key)
    params = init_params(pkey)
    prepped = prepare_params(params)     # hoisted one-time weight relayout

    # (B, C, H, W) = (2, 3, 16, 16): fc1 expects 6*6*64 => 16x16 spatial input
    x = jax.random.normal(xkey, (2, 3, 16, 16), dtype=jnp.float32)

    out = jax.block_until_ready(cnn_forward(x, prepped))
    assert out.shape == (2, 10)

    # sanity: log_softmax rows exp-sum to 1
    assert bool(jnp.allclose(jnp.sum(jnp.exp(out), axis=1), 1.0, atol=1e-3))

    # correctness vs a pure-JAX reference of the same module (tolerance accounts for
    # TPU MXU matmul precision inside the kernel vs HIGHEST-precision reference)
    ref = _reference_forward(x, params)
    assert bool(jnp.allclose(out, ref, atol=2e-2, rtol=2e-2)), \
        float(jnp.max(jnp.abs(out - ref)))

    print("KERNEL_OK")
</pallas_src>

<mosaic_0001>
module attributes {stable_mosaic.version = 11 : i64} {
  func.func @_cnn_fused_kernel(%arg0: memref<512x45xf32, #tpu.memory_space<vmem>>, %arg1: memref<45x96xf32, #tpu.memory_space<vmem>>, %arg2: memref<1x96xf32, #tpu.memory_space<vmem>>, %arg3: memref<288x64xf32, #tpu.memory_space<vmem>>, %arg4: memref<1x64xf32, #tpu.memory_space<vmem>>, %arg5: memref<2304x128xf32, #tpu.memory_space<any>>, %arg6: memref<1x128xf32, #tpu.memory_space<vmem>>, %arg7: memref<128x10xf32, #tpu.memory_space<vmem>>, %arg8: memref<1x10xf32, #tpu.memory_space<vmem>>, %arg9: memref<2x10xf32, #tpu.memory_space<vmem>>, %arg10: memref<512x96xf32, #tpu.memory_space<vmem>>, %arg11: memref<480x64xf32, #tpu.memory_space<vmem>>, %arg12: memref<432x64xf32, #tpu.memory_space<vmem>>, %arg13: memref<2304x128xf32, #tpu.memory_space<vmem>>, %arg14: memref<!tpu.dma_semaphore, #tpu.memory_space<semaphore_mem>>) attributes {dimension_semantics = [], scalar_prefetch = 0 : i64, scratch_operands = 5 : i64, tpu.core_type = #tpu.core_type<tc>} {
    tpu.enqueue_dma source(%arg5 : memref<2304x128xf32, #tpu.memory_space<any>>) target(%arg13 : memref<2304x128xf32, #tpu.memory_space<vmem>>) target_semaphore(%arg14 : memref<!tpu.dma_semaphore, #tpu.memory_space<semaphore_mem>>)
    %c0 = arith.constant 0 : index
    %c0_0 = arith.constant 0 : index
    %0 = vector.load %arg0[%c0, %c0_0] : memref<512x45xf32, #tpu.memory_space<vmem>>, vector<512x45xf32>
    %c0_1 = arith.constant 0 : index
    %c0_2 = arith.constant 0 : index
    %1 = vector.load %arg1[%c0_1, %c0_2] : memref<45x96xf32, #tpu.memory_space<vmem>>, vector<45x96xf32>
    %cst = arith.constant dense<0.000000e+00> : vector<512x96xf32>
    %2 = tpu.matmul %0, %1, %cst {dimension_numbers = #tpu.dot_dimension_numbers<[1], [0], [0], [1], [0, 0, 1, 1], [], []>} : vector<512x45xf32>, vector<45x96xf32>, vector<512x96xf32> -> vector<512x96xf32>
    %c0_3 = arith.constant 0 : index
    %c0_4 = arith.constant 0 : index
    %3 = vector.load %arg2[%c0_3, %c0_4] : memref<1x96xf32, #tpu.memory_space<vmem>>, vector<1x96xf32>
    %4 = vector.broadcast %3 : vector<1x96xf32> to vector<512x96xf32>
    %5 = arith.addf %2, %4 : vector<512x96xf32>
    %cst_5 = arith.constant 0.000000e+00 : f32
    %6 = vector.broadcast %cst_5 : f32 to vector<512x96xf32>
    %7 = arith.maximumf %5, %6 : vector<512x96xf32>
    %c0_6 = arith.constant 0 : index
    %c0_7 = arith.constant 0 : index
    %8 = vector.load %arg10[%c0_6, %c0_7] : memref<512x96xf32, #tpu.memory_space<vmem>>, vector<512x96xf32>
    tpu.vector_store %arg10[%c0_6, %c0_7], %7 {strides = array<i32>} : memref<512x96xf32, #tpu.memory_space<vmem>>, vector<512x96xf32>,
    %c0_8 = arith.constant 0 : index
    %c0_9 = arith.constant 0 : index
    %9 = vector.load %arg10[%c0_8, %c0_9] : memref<512x96xf32, #tpu.memory_space<vmem>>, vector<480x96xf32>
    %c0_10 = arith.constant 0 : index
    %c0_11 = arith.constant 0 : index
    %10 = vector.load %arg3[%c0_10, %c0_11] : memref<288x64xf32, #tpu.memory_space<vmem>>, vector<96x64xf32>
    %cst_12 = arith.constant dense<0.000000e+00> : vector<480x64xf32>
    %11 = tpu.matmul %9, %10, %cst_12 {dimension_numbers = #tpu.dot_dimension_numbers<[1], [0], [0], [1], [0, 0, 1, 1], [], []>} : vector<480x96xf32>, vector<96x64xf32>, vector<480x64xf32> -> vector<480x64xf32>
    %c16 = arith.constant 16 : index
    %c0_13 = arith.constant 0 : index
    %12 = vector.load %arg10[%c16, %c0_13] : memref<512x96xf32, #tpu.memory_space<vmem>>, vector<480x96xf32>
    %c96 = arith.constant 96 : index
    %c0_14 = arith.constant 0 : index
    %13 = vector.load %arg3[%c96, %c0_14] : memref<288x64xf32, #tpu.memory_space<vmem>>, vector<96x64xf32>
    %cst_15 = arith.constant dense<0.000000e+00> : vector<480x64xf32>
    %14 = tpu.matmul %12, %13, %cst_15 {dimension_numbers = #tpu.dot_dimension_numbers<[1], [0], [0], [1], [0, 0, 1, 1], [], []>} : vector<480x96xf32>, vector<96x64xf32>, vector<480x64xf32> -> vector<480x64xf32>
    %15 = arith.addf %11, %14 : vector<480x64xf32>
    %c32 = arith.constant 32 : index
    %c0_16 = arith.constant 0 : index
    %16 = vector.load %arg10[%c32, %c0_16] : memref<512x96xf32, #tpu.memory_space<vmem>>, vector<480x96xf32>
    %c192 = arith.constant 192 : index
    %c0_17 = arith.constant 0 : index
    %17 = vector.load %arg3[%c192, %c0_17] : memref<288x64xf32, #tpu.memory_space<vmem>>, vector<96x64xf32>
    %cst_18 = arith.constant dense<0.000000e+00> : vector<480x64xf32>
    %18 = tpu.matmul %16, %17, %cst_18 {dimension_numbers = #tpu.dot_dimension_numbers<[1], [0], [0], [1], [0, 0, 1, 1], [], []>} : vector<480x96xf32>, vector<96x64xf32>, vector<480x64xf32> -> vector<480x64xf32>
    %19 = arith.addf %15, %18 : vector<480x64xf32>
    %c0_19 = arith.constant 0 : index
    %c0_20 = arith.constant 0 : index
    %20 = vector.load %arg4[%c0_19, %c0_20] : memref<1x64xf32, #tpu.memory_space<vmem>>, vector<1x64xf32>
    %21 = vector.broadcast %20 : vector<1x64xf32> to vector<480x64xf32>
    %22 = arith.addf %19, %21 : vector<480x64xf32>
    %cst_21 = arith.constant 0.000000e+00 : f32
    %23 = vector.broadcast %cst_21 : f32 to vector<480x64xf32>
    %24 = arith.maximumf %22, %23 : vector<480x64xf32>
    %c0_22 = arith.constant 0 : index
    %c0_23 = arith.constant 0 : index
    %25 = vector.load %arg11[%c0_22, %c0_23] : memref<480x64xf32, #tpu.memory_space<vmem>>, vector<480x64xf32>
    tpu.vector_store %arg11[%c0_22, %c0_23], %24 {strides = array<i32>} : memref<480x64xf32, #tpu.memory_space<vmem>>, vector<480x64xf32>,
    %c0_24 = arith.constant 0 : index
    %c0_25 = arith.constant 0 : index
    %26 = vector.load %arg11[%c0_24, %c0_25] : memref<480x64xf32, #tpu.memory_space<vmem>>, vector<432x64xf32>
    %c1 = arith.constant 1 : index
    %c0_26 = arith.constant 0 : index
    %27 = vector.load %arg11[%c1, %c0_26] : memref<480x64xf32, #tpu.memory_space<vmem>>, vector<432x64xf32>
    %28 = arith.maximumf %26, %27 : vector<432x64xf32>
    %c16_27 = arith.constant 16 : index
    %c0_28 = arith.constant 0 : index
    %29 = vector.load %arg11[%c16_27, %c0_28] : memref<480x64xf32, #tpu.memory_space<vmem>>, vector<432x64xf32>
    %c17 = arith.constant 17 : index
    %c0_29 = arith.constant 0 : index
    %30 = vector.load %arg11[%c17, %c0_29] : memref<480x64xf32, #tpu.memory_space<vmem>>, vector<432x64xf32>
    %31 = arith.maximumf %29, %30 : vector<432x64xf32>
    %32 = arith.maximumf %28, %31 : vector<432x64xf32>
    %c0_30 = arith.constant 0 : index
    %c0_31 = arith.constant 0 : index
    %33 = vector.load %arg12[%c0_30, %c0_31] : memref<432x64xf32, #tpu.memory_space<vmem>>, vector<432x64xf32>
    tpu.vector_store %arg12[%c0_30, %c0_31], %32 {strides = array<i32>} : memref<432x64xf32, #tpu.memory_space<vmem>>, vector<432x64xf32>,
    tpu.wait_dma2 semaphore(%arg14 : memref<!tpu.dma_semaphore, #tpu.memory_space<semaphore_mem>>) src(%arg5 : memref<2304x128xf32, #tpu.memory_space<any>>) dst(%arg13 : memref<2304x128xf32, #tpu.memory_space<vmem>>)
    %c0_32 = arith.constant 0 : index
    %c0_33 = arith.constant 0 : index
    %34 = vector.load %arg12[%c0_32, %c0_33] : memref<432x64xf32, #tpu.memory_space<vmem>>, vector<1x64xf32>
    %c256 = arith.constant 256 : index
    %c0_34 = arith.constant 0 : index
    %35 = vector.load %arg12[%c256, %c0_34] : memref<432x64xf32, #tpu.memory_space<vmem>>, vector<1x64xf32>
    %36 = tpu.concatenate %34, %35 in 0 : vector<1x64xf32>, vector<1x64xf32> -> vector<2x64xf32>
    %c0_35 = arith.constant 0 : index
    %c0_36 = arith.constant 0 : index
    %37 = vector.load %arg13[%c0_35, %c0_36] : memref<2304x128xf32, #tpu.memory_space<vmem>>, vector<64x128xf32>
    %cst_37 = arith.constant dense<0.000000e+00> : vector<2x128xf32>
    %38 = tpu.matmul %36, %37, %cst_37 {dimension_numbers = #tpu.dot_dimension_numbers<[1], [0], [0], [1], [0, 0, 1, 1], [], []>} : vector<2x64xf32>, vector<64x128xf32>, vector<2x128xf32> -> vector<2x128xf32>
    %c2 = arith.constant 2 : index
    %c0_38 = arith.constant 0 : index
    %39 = vector.load %arg12[%c2, %c0_38] : memref<432x64xf32, #tpu.memory_space<vmem>>, vector<1x64xf32>
    %c258 = arith.constant 258 : index
    %c0_39 = arith.constant 0 : index
    %40 = vector.load %arg12[%c258, %c0_39] : memref<432x64xf32, #tpu.memory_space<vmem>>, vector<1x64xf32>
    %41 = tpu.concatenate %39, %40 in 0 : vector<1x64xf32>, vector<1x64xf32> -> vector<2x64xf32>
    %c64 = arith.constant 64 : index
    %c0_40 = arith.constant 0 : index
    %42 = vector.load %arg13[%c64, %c0_40] : memref<2304x128xf32, #tpu.memory_space<vmem>>, vector<64x128xf32>
    %cst_41 = arith.constant dense<0.000000e+00> : vector<2x128xf32>
    %43 = tpu.matmul %41, %42, %cst_41 {dimension_numbers = #tpu.dot_dimension_numbers<[1], [0], [0], [1], [0, 0, 1, 1], [], []>} : vector<2x64xf32>, vector<64x128xf32>, vector<2x128xf32> -> vector<2x128xf32>
    %44 = arith.addf %38, %43 : vector<2x128xf32>
    %c4 = arith.constant 4 : index
    %c0_42 = arith.constant 0 : index
    %45 = vector.load %arg12[%c4, %c0_42] : memref<432x64xf32, #tpu.memory_space<vmem>>, vector<1x64xf32>
    %c260 = arith.constant 260 : index
    %c0_43 = arith.constant 0 : index
    %46 = vector.load %arg12[%c260, %c0_43] : memref<432x64xf32, #tpu.memory_space<vmem>>, vector<1x64xf32>
    %47 = tpu.concatenate %45, %46 in 0 : vector<1x64xf32>, vector<1x64xf32> -> vector<2x64xf32>
    %c128 = arith.constant 128 : index
    %c0_44 = arith.constant 0 : index
    %48 = vector.load %arg13[%c128, %c0_44] : memref<2304x128xf32, #tpu.memory_space<vmem>>, vector<64x128xf32>
    %cst_45 = arith.constant dense<0.000000e+00> : vector<2x128xf32>
    %49 = tpu.matmul %47, %48, %cst_45 {dimension_numbers = #tpu.dot_dimension_numbers<[1], [0], [0], [1], [0, 0, 1, 1], [], []>} : vector<2x64xf32>, vector<64x128xf32>, vector<2x128xf32> -> vector<2x128xf32>
    %50 = arith.addf %44, %49 : vector<2x128xf32>
    %c6 = arith.constant 6 : index
    %c0_46 = arith.constant 0 : index
    %51 = vector.load %arg12[%c6, %c0_46] : memref<432x64xf32, #tpu.memory_space<vmem>>, vector<1x64xf32>
    %c262 = arith.constant 262 : index
    %c0_47 = arith.constant 0 : index
    %52 = vector.load %arg12[%c262, %c0_47] : memref<432x64xf32, #tpu.memory_space<vmem>>, vector<1x64xf32>
    %53 = tpu.concatenate %51, %52 in 0 : vector<1x64xf32>, vector<1x64xf32> -> vector<2x64xf32>
    %c192_48 = arith.constant 192 : index
    %c0_49 = arith.constant 0 : index
    %54 = vector.load %arg13[%c192_48, %c0_49] : memref<2304x128xf32, #tpu.memory_space<vmem>>, vector<64x128xf32>
    %cst_50 = arith.constant dense<0.000000e+00> : vector<2x128xf32>
    %55 = tpu.matmul %53, %54, %cst_50 {dimension_numbers = #tpu.dot_dimension_numbers<[1], [0], [0], [1], [0, 0, 1, 1], [], []>} : vector<2x64xf32>, vector<64x128xf32>, vector<2x128xf32> -> vector<2x128xf32>
    %56 = arith.addf %50, %55 : vector<2x128xf32>
    %c8 = arith.constant 8 : index
    %c0_51 = arith.constant 0 : index
    %57 = vector.load %arg12[%c8, %c0_51] : memref<432x64xf32, #tpu.memory_space<vmem>>, vector<1x64xf32>
    %c264 = arith.constant 264 : index
    %c0_52 = arith.constant 0 : index
    %58 = vector.load %arg12[%c264, %c0_52] : memref<432x64xf32, #tpu.memory_space<vmem>>, vector<1x64xf32>
    %59 = tpu.concatenate %57, %58 in 0 : vector<1x64xf32>, vector<1x64xf32> -> vector<2x64xf32>
    %c256_53 = arith.constant 256 : index
    %c0_54 = arith.constant 0 : index
    %60 = vector.load %arg13[%c256_53, %c0_54] : memref<2304x128xf32, #tpu.memory_space<vmem>>, vector<64x128xf32>
    %cst_55 = arith.constant dense<0.000000e+00> : vector<2x128xf32>
    %61 = tpu.matmul %59, %60, %cst_55 {dimension_numbers = #tpu.dot_dimension_numbers<[1], [0], [0], [1], [0, 0, 1, 1], [], []>} : vector<2x64xf32>, vector<64x128xf32>, vector<2x128xf32> -> vector<2x128xf32>
    %62 = arith.addf %56, %61 : vector<2x128xf32>
    %c10 = arith.constant 10 : index
    %c0_56 = arith.constant 0 : index
    %63 = vector.load %arg12[%c10, %c0_56] : memref<432x64xf32, #tpu.memory_space<vmem>>, vector<1x64xf32>
    %c266 = arith.constant 266 : index
    %c0_57 = arith.constant 0 : index
    %64 = vector.load %arg12[%c266, %c0_57] : memref<432x64xf32, #tpu.memory_space<vmem>>, vector<1x64xf32>
    %65 = tpu.concatenate %63, %64 in 0 : vector<1x64xf32>, vector<1x64xf32> -> vector<2x64xf32>
    %c320 = arith.constant 320 : index
    %c0_58 = arith.constant 0 : index
    %66 = vector.load %arg13[%c320, %c0_58] : memref<2304x128xf32, #tpu.memory_space<vmem>>, vector<64x128xf32>
    %cst_59 = arith.constant dense<0.000000e+00> : vector<2x128xf32>
    %67 = tpu.matmul %65, %66, %cst_59 {dimension_numbers = #tpu.dot_dimension_numbers<[1], [0], [0], [1], [0, 0, 1, 1], [], []>} : vector<2x64xf32>, vector<64x128xf32>, vector<2x128xf32> -> vector<2x128xf32>
    %68 = arith.addf %62, %67 : vector<2x128xf32>
    %c32_60 = arith.constant 32 : index
    %c0_61 = arith.constant 0 : index
    %69 = vector.load %arg12[%c32_60, %c0_61] : memref<432x64xf32, #tpu.memory_space<vmem>>, vector<1x64xf32>
    %c288 = arith.constant 288 : index
    %c0_62 = arith.constant 0 : index
    %70 = vector.load %arg12[%c288, %c0_62] : memref<432x64xf32, #tpu.memory_space<vmem>>, vector<1x64xf32>
    %71 = tpu.concatenate %69, %70 in 0 : vector<1x64xf32>, vector<1x64xf32> -> vector<2x64xf32>
    %c384 = arith.constant 384 : index
    %c0_63 = arith.constant 0 : index
    %72 = vector.load %arg13[%c384, %c0_63] : memref<2304x128xf32, #tpu.memory_space<vmem>>, vector<64x128xf32>
    %cst_64 = arith.constant dense<0.000000e+00> : vector<2x128xf32>
    %73 = tpu.matmul %71, %72, %cst_64 {dimension_numbers = #tpu.dot_dimension_numbers<[1], [0], [0], [1], [0, 0, 1, 1], [], []>} : vector<2x64xf32>, vector<64x128xf32>, vector<2x128xf32> -> vector<2x128xf32>
    %74 = arith.addf %68, %73 : vector<2x128xf32>
    %c34 = arith.constant 34 : index
    %c0_65 = arith.constant 0 : index
    %75 = vector.load %arg12[%c34, %c0_65] : memref<432x64xf32, #tpu.memory_space<vmem>>, vector<1x64xf32>
    %c290 = arith.constant 290 : index
    %c0_66 = arith.constant 0 : index
    %76 = vector.load %arg12[%c290, %c0_66] : memref<432x64xf32, #tpu.memory_space<vmem>>, vector<1x64xf32>
    %77 = tpu.concatenate %75, %76 in 0 : vector<1x64xf32>, vector<1x64xf32> -> vector<2x64xf32>
    %c448 = arith.constant 448 : index
    %c0_67 = arith.constant 0 : index
    %78 = vector.load %arg13[%c448, %c0_67] : memref<2304x128xf32, #tpu.memory_space<vmem>>, vector<64x128xf32>
    %cst_68 = arith.constant dense<0.000000e+00> : vector<2x128xf32>
    %79 = tpu.matmul %77, %78, %cst_68 {dimension_numbers = #tpu.dot_dimension_numbers<[1], [0], [0], [1], [0, 0, 1, 1], [], []>} : vector<2x64xf32>, vector<64x128xf32>, vector<2x128xf32> -> vector<2x128xf32>
    %80 = arith.addf %74, %79 : vector<2x128xf32>
    %c36 = arith.constant 36 : index
    %c0_69 = arith.constant 0 : index
    %81 = vector.load %arg12[%c36, %c0_69] : memref<432x64xf32, #tpu.memory_space<vmem>>, vector<1x64xf32>
    %c292 = arith.constant 292 : index
    %c0_70 = arith.constant 0 : index
    %82 = vector.load %arg12[%c292, %c0_70] : memref<432x64xf32, #tpu.memory_space<vmem>>, vector<1x64xf32>
    %83 = tpu.concatenate %81, %82 in 0 : vector<1x64xf32>, vector<1x64xf32> -> vector<2x64xf32>
    %c512 = arith.constant 512 : index
    %c0_71 = arith.constant 0 : index
    %84 = vector.load %arg13[%c512, %c0_71] : memref<2304x128xf32, #tpu.memory_space<vmem>>, vector<64x128xf32>
    %cst_72 = arith.constant dense<0.000000e+00> : vector<2x128xf32>
    %85 = tpu.matmul %83, %84, %cst_72 {dimension_numbers = #tpu.dot_dimension_numbers<[1], [0], [0], [1], [0, 0, 1, 1], [], []>} : vector<2x64xf32>, vector<64x128xf32>, vector<2x128xf32> -> vector<2x128xf32>
    %86 = arith.addf %80, %85 : vector<2x128xf32>
    %c38 = arith.constant 38 : index
    %c0_73 = arith.constant 0 : index
    %87 = vector.load %arg12[%c38, %c0_73] : memref<432x64xf32, #tpu.memory_space<vmem>>, vector<1x64xf32>
    %c294 = arith.constant 294 : index
    %c0_74 = arith.constant 0 : index
    %88 = vector.load %arg12[%c294, %c0_74] : memref<432x64xf32, #tpu.memory_space<vmem>>, vector<1x64xf32>
    %89 = tpu.concatenate %87, %88 in 0 : vector<1x64xf32>, vector<1x64xf32> -> vector<2x64xf32>
    %c576 = arith.constant 576 : index
    %c0_75 = arith.constant 0 : index
    %90 = vector.load %arg13[%c576, %c0_75] : memref<2304x128xf32, #tpu.memory_space<vmem>>, vector<64x128xf32>
    %cst_76 = arith.constant dense<0.000000e+00> : vector<2x128xf32>
    %91 = tpu.matmul %89, %90, %cst_76 {dimension_numbers = #tpu.dot_dimension_numbers<[1], [0], [0], [1], [0, 0, 1, 1], [], []>} : vector<2x64xf32>, vector<64x128xf32>, vector<2x128xf32> -> vector<2x128xf32>
    %92 = arith.addf %86, %91 : vector<2x128xf32>
    %c40 = arith.constant 40 : index
    %c0_77 = arith.constant 0 : index
    %93 = vector.load %arg12[%c40, %c0_77] : memref<432x64xf32, #tpu.memory_space<vmem>>, vector<1x64xf32>
    %c296 = arith.constant 296 : index
    %c0_78 = arith.constant 0 : index
    %94 = vector.load %arg12[%c296, %c0_78] : memref<432x64xf32, #tpu.memory_space<vmem>>, vector<1x64xf32>
    %95 = tpu.concatenate %93, %94 in 0 : vector<1x64xf32>, vector<1x64xf32> -> vector<2x64xf32>
    %c640 = arith.constant 640 : index
    %c0_79 = arith.constant 0 : index
    %96 = vector.load %arg13[%c640, %c0_79] : memref<2304x128xf32, #tpu.memory_space<vmem>>, vector<64x128xf32>
    %cst_80 = arith.constant dense<0.000000e+00> : vector<2x128xf32>
    %97 = tpu.matmul %95, %96, %cst_80 {dimension_numbers = #tpu.dot_dimension_numbers<[1], [0], [0], [1], [0, 0, 1, 1], [], []>} : vector<2x64xf32>, vector<64x128xf32>, vector<2x128xf32> -> vector<2x128xf32>
    %98 = arith.addf %92, %97 : vector<2x128xf32>
    %c42 = arith.constant 42 : index
    %c0_81 = arith.constant 0 : index
    %99 = vector.load %arg12[%c42, %c0_81] : memref<432x64xf32, #tpu.memory_space<vmem>>, vector<1x64xf32>
    %c298 = arith.constant 298 : index
    %c0_82 = arith.constant 0 : index
    %100 = vector.load %arg12[%c298, %c0_82] : memref<432x64xf32, #tpu.memory_space<vmem>>, vector<1x64xf32>
    %101 = tpu.concatenate %99, %100 in 0 : vector<1x64xf32>, vector<1x64xf32> -> vector<2x64xf32>
    %c704 = arith.constant 704 : index
    %c0_83 = arith.constant 0 : index
    %102 = vector.load %arg13[%c704, %c0_83] : memref<2304x128xf32, #tpu.memory_space<vmem>>, vector<64x128xf32>
    %cst_84 = arith.constant dense<0.000000e+00> : vector<2x128xf32>
    %103 = tpu.matmul %101, %102, %cst_84 {dimension_numbers = #tpu.dot_dimension_numbers<[1], [0], [0], [1], [0, 0, 1, 1], [], []>} : vector<2x64xf32>, vector<64x128xf32>, vector<2x128xf32> -> vector<2x128xf32>
    %104 = arith.addf %98, %103 : vector<2x128xf32>
    %c64_85 = arith.constant 64 : index
    %c0_86 = arith.constant 0 : index
    %105 = vector.load %arg12[%c64_85, %c0_86] : memref<432x64xf32, #tpu.memory_space<vmem>>, vector<1x64xf32>
    %c320_87 = arith.constant 320 : index
    %c0_88 = arith.constant 0 : index
    %106 = vector.load %arg12[%c320_87, %c0_88] : memref<432x64xf32, #tpu.memory_space<vmem>>, vector<1x64xf32>
    %107 = tpu.concatenate %105, %106 in 0 : vector<1x64xf32>, vector<1x64xf32> -> vector<2x64xf32>
    %c768 = arith.constant 768 : index
    %c0_89 = arith.constant 0 : index
    %108 = vector.load %arg13[%c768, %c0_89] : memref<2304x128xf32, #tpu.memory_space<vmem>>, vector<64x128xf32>
    %cst_90 = arith.constant dense<0.000000e+00> : vector<2x128xf32>
    %109 = tpu.matmul %107, %108, %cst_90 {dimension_numbers = #tpu.dot_dimension_numbers<[1], [0], [0], [1], [0, 0, 1, 1], [], []>} : vector<2x64xf32>, vector<64x128xf32>, vector<2x128xf32> -> vector<2x128xf32>
    %110 = arith.addf %104, %109 : vector<2x128xf32>
    %c66 = arith.constant 66 : index
    %c0_91 = arith.constant 0 : index
    %111 = vector.load %arg12[%c66, %c0_91] : memref<432x64xf32, #tpu.memory_space<vmem>>, vector<1x64xf32>
    %c322 = arith.constant 322 : index
    %c0_92 = arith.constant 0 : index
    %112 = vector.load %arg12[%c322, %c0_92] : memref<432x64xf32, #tpu.memory_space<vmem>>, vector<1x64xf32>
    %113 = tpu.concatenate %111, %112 in 0 : vector<1x64xf32>, vector<1x64xf32> -> vector<2x64xf32>
    %c832 = arith.constant 832 : index
    %c0_93 = arith.constant 0 : index
    %114 = vector.load %arg13[%c832, %c0_93] : memref<2304x128xf32, #tpu.memory_space<vmem>>, vector<64x128xf32>
    %cst_94 = arith.constant dense<0.000000e+00> : vector<2x128xf32>
    %115 = tpu.matmul %113, %114, %cst_94 {dimension_numbers = #tpu.dot_dimension_numbers<[1], [0], [0], [1], [0, 0, 1, 1], [], []>} : vector<2x64xf32>, vector<64x128xf32>, vector<2x128xf32> -> vector<2x128xf32>
    %116 = arith.addf %110, %115 : vector<2x128xf32>
    %c68 = arith.constant 68 : index
    %c0_95 = arith.constant 0 : index
    %117 = vector.load %arg12[%c68, %c0_95] : memref<432x64xf32, #tpu.memory_space<vmem>>, vector<1x64xf32>
    %c324 = arith.constant 324 : index
    %c0_96 = arith.constant 0 : index
    %118 = vector.load %arg12[%c324, %c0_96] : memref<432x64xf32, #tpu.memory_space<vmem>>, vector<1x64xf32>
    %119 = tpu.concatenate %117, %118 in 0 : vector<1x64xf32>, vector<1x64xf32> -> vector<2x64xf32>
    %c896 = arith.constant 896 : index
    %c0_97 = arith.constant 0 : index
    %120 = vector.load %arg13[%c896, %c0_97] : memref<2304x128xf32, #tpu.memory_space<vmem>>, vector<64x128xf32>
    %cst_98 = arith.constant dense<0.000000e+00> : vector<2x128xf32>
    %121 = tpu.matmul %119, %120, %cst_98 {dimension_numbers = #tpu.dot_dimension_numbers<[1], [0], [0], [1], [0, 0, 1, 1], [], []>} : vector<2x64xf32>, vector<64x128xf32>, vector<2x128xf32> -> vector<2x128xf32>
    %122 = arith.addf %116, %121 : vector<2x128xf32>
    %c70 = arith.constant 70 : index
    %c0_99 = arith.constant 0 : index
    %123 = vector.load %arg12[%c70, %c0_99] : memref<432x64xf32, #tpu.memory_space<vmem>>, vector<1x64xf32>
    %c326 = arith.constant 326 : index
    %c0_100 = arith.constant 0 : index
    %124 = vector.load %arg12[%c326, %c0_100] : memref<432x64xf32, #tpu.memory_space<vmem>>, vector<1x64xf32>
    %125 = tpu.concatenate %123, %124 in 0 : vector<1x64xf32>, vector<1x64xf32> -> vector<2x64xf32>
    %c960 = arith.constant 960 : index
    %c0_101 = arith.constant 0 : index
    %126 = vector.load %arg13[%c960, %c0_101] : memref<2304x128xf32, #tpu.memory_space<vmem>>, vector<64x128xf32>
    %cst_102 = arith.constant dense<0.000000e+00> : vector<2x128xf32>
    %127 = tpu.matmul %125, %126, %cst_102 {dimension_numbers = #tpu.dot_dimension_numbers<[1], [0], [0], [1], [0, 0, 1, 1], [], []>} : vector<2x64xf32>, vector<64x128xf32>, vector<2x128xf32> -> vector<2x128xf32>
    %128 = arith.addf %122, %127 : vector<2x128xf32>
    %c72 = arith.constant 72 : index
    %c0_103 = arith.constant 0 : index
    %129 = vector.load %arg12[%c72, %c0_103] : memref<432x64xf32, #tpu.memory_space<vmem>>, vector<1x64xf32>
    %c328 = arith.constant 328 : index
    %c0_104 = arith.constant 0 : index
    %130 = vector.load %arg12[%c328, %c0_104] : memref<432x64xf32, #tpu.memory_space<vmem>>, vector<1x64xf32>
    %131 = tpu.concatenate %129, %130 in 0 : vector<1x64xf32>, vector<1x64xf32> -> vector<2x64xf32>
    %c1024 = arith.constant 1024 : index
    %c0_105 = arith.constant 0 : index
    %132 = vector.load %arg13[%c1024, %c0_105] : memref<2304x128xf32, #tpu.memory_space<vmem>>, vector<64x128xf32>
    %cst_106 = arith.constant dense<0.000000e+00> : vector<2x128xf32>
    %133 = tpu.matmul %131, %132, %cst_106 {dimension_numbers = #tpu.dot_dimension_numbers<[1], [0], [0], [1], [0, 0, 1, 1], [], []>} : vector<2x64xf32>, vector<64x128xf32>, vector<2x128xf32> -> vector<2x128xf32>
    %134 = arith.addf %128, %133 : vector<2x128xf32>
    %c74 = arith.constant 74 : index
    %c0_107 = arith.constant 0 : index
    %135 = vector.load %arg12[%c74, %c0_107] : memref<432x64xf32, #tpu.memory_space<vmem>>, vector<1x64xf32>
    %c330 = arith.constant 330 : index
    %c0_108 = arith.constant 0 : index
    %136 = vector.load %arg12[%c330, %c0_108] : memref<432x64xf32, #tpu.memory_space<vmem>>, vector<1x64xf32>
    %137 = tpu.concatenate %135, %136 in 0 : vector<1x64xf32>, vector<1x64xf32> -> vector<2x64xf32>
    %c1088 = arith.constant 1088 : index
    %c0_109 = arith.constant 0 : index
    %138 = vector.load %arg13[%c1088, %c0_109] : memref<2304x128xf32, #tpu.memory_space<vmem>>, vector<64x128xf32>
    %cst_110 = arith.constant dense<0.000000e+00> : vector<2x128xf32>
    %139 = tpu.matmul %137, %138, %cst_110 {dimension_numbers = #tpu.dot_dimension_numbers<[1], [0], [0], [1], [0, 0, 1, 1], [], []>} : vector<2x64xf32>, vector<64x128xf32>, vector<2x128xf32> -> vector<2x128xf32>
    %140 = arith.addf %134, %139 : vector<2x128xf32>
    %c96_111 = arith.constant 96 : index
    %c0_112 = arith.constant 0 : index
    %141 = vector.load %arg12[%c96_111, %c0_112] : memref<432x64xf32, #tpu.memory_space<vmem>>, vector<1x64xf32>
    %c352 = arith.constant 352 : index
    %c0_113 = arith.constant 0 : index
    %142 = vector.load %arg12[%c352, %c0_113] : memref<432x64xf32, #tpu.memory_space<vmem>>, vector<1x64xf32>
    %143 = tpu.concatenate %141, %142 in 0 : vector<1x64xf32>, vector<1x64xf32> -> vector<2x64xf32>
    %c1152 = arith.constant 1152 : index
    %c0_114 = arith.constant 0 : index
    %144 = vector.load %arg13[%c1152, %c0_114] : memref<2304x128xf32, #tpu.memory_space<vmem>>, vector<64x128xf32>
    %cst_115 = arith.constant dense<0.000000e+00> : vector<2x128xf32>
    %145 = tpu.matmul %143, %144, %cst_115 {dimension_numbers = #tpu.dot_dimension_numbers<[1], [0], [0], [1], [0, 0, 1, 1], [], []>} : vector<2x64xf32>, vector<64x128xf32>, vector<2x128xf32> -> vector<2x128xf32>
    %146 = arith.addf %140, %145 : vector<2x128xf32>
    %c98 = arith.constant 98 : index
    %c0_116 = arith.constant 0 : index
    %147 = vector.load %arg12[%c98, %c0_116] : memref<432x64xf32, #tpu.memory_space<vmem>>, vector<1x64xf32>
    %c354 = arith.constant 354 : index
    %c0_117 = arith.constant 0 : index
    %148 = vector.load %arg12[%c354, %c0_117] : memref<432x64xf32, #tpu.memory_space<vmem>>, vector<1x64xf32>
    %149 = tpu.concatenate %147, %148 in 0 : vector<1x64xf32>, vector<1x64xf32> -> vector<2x64xf32>
    %c1216 = arith.constant 1216 : index
    %c0_118 = arith.constant 0 : index
    %150 = vector.load %arg13[%c1216, %c0_118] : memref<2304x128xf32, #tpu.memory_space<vmem>>, vector<64x128xf32>
    %cst_119 = arith.constant dense<0.000000e+00> : vector<2x128xf32>
    %151 = tpu.matmul %149, %150, %cst_119 {dimension_numbers = #tpu.dot_dimension_numbers<[1], [0], [0], [1], [0, 0, 1, 1], [], []>} : vector<2x64xf32>, vector<64x128xf32>, vector<2x128xf32> -> vector<2x128xf32>
    %152 = arith.addf %146, %151 : vector<2x128xf32>
    %c100 = arith.constant 100 : index
    %c0_120 = arith.constant 0 : index
    %153 = vector.load %arg12[%c100, %c0_120] : memref<432x64xf32, #tpu.memory_space<vmem>>, vector<1x64xf32>
    %c356 = arith.constant 356 : index
    %c0_121 = arith.constant 0 : index
    %154 = vector.load %arg12[%c356, %c0_121] : memref<432x64xf32, #tpu.memory_space<vmem>>, vector<1x64xf32>
    %155 = tpu.concatenate %153, %154 in 0 : vector<1x64xf32>, vector<1x64xf32> -> vector<2x64xf32>
    %c1280 = arith.constant 1280 : index
    %c0_122 = arith.constant 0 : index
    %156 = vector.load %arg13[%c1280, %c0_122] : memref<2304x128xf32, #tpu.memory_space<vmem>>, vector<64x128xf32>
    %cst_123 = arith.constant dense<0.000000e+00> : vector<2x128xf32>
    %157 = tpu.matmul %155, %156, %cst_123 {dimension_numbers = #tpu.dot_dimension_numbers<[1], [0], [0], [1], [0, 0, 1, 1], [], []>} : vector<2x64xf32>, vector<64x128xf32>, vector<2x128xf32> -> vector<2x128xf32>
    %158 = arith.addf %152, %157 : vector<2x128xf32>
    %c102 = arith.constant 102 : index
    %c0_124 = arith.constant 0 : index
    %159 = vector.load %arg12[%c102, %c0_124] : memref<432x64xf32, #tpu.memory_space<vmem>>, vector<1x64xf32>
    %c358 = arith.constant 358 : index
    %c0_125 = arith.constant 0 : index
    %160 = vector.load %arg12[%c358, %c0_125] : memref<432x64xf32, #tpu.memory_space<vmem>>, vector<1x64xf32>
    %161 = tpu.concatenate %159, %160 in 0 : vector<1x64xf32>, vector<1x64xf32> -> vector<2x64xf32>
    %c1344 = arith.constant 1344 : index
    %c0_126 = arith.constant 0 : index
    %162 = vector.load %arg13[%c1344, %c0_126] : memref<2304x128xf32, #tpu.memory_space<vmem>>, vector<64x128xf32>
    %cst_127 = arith.constant dense<0.000000e+00> : vector<2x128xf32>
    %163 = tpu.matmul %161, %162, %cst_127 {dimension_numbers = #tpu.dot_dimension_numbers<[1], [0], [0], [1], [0, 0, 1, 1], [], []>} : vector<2x64xf32>, vector<64x128xf32>, vector<2x128xf32> -> vector<2x128xf32>
    %164 = arith.addf %158, %163 : vector<2x128xf32>
    %c104 = arith.constant 104 : index
    %c0_128 = arith.constant 0 : index
    %165 = vector.load %arg12[%c104, %c0_128] : memref<432x64xf32, #tpu.memory_space<vmem>>, vector<1x64xf32>
    %c360 = arith.constant 360 : index
    %c0_129 = arith.constant 0 : index
    %166 = vector.load %arg12[%c360, %c0_129] : memref<432x64xf32, #tpu.memory_space<vmem>>, vector<1x64xf32>
    %167 = tpu.concatenate %165, %166 in 0 : vector<1x64xf32>, vector<1x64xf32> -> vector<2x64xf32>
    %c1408 = arith.constant 1408 : index
    %c0_130 = arith.constant 0 : index
    %168 = vector.load %arg13[%c1408, %c0_130] : memref<2304x128xf32, #tpu.memory_space<vmem>>, vector<64x128xf32>
    %cst_131 = arith.constant dense<0.000000e+00> : vector<2x128xf32>
    %169 = tpu.matmul %167, %168, %cst_131 {dimension_numbers = #tpu.dot_dimension_numbers<[1], [0], [0], [1], [0, 0, 1, 1], [], []>} : vector<2x64xf32>, vector<64x128xf32>, vector<2x128xf32> -> vector<2x128xf32>
    %170 = arith.addf %164, %169 : vector<2x128xf32>
    %c106 = arith.constant 106 : index
    %c0_132 = arith.constant 0 : index
    %171 = vector.load %arg12[%c106, %c0_132] : memref<432x64xf32, #tpu.memory_space<vmem>>, vector<1x64xf32>
    %c362 = arith.constant 362 : index
    %c0_133 = arith.constant 0 : index
    %172 = vector.load %arg12[%c362, %c0_133] : memref<432x64xf32, #tpu.memory_space<vmem>>, vector<1x64xf32>
    %173 = tpu.concatenate %171, %172 in 0 : vector<1x64xf32>, vector<1x64xf32> -> vector<2x64xf32>
    %c1472 = arith.constant 1472 : index
    %c0_134 = arith.constant 0 : index
    %174 = vector.load %arg13[%c1472, %c0_134] : memref<2304x128xf32, #tpu.memory_space<vmem>>, vector<64x128xf32>
    %cst_135 = arith.constant dense<0.000000e+00> : vector<2x128xf32>
    %175 = tpu.matmul %173, %174, %cst_135 {dimension_numbers = #tpu.dot_dimension_numbers<[1], [0], [0], [1], [0, 0, 1, 1], [], []>} : vector<2x64xf32>, vector<64x128xf32>, vector<2x128xf32> -> vector<2x128xf32>
    %176 = arith.addf %170, %175 : vector<2x128xf32>
    %c128_136 = arith.constant 128 : index
    %c0_137 = arith.constant 0 : index
    %177 = vector.load %arg12[%c128_136, %c0_137] : memref<432x64xf32, #tpu.memory_space<vmem>>, vector<1x64xf32>
    %c384_138 = arith.constant 384 : index
    %c0_139 = arith.constant 0 : index
    %178 = vector.load %arg12[%c384_138, %c0_139] : memref<432x64xf32, #tpu.memory_space<vmem>>, vector<1x64xf32>
    %179 = tpu.concatenate %177, %178 in 0 : vector<1x64xf32>, vector<1x64xf32> -> vector<2x64xf32>
    %c1536 = arith.constant 1536 : index
    %c0_140 = arith.constant 0 : index
    %180 = vector.load %arg13[%c1536, %c0_140] : memref<2304x128xf32, #tpu.memory_space<vmem>>, vector<64x128xf32>
    %cst_141 = arith.constant dense<0.000000e+00> : vector<2x128xf32>
    %181 = tpu.matmul %179, %180, %cst_141 {dimension_numbers = #tpu.dot_dimension_numbers<[1], [0], [0], [1], [0, 0, 1, 1], [], []>} : vector<2x64xf32>, vector<64x128xf32>, vector<2x128xf32> -> vector<2x128xf32>
    %182 = arith.addf %176, %181 : vector<2x128xf32>
    %c130 = arith.constant 130 : index
    %c0_142 = arith.constant 0 : index
    %183 = vector.load %arg12[%c130, %c0_142] : memref<432x64xf32, #tpu.memory_space<vmem>>, vector<1x64xf32>
    %c386 = arith.constant 386 : index
    %c0_143 = arith.constant 0 : index
    %184 = vector.load %arg12[%c386, %c0_143] : memref<432x64xf32, #tpu.memory_space<vmem>>, vector<1x64xf32>
    %185 = tpu.concatenate %183, %184 in 0 : vector<1x64xf32>, vector<1x64xf32> -> vector<2x64xf32>
    %c1600 = arith.constant 1600 : index
    %c0_144 = arith.constant 0 : index
    %186 = vector.load %arg13[%c1600, %c0_144] : memref<2304x128xf32, #tpu.memory_space<vmem>>, vector<64x128xf32>
    %cst_145 = arith.constant dense<0.000000e+00> : vector<2x128xf32>
    %187 = tpu.matmul %185, %186, %cst_145 {dimension_numbers = #tpu.dot_dimension_numbers<[1], [0], [0], [1], [0, 0, 1, 1], [], []>} : vector<2x64xf32>, vector<64x128xf32>, vector<2x128xf32> -> vector<2x128xf32>
    %188 = arith.addf %182, %187 : vector<2x128xf32>
    %c132 = arith.constant 132 : index
    %c0_146 = arith.constant 0 : index
    %189 = vector.load %arg12[%c132, %c0_146] : memref<432x64xf32, #tpu.memory_space<vmem>>, vector<1x64xf32>
    %c388 = arith.constant 388 : index
    %c0_147 = arith.constant 0 : index
    %190 = vector.load %arg12[%c388, %c0_147] : memref<432x64xf32, #tpu.memory_space<vmem>>, vector<1x64xf32>
    %191 = tpu.concatenate %189, %190 in 0 : vector<1x64xf32>, vector<1x64xf32> -> vector<2x64xf32>
    %c1664 = arith.constant 1664 : index
    %c0_148 = arith.constant 0 : index
    %192 = vector.load %arg13[%c1664, %c0_148] : memref<2304x128xf32, #tpu.memory_space<vmem>>, vector<64x128xf32>
    %cst_149 = arith.constant dense<0.000000e+00> : vector<2x128xf32>
    %193 = tpu.matmul %191, %192, %cst_149 {dimension_numbers = #tpu.dot_dimension_numbers<[1], [0], [0], [1], [0, 0, 1, 1], [], []>} : vector<2x64xf32>, vector<64x128xf32>, vector<2x128xf32> -> vector<2x128xf32>
    %194 = arith.addf %188, %193 : vector<2x128xf32>
    %c134 = arith.constant 134 : index
    %c0_150 = arith.constant 0 : index
    %195 = vector.load %arg12[%c134, %c0_150] : memref<432x64xf32, #tpu.memory_space<vmem>>, vector<1x64xf32>
    %c390 = arith.constant 390 : index
    %c0_151 = arith.constant 0 : index
    %196 = vector.load %arg12[%c390, %c0_151] : memref<432x64xf32, #tpu.memory_space<vmem>>, vector<1x64xf32>
    %197 = tpu.concatenate %195, %196 in 0 : vector<1x64xf32>, vector<1x64xf32> -> vector<2x64xf32>
    %c1728 = arith.constant 1728 : index
    %c0_152 = arith.constant 0 : index
    %198 = vector.load %arg13[%c1728, %c0_152] : memref<2304x128xf32, #tpu.memory_space<vmem>>, vector<64x128xf32>
    %cst_153 = arith.constant dense<0.000000e+00> : vector<2x128xf32>
    %199 = tpu.matmul %197, %198, %cst_153 {dimension_numbers = #tpu.dot_dimension_numbers<[1], [0], [0], [1], [0, 0, 1, 1], [], []>} : vector<2x64xf32>, vector<64x128xf32>, vector<2x128xf32> -> vector<2x128xf32>
    %200 = arith.addf %194, %199 : vector<2x128xf32>
    %c136 = arith.constant 136 : index
    %c0_154 = arith.constant 0 : index
    %201 = vector.load %arg12[%c136, %c0_154] : memref<432x64xf32, #tpu.memory_space<vmem>>, vector<1x64xf32>
    %c392 = arith.constant 392 : index
    %c0_155 = arith.constant 0 : index
    %202 = vector.load %arg12[%c392, %c0_155] : memref<432x64xf32, #tpu.memory_space<vmem>>, vector<1x64xf32>
    %203 = tpu.concatenate %201, %202 in 0 : vector<1x64xf32>, vector<1x64xf32> -> vector<2x64xf32>
    %c1792 = arith.constant 1792 : index
    %c0_156 = arith.constant 0 : index
    %204 = vector.load %arg13[%c1792, %c0_156] : memref<2304x128xf32, #tpu.memory_space<vmem>>, vector<64x128xf32>
    %cst_157 = arith.constant dense<0.000000e+00> : vector<2x128xf32>
    %205 = tpu.matmul %203, %204, %cst_157 {dimension_numbers = #tpu.dot_dimension_numbers<[1], [0], [0], [1], [0, 0, 1, 1], [], []>} : vector<2x64xf32>, vector<64x128xf32>, vector<2x128xf32> -> vector<2x128xf32>
    %206 = arith.addf %200, %205 : vector<2x128xf32>
    %c138 = arith.constant 138 : index
    %c0_158 = arith.constant 0 : index
    %207 = vector.load %arg12[%c138, %c0_158] : memref<432x64xf32, #tpu.memory_space<vmem>>, vector<1x64xf32>
    %c394 = arith.constant 394 : index
    %c0_159 = arith.constant 0 : index
    %208 = vector.load %arg12[%c394, %c0_159] : memref<432x64xf32, #tpu.memory_space<vmem>>, vector<1x64xf32>
    %209 = tpu.concatenate %207, %208 in 0 : vector<1x64xf32>, vector<1x64xf32> -> vector<2x64xf32>
    %c1856 = arith.constant 1856 : index
    %c0_160 = arith.constant 0 : index
    %210 = vector.load %arg13[%c1856, %c0_160] : memref<2304x128xf32, #tpu.memory_space<vmem>>, vector<64x128xf32>
    %cst_161 = arith.constant dense<0.000000e+00> : vector<2x128xf32>
    %211 = tpu.matmul %209, %210, %cst_161 {dimension_numbers = #tpu.dot_dimension_numbers<[1], [0], [0], [1], [0, 0, 1, 1], [], []>} : vector<2x64xf32>, vector<64x128xf32>, vector<2x128xf32> -> vector<2x128xf32>
    %212 = arith.addf %206, %211 : vector<2x128xf32>
    %c160 = arith.constant 160 : index
    %c0_162 = arith.constant 0 : index
    %213 = vector.load %arg12[%c160, %c0_162] : memref<432x64xf32, #tpu.memory_space<vmem>>, vector<1x64xf32>
    %c416 = arith.constant 416 : index
    %c0_163 = arith.constant 0 : index
    %214 = vector.load %arg12[%c416, %c0_163] : memref<432x64xf32, #tpu.memory_space<vmem>>, vector<1x64xf32>
    %215 = tpu.concatenate %213, %214 in 0 : vector<1x64xf32>, vector<1x64xf32> -> vector<2x64xf32>
    %c1920 = arith.constant 1920 : index
    %c0_164 = arith.constant 0 : index
    %216 = vector.load %arg13[%c1920, %c0_164] : memref<2304x128xf32, #tpu.memory_space<vmem>>, vector<64x128xf32>
    %cst_165 = arith.constant dense<0.000000e+00> : vector<2x128xf32>
    %217 = tpu.matmul %215, %216, %cst_165 {dimension_numbers = #tpu.dot_dimension_numbers<[1], [0], [0], [1], [0, 0, 1, 1], [], []>} : vector<2x64xf32>, vector<64x128xf32>, vector<2x128xf32> -> vector<2x128xf32>
    %218 = arith.addf %212, %217 : vector<2x128xf32>
    %c162 = arith.constant 162 : index
    %c0_166 = arith.constant 0 : index
    %219 = vector.load %arg12[%c162, %c0_166] : memref<432x64xf32, #tpu.memory_space<vmem>>, vector<1x64xf32>
    %c418 = arith.constant 418 : index
    %c0_167 = arith.constant 0 : index
    %220 = vector.load %arg12[%c418, %c0_167] : memref<432x64xf32, #tpu.memory_space<vmem>>, vector<1x64xf32>
    %221 = tpu.concatenate %219, %220 in 0 : vector<1x64xf32>, vector<1x64xf32> -> vector<2x64xf32>
    %c1984 = arith.constant 1984 : index
    %c0_168 = arith.constant 0 : index
    %222 = vector.load %arg13[%c1984, %c0_168] : memref<2304x128xf32, #tpu.memory_space<vmem>>, vector<64x128xf32>
    %cst_169 = arith.constant dense<0.000000e+00> : vector<2x128xf32>
    %223 = tpu.matmul %221, %222, %cst_169 {dimension_numbers = #tpu.dot_dimension_numbers<[1], [0], [0], [1], [0, 0, 1, 1], [], []>} : vector<2x64xf32>, vector<64x128xf32>, vector<2x128xf32> -> vector<2x128xf32>
    %224 = arith.addf %218, %223 : vector<2x128xf32>
    %c164 = arith.constant 164 : index
    %c0_170 = arith.constant 0 : index
    %225 = vector.load %arg12[%c164, %c0_170] : memref<432x64xf32, #tpu.memory_space<vmem>>, vector<1x64xf32>
    %c420 = arith.constant 420 : index
    %c0_171 = arith.constant 0 : index
    %226 = vector.load %arg12[%c420, %c0_171] : memref<432x64xf32, #tpu.memory_space<vmem>>, vector<1x64xf32>
    %227 = tpu.concatenate %225, %226 in 0 : vector<1x64xf32>, vector<1x64xf32> -> vector<2x64xf32>
    %c2048 = arith.constant 2048 : index
    %c0_172 = arith.constant 0 : index
    %228 = vector.load %arg13[%c2048, %c0_172] : memref<2304x128xf32, #tpu.memory_space<vmem>>, vector<64x128xf32>
    %cst_173 = arith.constant dense<0.000000e+00> : vector<2x128xf32>
    %229 = tpu.matmul %227, %228, %cst_173 {dimension_numbers = #tpu.dot_dimension_numbers<[1], [0], [0], [1], [0, 0, 1, 1], [], []>} : vector<2x64xf32>, vector<64x128xf32>, vector<2x128xf32> -> vector<2x128xf32>
    %230 = arith.addf %224, %229 : vector<2x128xf32>
    %c166 = arith.constant 166 : index
    %c0_174 = arith.constant 0 : index
    %231 = vector.load %arg12[%c166, %c0_174] : memref<432x64xf32, #tpu.memory_space<vmem>>, vector<1x64xf32>
    %c422 = arith.constant 422 : index
    %c0_175 = arith.constant 0 : index
    %232 = vector.load %arg12[%c422, %c0_175] : memref<432x64xf32, #tpu.memory_space<vmem>>, vector<1x64xf32>
    %233 = tpu.concatenate %231, %232 in 0 : vector<1x64xf32>, vector<1x64xf32> -> vector<2x64xf32>
    %c2112 = arith.constant 2112 : index
    %c0_176 = arith.constant 0 : index
    %234 = vector.load %arg13[%c2112, %c0_176] : memref<2304x128xf32, #tpu.memory_space<vmem>>, vector<64x128xf32>
    %cst_177 = arith.constant dense<0.000000e+00> : vector<2x128xf32>
    %235 = tpu.matmul %233, %234, %cst_177 {dimension_numbers = #tpu.dot_dimension_numbers<[1], [0], [0], [1], [0, 0, 1, 1], [], []>} : vector<2x64xf32>, vector<64x128xf32>, vector<2x128xf32> -> vector<2x128xf32>
    %236 = arith.addf %230, %235 : vector<2x128xf32>
    %c168 = arith.constant 168 : index
    %c0_178 = arith.constant 0 : index
    %237 = vector.load %arg12[%c168, %c0_178] : memref<432x64xf32, #tpu.memory_space<vmem>>, vector<1x64xf32>
    %c424 = arith.constant 424 : index
    %c0_179 = arith.constant 0 : index
    %238 = vector.load %arg12[%c424, %c0_179] : memref<432x64xf32, #tpu.memory_space<vmem>>, vector<1x64xf32>
    %239 = tpu.concatenate %237, %238 in 0 : vector<1x64xf32>, vector<1x64xf32> -> vector<2x64xf32>
    %c2176 = arith.constant 2176 : index
    %c0_180 = arith.constant 0 : index
    %240 = vector.load %arg13[%c2176, %c0_180] : memref<2304x128xf32, #tpu.memory_space<vmem>>, vector<64x128xf32>
    %cst_181 = arith.constant dense<0.000000e+00> : vector<2x128xf32>
    %241 = tpu.matmul %239, %240, %cst_181 {dimension_numbers = #tpu.dot_dimension_numbers<[1], [0], [0], [1], [0, 0, 1, 1], [], []>} : vector<2x64xf32>, vector<64x128xf32>, vector<2x128xf32> -> vector<2x128xf32>
    %242 = arith.addf %236, %241 : vector<2x128xf32>
    %c170 = arith.constant 170 : index
    %c0_182 = arith.constant 0 : index
    %243 = vector.load %arg12[%c170, %c0_182] : memref<432x64xf32, #tpu.memory_space<vmem>>, vector<1x64xf32>
    %c426 = arith.constant 426 : index
    %c0_183 = arith.constant 0 : index
    %244 = vector.load %arg12[%c426, %c0_183] : memref<432x64xf32, #tpu.memory_space<vmem>>, vector<1x64xf32>
    %245 = tpu.concatenate %243, %244 in 0 : vector<1x64xf32>, vector<1x64xf32> -> vector<2x64xf32>
    %c2240 = arith.constant 2240 : index
    %c0_184 = arith.constant 0 : index
    %246 = vector.load %arg13[%c2240, %c0_184] : memref<2304x128xf32, #tpu.memory_space<vmem>>, vector<64x128xf32>
    %cst_185 = arith.constant dense<0.000000e+00> : vector<2x128xf32>
    %247 = tpu.matmul %245, %246, %cst_185 {dimension_numbers = #tpu.dot_dimension_numbers<[1], [0], [0], [1], [0, 0, 1, 1], [], []>} : vector<2x64xf32>, vector<64x128xf32>, vector<2x128xf32> -> vector<2x128xf32>
    %248 = arith.addf %242, %247 : vector<2x128xf32>
    %c0_186 = arith.constant 0 : index
    %c0_187 = arith.constant 0 : index
    %249 = vector.load %arg6[%c0_186, %c0_187] : memref<1x128xf32, #tpu.memory_space<vmem>>, vector<1x128xf32>
    %250 = vector.broadcast %249 : vector<1x128xf32> to vector<2x128xf32>
    %251 = arith.addf %248, %250 : vector<2x128xf32>
    %cst_188 = arith.constant 0.000000e+00 : f32
    %252 = vector.broadcast %cst_188 : f32 to vector<2x128xf32>
    %253 = arith.maximumf %251, %252 : vector<2x128xf32>
    %c0_189 = arith.constant 0 : index
    %c0_190 = arith.constant 0 : index
    %254 = vector.load %arg7[%c0_189, %c0_190] : memref<128x10xf32, #tpu.memory_space<vmem>>, vector<128x10xf32>
    %cst_191 = arith.constant dense<0.000000e+00> : vector<2x10xf32>
    %255 = tpu.matmul %253, %254, %cst_191 {dimension_numbers = #tpu.dot_dimension_numbers<[1], [0], [0], [1], [0, 0, 1, 1], [], []>} : vector<2x128xf32>, vector<128x10xf32>, vector<2x10xf32> -> vector<2x10xf32>
    %c0_192 = arith.constant 0 : index
    %c0_193 = arith.constant 0 : index
    %256 = vector.load %arg8[%c0_192, %c0_193] : memref<1x10xf32, #tpu.memory_space<vmem>>, vector<1x10xf32>
    %257 = vector.broadcast %256 : vector<1x10xf32> to vector<2x10xf32>
    %258 = arith.addf %255, %257 : vector<2x10xf32>
    %cst_194 = arith.constant dense<0xFF800000> : vector<2xf32>
    %259 = vector.multi_reduction <maximumf>, %258, %cst_194 [1] : vector<2x10xf32> to vector<2xf32>
    %260 = vector.shape_cast %259 : vector<2xf32> to vector<2x1xf32>
    %261 = vector.broadcast %260 : vector<2x1xf32> to vector<2x10xf32>
    %262 = arith.subf %258, %261 : vector<2x10xf32>
    %263 = math.exp %262 : vector<2x10xf32>
    %cst_195 = arith.constant dense<0.000000e+00> : vector<2xf32>
    %264 = vector.multi_reduction <add>, %263, %cst_195 [1] : vector<2x10xf32> to vector<2xf32>
    %265 = vector.shape_cast %264 : vector<2xf32> to vector<2x1xf32>
    %266 = math.log %265 : vector<2x1xf32>
    %267 = vector.broadcast %266 : vector<2x1xf32> to vector<2x10xf32>
    %268 = arith.subf %262, %267 : vector<2x10xf32>
    %c0_196 = arith.constant 0 : index
    %c0_197 = arith.constant 0 : index
    %269 = vector.load %arg9[%c0_196, %c0_197] : memref<2x10xf32, #tpu.memory_space<vmem>>, vector<2x10xf32>
    tpu.vector_store %arg9[%c0_196, %c0_197], %268 {strides = array<i32>} : memref<2x10xf32, #tpu.memory_space<vmem>>, vector<2x10xf32>,
    return
  }
}

</mosaic_0001>

<llo_original>
// kernel: cnn_forward.1
$region0: #{cnn_forward.1}
  #allocation0 [shape = 'u32[]', space=smem, size = 0x4, offset = 0x4, fixed_abs, tag = 'smem constant byte address 0x4 - core index']
  #allocation1 [shape = 'u32[72,128]{1,0:T(1,128)}', space=vmem, size = 0x9000, scoped, tag = 'internal scratch']
  #allocation2 [shape = 'f32[512,96]{1,0:T(8,128)}', space=vmem, size = 0x40000, scoped, tag = 'scratch operand']
  #allocation3 [shape = 'f32[480,64]{1,0:T(8,128)}', space=vmem, size = 0x3c000, scoped, tag = 'scratch operand']
  #allocation4 [shape = 'f32[432,64]{1,0:T(8,128)}', space=vmem, size = 0x36000, scoped, tag = 'scratch operand']
  #allocation5 [shape = 'f32[2304,128]{1,0:T(8,128)}', space=vmem, size = 0x120000, scoped, tag = 'scratch operand']
  #allocation6 [shape = 's32[1]{0}', space=sflag, size = 0x4, scoped, tag = 'scratch operand']
  #allocation11 [shape = 's32[]', space=sflag, size = 0x4, offset = 0, fixed_abs, tag = 'sflag constant byte address 0x0 - dummy sync flag']
  %s0 = inlined_call_operand.vmem [shape: f32[512,45], index: 0, kind: input, shape index: {}]
  %s1 = inlined_call_operand.hbm [shape: f32[45,96], index: 1, kind: input, shape index: {}]
  %s2 = inlined_call_operand.vmem [shape: f32[1,96], index: 2, kind: input, shape index: {}]
  %s3 = inlined_call_operand.vmem [shape: f32[288,64], index: 3, kind: input, shape index: {}]
  %s4 = inlined_call_operand.vmem [shape: f32[1,64], index: 4, kind: input, shape index: {}]
  %s5 = inlined_call_operand.vmem [shape: f32[2304,128], index: 5, kind: input, shape index: {}]
  %s6 = inlined_call_operand.vmem [shape: f32[1,128], index: 6, kind: input, shape index: {}]
  %s7 = inlined_call_operand.vmem [shape: f32[128,10], index: 7, kind: input, shape index: {}]
  %s8 = inlined_call_operand.vmem [shape: f32[1,10], index: 8, kind: input, shape index: {}]
  %s9 = inlined_call_operand.hbm [shape: f32[2,10], index: 9, kind: output, shape index: {}]
  %s10 = sld [smem:[#allocation0]]
  $region65: #{cnn_forward.1} parent=0
    _
  %s12 = ssub.s32 1, %s10
  %s13 = scalar_select 0, %s12, %s10
  $region1: #{cnn_forward.1} parent=0
    #allocation7 [shape = 'u8[24576]{0}', space=vmem, size = 0x6000, scoped, tag = 'input window, operand 1, single buffered']
    #allocation8 [shape = 's32[1]{0}', space=sflag, size = 0x4, scoped, tag = 'scoped memory for cnn_forward.1']
    #allocation9 [shape = 's32[1]{0}', space=sflag, size = 0x4, scoped, tag = 'scoped memory for cnn_forward.1']
    #allocation10 [shape = 'u8[1024]{0}', space=vmem, size = 0x400, scoped, tag = 'output window, operand 0, single buffered']
    %14 = vsyncpa [#allocation8], 0
    %15 = vsyncpa [#allocation9], 0
    // Predicated region
    $region2: #{cnn_forward.1} parent=1 // pred_check
      _
    $region3: #{cnn_forward.1} parent=1 // pred_check_branch
      %17 = sbr.rel (0) target = $region5
    $region4: #{cnn_forward.1} parent=1 // pred_region
      _
    $region5: #{cnn_forward.1} parent=1 // pred_fallthru
      _
    // Predicated region
    $region6: #{cnn_forward.1} parent=1 // pred_check
      _
    $region7: #{cnn_forward.1} parent=1 // pred_check_branch
      %19 = sbr.rel (0) target = $region9
    $region8: #{cnn_forward.1} parent=1 // pred_region
      %21 = vsyncadd [#allocation8], 0
      %s22 = sshll.u32 %s1, 4
      %s23 = int_to_ptr.hbm [resolvable:$true] %s22
      %s24 = sshll.u32 [#allocation7], 4
      %s25 = int_to_ptr.vmem [resolvable:$true] %s24
      %30 = dma.hbm_to_vmem [thread:$0]  %s23, 768, %s25, [#allocation8], 128, 128, 8
    $region9: #{cnn_forward.1} parent=1 // pred_fallthru
      _
    // Predicated region
    $region10: #{cnn_forward.1} parent=1 // pred_check
      _
    $region11: #{cnn_forward.1} parent=1 // pred_check_branch
      %32 = sbr.rel (0) target = $region13
    $region12: #{cnn_forward.1} parent=1 // pred_region
      _
    $region13: #{cnn_forward.1} parent=1 // pred_fallthru
      _
    // Predicated region
    $region14: #{cnn_forward.1} parent=1 // pred_check
      _
    $region15: #{cnn_forward.1} parent=1 // pred_check_branch
      %34 = sbr.rel (0) target = $region17
    $region16: #{cnn_forward.1} parent=1 // pred_region
      _
    $region17: #{cnn_forward.1} parent=1 // pred_fallthru
      _
    // Predicated region
    $region18: #{cnn_forward.1} parent=1 // pred_check
      _
    $region19: #{cnn_forward.1} parent=1 // pred_check_branch
      %36 = sbr.rel (0) target = $region21
    $region20: #{cnn_forward.1} parent=1 // pred_region
      _
    $region21: #{cnn_forward.1} parent=1 // pred_fallthru
      _
    // Predicated region
    $region22: #{cnn_forward.1} parent=1 // pred_check
      _
    $region23: #{cnn_forward.1} parent=1 // pred_check_branch
      %38 = sbr.rel (0) target = $region25
    $region24: #{cnn_forward.1} parent=1 // pred_region
      _
    $region25: #{cnn_forward.1} parent=1 // pred_fallthru
      _
    // Predicated region
    $region26: #{cnn_forward.1} parent=1 // pred_check
      _
    $region27: #{cnn_forward.1} parent=1 // pred_check_branch
      %40 = sbr.rel (0) target = $region29
    $region28: #{cnn_forward.1} parent=1 // pred_region
      _
    $region29: #{cnn_forward.1} parent=1 // pred_fallthru
      _
    // Predicated region
    $region30: #{cnn_forward.1} parent=1 // pred_check
      _
    $region31: #{cnn_forward.1} parent=1 // pred_check_branch
      %42 = sbr.rel (0) target = $region33
    $region32: #{cnn_forward.1} parent=1 // pred_region
      _
    $region33: #{cnn_forward.1} parent=1 // pred_fallthru
      _
    // Predicated region
    $region34: #{cnn_forward.1} parent=1 // pred_check
      _
    $region35: #{cnn_forward.1} parent=1 // pred_check_branch
      %44 = sbr.rel (0) target = $region37
    $region36: #{cnn_forward.1} parent=1 // pred_region
      %46 = dma.done [#allocation8], 768
    $region37: #{cnn_forward.1} parent=1 // pred_fallthru
      _
    // Predicated region
    $region38: #{cnn_forward.1} parent=1 // pred_check
      _
    $region39: #{cnn_forward.1} parent=1 // pred_check_branch
      %48 = sbr.rel (0) target = $region41
    $region40: #{cnn_forward.1} parent=1 // pred_region
      loop: start=0, step=1, limit=1
      $region42: #{cnn_forward.1} parent=40 // loop_pre_header
        _
      $region43: #{cnn_forward.1} parent=40 // loop_header
        %s50 = sphi 0, %s54
        %p51 = scmp.ge.s32.totalorder %s50, 1
        %s55 = sphi %s5, %s5
        %s56 = sphi [#allocation5], [#allocation5]
      $region44: #{cnn_forward.1} parent=40 // loop_header_branch
        %53 = sbr.rel (%p51) target = $region48
      $region45: #{cnn_forward.1} parent=40 // loop_body
        %v57 = vld [vmem:[%s55] sm:$0xff]
        %58 = vst [vmem:[%s56] sm:$0xff] %v57
        %v59 = vld [vmem:[%s55 + $0x8] sm:$0xff]
        %60 = vst [vmem:[%s56 + $0x8] sm:$0xff] %v59
        %v61 = vld [vmem:[%s55 + $0x10] sm:$0xff]
        %62 = vst [vmem:[%s56 + $0x10] sm:$0xff] %v61
        %v63 = vld [vmem:[%s55 + $0x18] sm:$0xff]
        %64 = vst [vmem:[%s56 + $0x18] sm:$0xff] %v63
        %v65 = vld [vmem:[%s55 + $0x20] sm:$0xff]
        %66 = vst [vmem:[%s56 + $0x20] sm:$0xff] %v65
        %v67 = vld [vmem:[%s55 + $0x28] sm:$0xff]
        %68 = vst [vmem:[%s56 + $0x28] sm:$0xff] %v67
        %v69 = vld [vmem:[%s55 + $0x30] sm:$0xff]
        %70 = vst [vmem:[%s56 + $0x30] sm:$0xff] %v69
        %v71 = vld [vmem:[%s55 + $0x38] sm:$0xff]
        %72 = vst [vmem:[%s56 + $0x38] sm:$0xff] %v71
        %v73 = vld [vmem:[%s55 + $0x40] sm:$0xff]
        %74 = vst [vmem:[%s56 + $0x40] sm:$0xff] %v73
        %v75 = vld [vmem:[%s55 + $0x48] sm:$0xff]
        %76 = vst [vmem:[%s56 + $0x48] sm:$0xff] %v75
        %v77 = vld [vmem:[%s55 + $0x50] sm:$0xff]
        %78 = vst [vmem:[%s56 + $0x50] sm:$0xff] %v77
        %v79 = vld [vmem:[%s55 + $0x58] sm:$0xff]
        %80 = vst [vmem:[%s56 + $0x58] sm:$0xff] %v79
        %v81 = vld [vmem:[%s55 + $0x60] sm:$0xff]
        %82 = vst [vmem:[%s56 + $0x60] sm:$0xff] %v81
        %v83 = vld [vmem:[%s55 + $0x68] sm:$0xff]
        %84 = vst [vmem:[%s56 + $0x68] sm:$0xff] %v83
        %v85 = vld [vmem:[%s55 + $0x70] sm:$0xff]
        %86 = vst [vmem:[%s56 + $0x70] sm:$0xff] %v85
        %v87 = vld [vmem:[%s55 + $0x78] sm:$0xff]
        %88 = vst [vmem:[%s56 + $0x78] sm:$0xff] %v87
        %v89 = vld [vmem:[%s55 + $0x80] sm:$0xff]
        %90 = vst [vmem:[%s56 + $0x80] sm:$0xff] %v89
        %v91 = vld [vmem:[%s55 + $0x88] sm:$0xff]
        %92 = vst [vmem:[%s56 + $0x88] sm:$0xff] %v91
        %v93 = vld [vmem:[%s55 + $0x90] sm:$0xff]
        %94 = vst [vmem:[%s56 + $0x90] sm:$0xff] %v93
        %v95 = vld [vmem:[%s55 + $0x98] sm:$0xff]
        %96 = vst [vmem:[%s56 + $0x98] sm:$0xff] %v95
        %v97 = vld [vmem:[%s55 + $0xa0] sm:$0xff]
        %98 = vst [vmem:[%s56 + $0xa0] sm:$0xff] %v97
        %v99 = vld [vmem:[%s55 + $0xa8] sm:$0xff]
        %100 = vst [vmem:[%s56 + $0xa8] sm:$0xff] %v99
        %v101 = vld [vmem:[%s55 + $0xb0] sm:$0xff]
        %102 = vst [vmem:[%s56 + $0xb0] sm:$0xff] %v101
        %v103 = vld [vmem:[%s55 + $0xb8] sm:$0xff]
        %104 = vst [vmem:[%s56 + $0xb8] sm:$0xff] %v103
        %v105 = vld [vmem:[%s55 + $0xc0] sm:$0xff]
        %106 = vst [vmem:[%s56 + $0xc0] sm:$0xff] %v105
        %v107 = vld [vmem:[%s55 + $0xc8] sm:$0xff]
        %108 = vst [vmem:[%s56 + $0xc8] sm:$0xff] %v107
        %v109 = vld [vmem:[%s55 + $0xd0] sm:$0xff]
        %110 = vst [vmem:[%s56 + $0xd0] sm:$0xff] %v109
        %v111 = vld [vmem:[%s55 + $0xd8] sm:$0xff]
        %112 = vst [vmem:[%s56 + $0xd8] sm:$0xff] %v111
        %v113 = vld [vmem:[%s55 + $0xe0] sm:$0xff]
        %114 = vst [vmem:[%s56 + $0xe0] sm:$0xff] %v113
        %v115 = vld [vmem:[%s55 + $0xe8] sm:$0xff]
        %116 = vst [vmem:[%s56 + $0xe8] sm:$0xff] %v115
        %v117 = vld [vmem:[%s55 + $0xf0] sm:$0xff]
        %118 = vst [vmem:[%s56 + $0xf0] sm:$0xff] %v117
        %v119 = vld [vmem:[%s55 + $0xf8] sm:$0xff]
        %120 = vst [vmem:[%s56 + $0xf8] sm:$0xff] %v119
        %v121 = vld [vmem:[%s55 + $0x100] sm:$0xff]
        %122 = vst [vmem:[%s56 + $0x100] sm:$0xff] %v121
        %v123 = vld [vmem:[%s55 + $0x108] sm:$0xff]
        %124 = vst [vmem:[%s56 + $0x108] sm:$0xff] %v123
        %v125 = vld [vmem:[%s55 + $0x110] sm:$0xff]
        %126 = vst [vmem:[%s56 + $0x110] sm:$0xff] %v125
        %v127 = vld [vmem:[%s55 + $0x118] sm:$0xff]
        %128 = vst [vmem:[%s56 + $0x118] sm:$0xff] %v127
        %v129 = vld [vmem:[%s55 + $0x120] sm:$0xff]
        %130 = vst [vmem:[%s56 + $0x120] sm:$0xff] %v129
        %v131 = vld [vmem:[%s55 + $0x128] sm:$0xff]
        %132 = vst [vmem:[%s56 + $0x128] sm:$0xff] %v131
        %v133 = vld [vmem:[%s55 + $0x130] sm:$0xff]
        %134 = vst [vmem:[%s56 + $0x130] sm:$0xff] %v133
        %v135 = vld [vmem:[%s55 + $0x138] sm:$0xff]
        %136 = vst [vmem:[%s56 + $0x138] sm:$0xff] %v135
        %v137 = vld [vmem:[%s55 + $0x140] sm:$0xff]
        %138 = vst [vmem:[%s56 + $0x140] sm:$0xff] %v137
        %v139 = vld [vmem:[%s55 + $0x148] sm:$0xff]
        %140 = vst [vmem:[%s56 + $0x148] sm:$0xff] %v139
        %v141 = vld [vmem:[%s55 + $0x150] sm:$0xff]
        %142 = vst [vmem:[%s56 + $0x150] sm:$0xff] %v141
        %v143 = vld [vmem:[%s55 + $0x158] sm:$0xff]
        %144 = vst [vmem:[%s56 + $0x158] sm:$0xff] %v143
        %v145 = vld [vmem:[%s55 + $0x160] sm:$0xff]
        %146 = vst [vmem:[%s56 + $0x160] sm:$0xff] %v145
        %v147 = vld [vmem:[%s55 + $0x168] sm:$0xff]
        %148 = vst [vmem:[%s56 + $0x168] sm:$0xff] %v147
        %v149 = vld [vmem:[%s55 + $0x170] sm:$0xff]
        %150 = vst [vmem:[%s56 + $0x170] sm:$0xff] %v149
        %v151 = vld [vmem:[%s55 + $0x178] sm:$0xff]
        %152 = vst [vmem:[%s56 + $0x178] sm:$0xff] %v151
        %v153 = vld [vmem:[%s55 + $0x180] sm:$0xff]
        %154 = vst [vmem:[%s56 + $0x180] sm:$0xff] %v153
        %v155 = vld [vmem:[%s55 + $0x188] sm:$0xff]
        %156 = vst [vmem:[%s56 + $0x188] sm:$0xff] %v155
        %v157 = vld [vmem:[%s55 + $0x190] sm:$0xff]
        %158 = vst [vmem:[%s56 + $0x190] sm:$0xff] %v157
        %v159 = vld [vmem:[%s55 + $0x198] sm:$0xff]
        %160 = vst [vmem:[%s56 + $0x198] sm:$0xff] %v159
        %v161 = vld [vmem:[%s55 + $0x1a0] sm:$0xff]
        %162 = vst [vmem:[%s56 + $0x1a0] sm:$0xff] %v161
        %v163 = vld [vmem:[%s55 + $0x1a8] sm:$0xff]
        %164 = vst [vmem:[%s56 + $0x1a8] sm:$0xff] %v163
        %v165 = vld [vmem:[%s55 + $0x1b0] sm:$0xff]
        %166 = vst [vmem:[%s56 + $0x1b0] sm:$0xff] %v165
        %v167 = vld [vmem:[%s55 + $0x1b8] sm:$0xff]
        %168 = vst [vmem:[%s56 + $0x1b8] sm:$0xff] %v167
        %v169 = vld [vmem:[%s55 + $0x1c0] sm:$0xff]
        %170 = vst [vmem:[%s56 + $0x1c0] sm:$0xff] %v169
        %v171 = vld [vmem:[%s55 + $0x1c8] sm:$0xff]
        %172 = vst [vmem:[%s56 + $0x1c8] sm:$0xff] %v171
        %v173 = vld [vmem:[%s55 + $0x1d0] sm:$0xff]
        %174 = vst [vmem:[%s56 + $0x1d0] sm:$0xff] %v173
        %v175 = vld [vmem:[%s55 + $0x1d8] sm:$0xff]
        %176 = vst [vmem:[%s56 + $0x1d8] sm:$0xff] %v175
        %v177 = vld [vmem:[%s55 + $0x1e0] sm:$0xff]
        %178 = vst [vmem:[%s56 + $0x1e0] sm:$0xff] %v177
        %v179 = vld [vmem:[%s55 + $0x1e8] sm:$0xff]
        %180 = vst [vmem:[%s56 + $0x1e8] sm:$0xff] %v179
        %v181 = vld [vmem:[%s55 + $0x1f0] sm:$0xff]
        %182 = vst [vmem:[%s56 + $0x1f0] sm:$0xff] %v181
        %v183 = vld [vmem:[%s55 + $0x1f8] sm:$0xff]
        %184 = vst [vmem:[%s56 + $0x1f8] sm:$0xff] %v183
        %v185 = vld [vmem:[%s55 + $0x200] sm:$0xff]
        %186 = vst [vmem:[%s56 + $0x200] sm:$0xff] %v185
        %v187 = vld [vmem:[%s55 + $0x208] sm:$0xff]
        %188 = vst [vmem:[%s56 + $0x208] sm:$0xff] %v187
        %v189 = vld [vmem:[%s55 + $0x210] sm:$0xff]
        %190 = vst [vmem:[%s56 + $0x210] sm:$0xff] %v189
        %v191 = vld [vmem:[%s55 + $0x218] sm:$0xff]
        %192 = vst [vmem:[%s56 + $0x218] sm:$0xff] %v191
        %v193 = vld [vmem:[%s55 + $0x220] sm:$0xff]
        %194 = vst [vmem:[%s56 + $0x220] sm:$0xff] %v193
        %v195 = vld [vmem:[%s55 + $0x228] sm:$0xff]
        %196 = vst [vmem:[%s56 + $0x228] sm:$0xff] %v195
        %v197 = vld [vmem:[%s55 + $0x230] sm:$0xff]
        %198 = vst [vmem:[%s56 + $0x230] sm:$0xff] %v197
        %v199 = vld [vmem:[%s55 + $0x238] sm:$0xff]
        %200 = vst [vmem:[%s56 + $0x238] sm:$0xff] %v199
        %v201 = vld [vmem:[%s55 + $0x240] sm:$0xff]
        %202 = vst [vmem:[%s56 + $0x240] sm:$0xff] %v201
        %v203 = vld [vmem:[%s55 + $0x248] sm:$0xff]
        %204 = vst [vmem:[%s56 + $0x248] sm:$0xff] %v203
        %v205 = vld [vmem:[%s55 + $0x250] sm:$0xff]
        %206 = vst [vmem:[%s56 + $0x250] sm:$0xff] %v205
        %v207 = vld [vmem:[%s55 + $0x258] sm:$0xff]
        %208 = vst [vmem:[%s56 + $0x258] sm:$0xff] %v207
        %v209 = vld [vmem:[%s55 + $0x260] sm:$0xff]
        %210 = vst [vmem:[%s56 + $0x260] sm:$0xff] %v209
        %v211 = vld [vmem:[%s55 + $0x268] sm:$0xff]
        %212 = vst [vmem:[%s56 + $0x268] sm:$0xff] %v211
        %v213 = vld [vmem:[%s55 + $0x270] sm:$0xff]
        %214 = vst [vmem:[%s56 + $0x270] sm:$0xff] %v213
        %v215 = vld [vmem:[%s55 + $0x278] sm:$0xff]
        %216 = vst [vmem:[%s56 + $0x278] sm:$0xff] %v215
        %v217 = vld [vmem:[%s55 + $0x280] sm:$0xff]
        %218 = vst [vmem:[%s56 + $0x280] sm:$0xff] %v217
        %v219 = vld [vmem:[%s55 + $0x288] sm:$0xff]
        %220 = vst [vmem:[%s56 + $0x288] sm:$0xff] %v219
        %v221 = vld [vmem:[%s55 + $0x290] sm:$0xff]
        %222 = vst [vmem:[%s56 + $0x290] sm:$0xff] %v221
        %v223 = vld [vmem:[%s55 + $0x298] sm:$0xff]
        %224 = vst [vmem:[%s56 + $0x298] sm:$0xff] %v223
        %v225 = vld [vmem:[%s55 + $0x2a0] sm:$0xff]
        %226 = vst [vmem:[%s56 + $0x2a0] sm:$0xff] %v225
        %v227 = vld [vmem:[%s55 + $0x2a8] sm:$0xff]
        %228 = vst [vmem:[%s56 + $0x2a8] sm:$0xff] %v227
        %v229 = vld [vmem:[%s55 + $0x2b0] sm:$0xff]
        %230 = vst [vmem:[%s56 + $0x2b0] sm:$0xff] %v229
        %v231 = vld [vmem:[%s55 + $0x2b8] sm:$0xff]
        %232 = vst [vmem:[%s56 + $0x2b8] sm:$0xff] %v231
        %v233 = vld [vmem:[%s55 + $0x2c0] sm:$0xff]
        %234 = vst [vmem:[%s56 + $0x2c0] sm:$0xff] %v233
        %v235 = vld [vmem:[%s55 + $0x2c8] sm:$0xff]
        %236 = vst [vmem:[%s56 + $0x2c8] sm:$0xff] %v235
        %v237 = vld [vmem:[%s55 + $0x2d0] sm:$0xff]
        %238 = vst [vmem:[%s56 + $0x2d0] sm:$0xff] %v237
        %v239 = vld [vmem:[%s55 + $0x2d8] sm:$0xff]
        %240 = vst [vmem:[%s56 + $0x2d8] sm:$0xff] %v239
        %v241 = vld [vmem:[%s55 + $0x2e0] sm:$0xff]
        %242 = vst [vmem:[%s56 + $0x2e0] sm:$0xff] %v241
        %v243 = vld [vmem:[%s55 + $0x2e8] sm:$0xff]
        %244 = vst [vmem:[%s56 + $0x2e8] sm:$0xff] %v243
        %v245 = vld [vmem:[%s55 + $0x2f0] sm:$0xff]
        %246 = vst [vmem:[%s56 + $0x2f0] sm:$0xff] %v245
        %v247 = vld [vmem:[%s55 + $0x2f8] sm:$0xff]
        %248 = vst [vmem:[%s56 + $0x2f8] sm:$0xff] %v247
        %v249 = vld [vmem:[%s55 + $0x300] sm:$0xff]
        %250 = vst [vmem:[%s56 + $0x300] sm:$0xff] %v249
        %v251 = vld [vmem:[%s55 + $0x308] sm:$0xff]
        %252 = vst [vmem:[%s56 + $0x308] sm:$0xff] %v251
        %v253 = vld [vmem:[%s55 + $0x310] sm:$0xff]
        %254 = vst [vmem:[%s56 + $0x310] sm:$0xff] %v253
        %v255 = vld [vmem:[%s55 + $0x318] sm:$0xff]
        %256 = vst [vmem:[%s56 + $0x318] sm:$0xff] %v255
        %v257 = vld [vmem:[%s55 + $0x320] sm:$0xff]
        %258 = vst [vmem:[%s56 + $0x320] sm:$0xff] %v257
        %v259 = vld [vmem:[%s55 + $0x328] sm:$0xff]
        %260 = vst [vmem:[%s56 + $0x328] sm:$0xff] %v259
        %v261 = vld [vmem:[%s55 + $0x330] sm:$0xff]
        %262 = vst [vmem:[%s56 + $0x330] sm:$0xff] %v261
        %v263 = vld [vmem:[%s55 + $0x338] sm:$0xff]
        %264 = vst [vmem:[%s56 + $0x338] sm:$0xff] %v263
        %v265 = vld [vmem:[%s55 + $0x340] sm:$0xff]
        %266 = vst [vmem:[%s56 + $0x340] sm:$0xff] %v265
        %v267 = vld [vmem:[%s55 + $0x348] sm:$0xff]
        %268 = vst [vmem:[%s56 + $0x348] sm:$0xff] %v267
        %v269 = vld [vmem:[%s55 + $0x350] sm:$0xff]
        %270 = vst [vmem:[%s56 + $0x350] sm:$0xff] %v269
        %v271 = vld [vmem:[%s55 + $0x358] sm:$0xff]
        %272 = vst [vmem:[%s56 + $0x358] sm:$0xff] %v271
        %v273 = vld [vmem:[%s55 + $0x360] sm:$0xff]
        %274 = vst [vmem:[%s56 + $0x360] sm:$0xff] %v273
        %v275 = vld [vmem:[%s55 + $0x368] sm:$0xff]
        %276 = vst [vmem:[%s56 + $0x368] sm:$0xff] %v275
        %v277 = vld [vmem:[%s55 + $0x370] sm:$0xff]
        %278 = vst [vmem:[%s56 + $0x370] sm:$0xff] %v277
        %v279 = vld [vmem:[%s55 + $0x378] sm:$0xff]
        %280 = vst [vmem:[%s56 + $0x378] sm:$0xff] %v279
        %v281 = vld [vmem:[%s55 + $0x380] sm:$0xff]
        %282 = vst [vmem:[%s56 + $0x380] sm:$0xff] %v281
        %v283 = vld [vmem:[%s55 + $0x388] sm:$0xff]
        %284 = vst [vmem:[%s56 + $0x388] sm:$0xff] %v283
        %v285 = vld [vmem:[%s55 + $0x390] sm:$0xff]
        %286 = vst [vmem:[%s56 + $0x390] sm:$0xff] %v285
        %v287 = vld [vmem:[%s55 + $0x398] sm:$0xff]
        %288 = vst [vmem:[%s56 + $0x398] sm:$0xff] %v287
        %v289 = vld [vmem:[%s55 + $0x3a0] sm:$0xff]
        %290 = vst [vmem:[%s56 + $0x3a0] sm:$0xff] %v289
        %v291 = vld [vmem:[%s55 + $0x3a8] sm:$0xff]
        %292 = vst [vmem:[%s56 + $0x3a8] sm:$0xff] %v291
        %v293 = vld [vmem:[%s55 + $0x3b0] sm:$0xff]
        %294 = vst [vmem:[%s56 + $0x3b0] sm:$0xff] %v293
        %v295 = vld [vmem:[%s55 + $0x3b8] sm:$0xff]
        %296 = vst [vmem:[%s56 + $0x3b8] sm:$0xff] %v295
        %v297 = vld [vmem:[%s55 + $0x3c0] sm:$0xff]
        %298 = vst [vmem:[%s56 + $0x3c0] sm:$0xff] %v297
        %v299 = vld [vmem:[%s55 + $0x3c8] sm:$0xff]
        %300 = vst [vmem:[%s56 + $0x3c8] sm:$0xff] %v299
        %v301 = vld [vmem:[%s55 + $0x3d0] sm:$0xff]
        %302 = vst [vmem:[%s56 + $0x3d0] sm:$0xff] %v301
        %v303 = vld [vmem:[%s55 + $0x3d8] sm:$0xff]
        %304 = vst [vmem:[%s56 + $0x3d8] sm:$0xff] %v303
        %v305 = vld [vmem:[%s55 + $0x3e0] sm:$0xff]
        %306 = vst [vmem:[%s56 + $0x3e0] sm:$0xff] %v305
        %v307 = vld [vmem:[%s55 + $0x3e8] sm:$0xff]
        %308 = vst [vmem:[%s56 + $0x3e8] sm:$0xff] %v307
        %v309 = vld [vmem:[%s55 + $0x3f0] sm:$0xff]
        %310 = vst [vmem:[%s56 + $0x3f0] sm:$0xff] %v309
        %v311 = vld [vmem:[%s55 + $0x3f8] sm:$0xff]
        %312 = vst [vmem:[%s56 + $0x3f8] sm:$0xff] %v311
        %v313 = vld [vmem:[%s55 + $0x400] sm:$0xff]
        %314 = vst [vmem:[%s56 + $0x400] sm:$0xff] %v313
        %v315 = vld [vmem:[%s55 + $0x408] sm:$0xff]
        %316 = vst [vmem:[%s56 + $0x408] sm:$0xff] %v315
        %v317 = vld [vmem:[%s55 + $0x410] sm:$0xff]
        %318 = vst [vmem:[%s56 + $0x410] sm:$0xff] %v317
        %v319 = vld [vmem:[%s55 + $0x418] sm:$0xff]
        %320 = vst [vmem:[%s56 + $0x418] sm:$0xff] %v319
        %v321 = vld [vmem:[%s55 + $0x420] sm:$0xff]
        %322 = vst [vmem:[%s56 + $0x420] sm:$0xff] %v321
        %v323 = vld [vmem:[%s55 + $0x428] sm:$0xff]
        %324 = vst [vmem:[%s56 + $0x428] sm:$0xff] %v323
        %v325 = vld [vmem:[%s55 + $0x430] sm:$0xff]
        %326 = vst [vmem:[%s56 + $0x430] sm:$0xff] %v325
        %v327 = vld [vmem:[%s55 + $0x438] sm:$0xff]
        %328 = vst [vmem:[%s56 + $0x438] sm:$0xff] %v327
        %v329 = vld [vmem:[%s55 + $0x440] sm:$0xff]
        %330 = vst [vmem:[%s56 + $0x440] sm:$0xff] %v329
        %v331 = vld [vmem:[%s55 + $0x448] sm:$0xff]
        %332 = vst [vmem:[%s56 + $0x448] sm:$0xff] %v331
        %v333 = vld [vmem:[%s55 + $0x450] sm:$0xff]
        %334 = vst [vmem:[%s56 + $0x450] sm:$0xff] %v333
        %v335 = vld [vmem:[%s55 + $0x458] sm:$0xff]
        %336 = vst [vmem:[%s56 + $0x458] sm:$0xff] %v335
        %v337 = vld [vmem:[%s55 + $0x460] sm:$0xff]
        %338 = vst [vmem:[%s56 + $0x460] sm:$0xff] %v337
        %v339 = vld [vmem:[%s55 + $0x468] sm:$0xff]
        %340 = vst [vmem:[%s56 + $0x468] sm:$0xff] %v339
        %v341 = vld [vmem:[%s55 + $0x470] sm:$0xff]
        %342 = vst [vmem:[%s56 + $0x470] sm:$0xff] %v341
        %v343 = vld [vmem:[%s55 + $0x478] sm:$0xff]
        %344 = vst [vmem:[%s56 + $0x478] sm:$0xff] %v343
        %v345 = vld [vmem:[%s55 + $0x480] sm:$0xff]
        %346 = vst [vmem:[%s56 + $0x480] sm:$0xff] %v345
        %v347 = vld [vmem:[%s55 + $0x488] sm:$0xff]
        %348 = vst [vmem:[%s56 + $0x488] sm:$0xff] %v347
        %v349 = vld [vmem:[%s55 + $0x490] sm:$0xff]
        %350 = vst [vmem:[%s56 + $0x490] sm:$0xff] %v349
        %v351 = vld [vmem:[%s55 + $0x498] sm:$0xff]
        %352 = vst [vmem:[%s56 + $0x498] sm:$0xff] %v351
        %v353 = vld [vmem:[%s55 + $0x4a0] sm:$0xff]
        %354 = vst [vmem:[%s56 + $0x4a0] sm:$0xff] %v353
        %v355 = vld [vmem:[%s55 + $0x4a8] sm:$0xff]
        %356 = vst [vmem:[%s56 + $0x4a8] sm:$0xff] %v355
        %v357 = vld [vmem:[%s55 + $0x4b0] sm:$0xff]
        %358 = vst [vmem:[%s56 + $0x4b0] sm:$0xff] %v357
        %v359 = vld [vmem:[%s55 + $0x4b8] sm:$0xff]
        %360 = vst [vmem:[%s56 + $0x4b8] sm:$0xff] %v359
        %v361 = vld [vmem:[%s55 + $0x4c0] sm:$0xff]
        %362 = vst [vmem:[%s56 + $0x4c0] sm:$0xff] %v361
        %v363 = vld [vmem:[%s55 + $0x4c8] sm:$0xff]
        %364 = vst [vmem:[%s56 + $0x4c8] sm:$0xff] %v363
        %v365 = vld [vmem:[%s55 + $0x4d0] sm:$0xff]
        %366 = vst [vmem:[%s56 + $0x4d0] sm:$0xff] %v365
        %v367 = vld [vmem:[%s55 + $0x4d8] sm:$0xff]
        %368 = vst [vmem:[%s56 + $0x4d8] sm:$0xff] %v367
        %v369 = vld [vmem:[%s55 + $0x4e0] sm:$0xff]
        %370 = vst [vmem:[%s56 + $0x4e0] sm:$0xff] %v369
        %v371 = vld [vmem:[%s55 + $0x4e8] sm:$0xff]
        %372 = vst [vmem:[%s56 + $0x4e8] sm:$0xff] %v371
        %v373 = vld [vmem:[%s55 + $0x4f0] sm:$0xff]
        %374 = vst [vmem:[%s56 + $0x4f0] sm:$0xff] %v373
        %v375 = vld [vmem:[%s55 + $0x4f8] sm:$0xff]
        %376 = vst [vmem:[%s56 + $0x4f8] sm:$0xff] %v375
        %v377 = vld [vmem:[%s55 + $0x500] sm:$0xff]
        %378 = vst [vmem:[%s56 + $0x500] sm:$0xff] %v377
        %v379 = vld [vmem:[%s55 + $0x508] sm:$0xff]
        %380 = vst [vmem:[%s56 + $0x508] sm:$0xff] %v379
        %v381 = vld [vmem:[%s55 + $0x510] sm:$0xff]
        %382 = vst [vmem:[%s56 + $0x510] sm:$0xff] %v381
        %v383 = vld [vmem:[%s55 + $0x518] sm:$0xff]
        %384 = vst [vmem:[%s56 + $0x518] sm:$0xff] %v383
        %v385 = vld [vmem:[%s55 + $0x520] sm:$0xff]
        %386 = vst [vmem:[%s56 + $0x520] sm:$0xff] %v385
        %v387 = vld [vmem:[%s55 + $0x528] sm:$0xff]
        %388 = vst [vmem:[%s56 + $0x528] sm:$0xff] %v387
        %v389 = vld [vmem:[%s55 + $0x530] sm:$0xff]
        %390 = vst [vmem:[%s56 + $0x530] sm:$0xff] %v389
        %v391 = vld [vmem:[%s55 + $0x538] sm:$0xff]
        %392 = vst [vmem:[%s56 + $0x538] sm:$0xff] %v391
        %v393 = vld [vmem:[%s55 + $0x540] sm:$0xff]
        %394 = vst [vmem:[%s56 + $0x540] sm:$0xff] %v393
        %v395 = vld [vmem:[%s55 + $0x548] sm:$0xff]
        %396 = vst [vmem:[%s56 + $0x548] sm:$0xff] %v395
        %v397 = vld [vmem:[%s55 + $0x550] sm:$0xff]
        %398 = vst [vmem:[%s56 + $0x550] sm:$0xff] %v397
        %v399 = vld [vmem:[%s55 + $0x558] sm:$0xff]
        %400 = vst [vmem:[%s56 + $0x558] sm:$0xff] %v399
        %v401 = vld [vmem:[%s55 + $0x560] sm:$0xff]
        %402 = vst [vmem:[%s56 + $0x560] sm:$0xff] %v401
        %v403 = vld [vmem:[%s55 + $0x568] sm:$0xff]
        %404 = vst [vmem:[%s56 + $0x568] sm:$0xff] %v403
        %v405 = vld [vmem:[%s55 + $0x570] sm:$0xff]
        %406 = vst [vmem:[%s56 + $0x570] sm:$0xff] %v405
        %v407 = vld [vmem:[%s55 + $0x578] sm:$0xff]
        %408 = vst [vmem:[%s56 + $0x578] sm:$0xff] %v407
        %v409 = vld [vmem:[%s55 + $0x580] sm:$0xff]
        %410 = vst [vmem:[%s56 + $0x580] sm:$0xff] %v409
        %v411 = vld [vmem:[%s55 + $0x588] sm:$0xff]
        %412 = vst [vmem:[%s56 + $0x588] sm:$0xff] %v411
        %v413 = vld [vmem:[%s55 + $0x590] sm:$0xff]
        %414 = vst [vmem:[%s56 + $0x590] sm:$0xff] %v413
        %v415 = vld [vmem:[%s55 + $0x598] sm:$0xff]
        %416 = vst [vmem:[%s56 + $0x598] sm:$0xff] %v415
        %v417 = vld [vmem:[%s55 + $0x5a0] sm:$0xff]
        %418 = vst [vmem:[%s56 + $0x5a0] sm:$0xff] %v417
        %v419 = vld [vmem:[%s55 + $0x5a8] sm:$0xff]
        %420 = vst [vmem:[%s56 + $0x5a8] sm:$0xff] %v419
        %v421 = vld [vmem:[%s55 + $0x5b0] sm:$0xff]
        %422 = vst [vmem:[%s56 + $0x5b0] sm:$0xff] %v421
        %v423 = vld [vmem:[%s55 + $0x5b8] sm:$0xff]
        %424 = vst [vmem:[%s56 + $0x5b8] sm:$0xff] %v423
        %v425 = vld [vmem:[%s55 + $0x5c0] sm:$0xff]
        %426 = vst [vmem:[%s56 + $0x5c0] sm:$0xff] %v425
        %v427 = vld [vmem:[%s55 + $0x5c8] sm:$0xff]
        %428 = vst [vmem:[%s56 + $0x5c8] sm:$0xff] %v427
        %v429 = vld [vmem:[%s55 + $0x5d0] sm:$0xff]
        %430 = vst [vmem:[%s56 + $0x5d0] sm:$0xff] %v429
        %v431 = vld [vmem:[%s55 + $0x5d8] sm:$0xff]
        %432 = vst [vmem:[%s56 + $0x5d8] sm:$0xff] %v431
        %v433 = vld [vmem:[%s55 + $0x5e0] sm:$0xff]
        %434 = vst [vmem:[%s56 + $0x5e0] sm:$0xff] %v433
        %v435 = vld [vmem:[%s55 + $0x5e8] sm:$0xff]
        %436 = vst [vmem:[%s56 + $0x5e8] sm:$0xff] %v435
        %v437 = vld [vmem:[%s55 + $0x5f0] sm:$0xff]
        %438 = vst [vmem:[%s56 + $0x5f0] sm:$0xff] %v437
        %v439 = vld [vmem:[%s55 + $0x5f8] sm:$0xff]
        %440 = vst [vmem:[%s56 + $0x5f8] sm:$0xff] %v439
        %v441 = vld [vmem:[%s55 + $0x600] sm:$0xff]
        %442 = vst [vmem:[%s56 + $0x600] sm:$0xff] %v441
        %v443 = vld [vmem:[%s55 + $0x608] sm:$0xff]
        %444 = vst [vmem:[%s56 + $0x608] sm:$0xff] %v443
        %v445 = vld [vmem:[%s55 + $0x610] sm:$0xff]
        %446 = vst [vmem:[%s56 + $0x610] sm:$0xff] %v445
        %v447 = vld [vmem:[%s55 + $0x618] sm:$0xff]
        %448 = vst [vmem:[%s56 + $0x618] sm:$0xff] %v447
        %v449 = vld [vmem:[%s55 + $0x620] sm:$0xff]
        %450 = vst [vmem:[%s56 + $0x620] sm:$0xff] %v449
        %v451 = vld [vmem:[%s55 + $0x628] sm:$0xff]
        %452 = vst [vmem:[%s56 + $0x628] sm:$0xff] %v451
        %v453 = vld [vmem:[%s55 + $0x630] sm:$0xff]
        %454 = vst [vmem:[%s56 + $0x630] sm:$0xff] %v453
        %v455 = vld [vmem:[%s55 + $0x638] sm:$0xff]
        %456 = vst [vmem:[%s56 + $0x638] sm:$0xff] %v455
        %v457 = vld [vmem:[%s55 + $0x640] sm:$0xff]
        %458 = vst [vmem:[%s56 + $0x640] sm:$0xff] %v457
        %v459 = vld [vmem:[%s55 + $0x648] sm:$0xff]
        %460 = vst [vmem:[%s56 + $0x648] sm:$0xff] %v459
        %v461 = vld [vmem:[%s55 + $0x650] sm:$0xff]
        %462 = vst [vmem:[%s56 + $0x650] sm:$0xff] %v461
        %v463 = vld [vmem:[%s55 + $0x658] sm:$0xff]
        %464 = vst [vmem:[%s56 + $0x658] sm:$0xff] %v463
        %v465 = vld [vmem:[%s55 + $0x660] sm:$0xff]
        %466 = vst [vmem:[%s56 + $0x660] sm:$0xff] %v465
        %v467 = vld [vmem:[%s55 + $0x668] sm:$0xff]
        %468 = vst [vmem:[%s56 + $0x668] sm:$0xff] %v467
        %v469 = vld [vmem:[%s55 + $0x670] sm:$0xff]
        %470 = vst [vmem:[%s56 + $0x670] sm:$0xff] %v469
        %v471 = vld [vmem:[%s55 + $0x678] sm:$0xff]
        %472 = vst [vmem:[%s56 + $0x678] sm:$0xff] %v471
        %v473 = vld [vmem:[%s55 + $0x680] sm:$0xff]
        %474 = vst [vmem:[%s56 + $0x680] sm:$0xff] %v473
        %v475 = vld [vmem:[%s55 + $0x688] sm:$0xff]
        %476 = vst [vmem:[%s56 + $0x688] sm:$0xff] %v475
        %v477 = vld [vmem:[%s55 + $0x690] sm:$0xff]
        %478 = vst [vmem:[%s56 + $0x690] sm:$0xff] %v477
        %v479 = vld [vmem:[%s55 + $0x698] sm:$0xff]
        %480 = vst [vmem:[%s56 + $0x698] sm:$0xff] %v479
        %v481 = vld [vmem:[%s55 + $0x6a0] sm:$0xff]
        %482 = vst [vmem:[%s56 + $0x6a0] sm:$0xff] %v481
        %v483 = vld [vmem:[%s55 + $0x6a8] sm:$0xff]
        %484 = vst [vmem:[%s56 + $0x6a8] sm:$0xff] %v483
        %v485 = vld [vmem:[%s55 + $0x6b0] sm:$0xff]
        %486 = vst [vmem:[%s56 + $0x6b0] sm:$0xff] %v485
        %v487 = vld [vmem:[%s55 + $0x6b8] sm:$0xff]
        %488 = vst [vmem:[%s56 + $0x6b8] sm:$0xff] %v487
        %v489 = vld [vmem:[%s55 + $0x6c0] sm:$0xff]
        %490 = vst [vmem:[%s56 + $0x6c0] sm:$0xff] %v489
        %v491 = vld [vmem:[%s55 + $0x6c8] sm:$0xff]
        %492 = vst [vmem:[%s56 + $0x6c8] sm:$0xff] %v491
        %v493 = vld [vmem:[%s55 + $0x6d0] sm:$0xff]
        %494 = vst [vmem:[%s56 + $0x6d0] sm:$0xff] %v493
        %v495 = vld [vmem:[%s55 + $0x6d8] sm:$0xff]
        %496 = vst [vmem:[%s56 + $0x6d8] sm:$0xff] %v495
        %v497 = vld [vmem:[%s55 + $0x6e0] sm:$0xff]
        %498 = vst [vmem:[%s56 + $0x6e0] sm:$0xff] %v497
        %v499 = vld [vmem:[%s55 + $0x6e8] sm:$0xff]
        %500 = vst [vmem:[%s56 + $0x6e8] sm:$0xff] %v499
        %v501 = vld [vmem:[%s55 + $0x6f0] sm:$0xff]
        %502 = vst [vmem:[%s56 + $0x6f0] sm:$0xff] %v501
        %v503 = vld [vmem:[%s55 + $0x6f8] sm:$0xff]
        %504 = vst [vmem:[%s56 + $0x6f8] sm:$0xff] %v503
        %v505 = vld [vmem:[%s55 + $0x700] sm:$0xff]
        %506 = vst [vmem:[%s56 + $0x700] sm:$0xff] %v505
        %v507 = vld [vmem:[%s55 + $0x708] sm:$0xff]
        %508 = vst [vmem:[%s56 + $0x708] sm:$0xff] %v507
        %v509 = vld [vmem:[%s55 + $0x710] sm:$0xff]
        %510 = vst [vmem:[%s56 + $0x710] sm:$0xff] %v509
        %v511 = vld [vmem:[%s55 + $0x718] sm:$0xff]
        %512 = vst [vmem:[%s56 + $0x718] sm:$0xff] %v511
        %v513 = vld [vmem:[%s55 + $0x720] sm:$0xff]
        %514 = vst [vmem:[%s56 + $0x720] sm:$0xff] %v513
        %v515 = vld [vmem:[%s55 + $0x728] sm:$0xff]
        %516 = vst [vmem:[%s56 + $0x728] sm:$0xff] %v515
        %v517 = vld [vmem:[%s55 + $0x730] sm:$0xff]
        %518 = vst [vmem:[%s56 + $0x730] sm:$0xff] %v517
        %v519 = vld [vmem:[%s55 + $0x738] sm:$0xff]
        %520 = vst [vmem:[%s56 + $0x738] sm:$0xff] %v519
        %v521 = vld [vmem:[%s55 + $0x740] sm:$0xff]
        %522 = vst [vmem:[%s56 + $0x740] sm:$0xff] %v521
        %v523 = vld [vmem:[%s55 + $0x748] sm:$0xff]
        %524 = vst [vmem:[%s56 + $0x748] sm:$0xff] %v523
        %v525 = vld [vmem:[%s55 + $0x750] sm:$0xff]
        %526 = vst [vmem:[%s56 + $0x750] sm:$0xff] %v525
        %v527 = vld [vmem:[%s55 + $0x758] sm:$0xff]
        %528 = vst [vmem:[%s56 + $0x758] sm:$0xff] %v527
        %v529 = vld [vmem:[%s55 + $0x760] sm:$0xff]
        %530 = vst [vmem:[%s56 + $0x760] sm:$0xff] %v529
        %v531 = vld [vmem:[%s55 + $0x768] sm:$0xff]
        %532 = vst [vmem:[%s56 + $0x768] sm:$0xff] %v531
        %v533 = vld [vmem:[%s55 + $0x770] sm:$0xff]
        %534 = vst [vmem:[%s56 + $0x770] sm:$0xff] %v533
        %v535 = vld [vmem:[%s55 + $0x778] sm:$0xff]
        %536 = vst [vmem:[%s56 + $0x778] sm:$0xff] %v535
        %v537 = vld [vmem:[%s55 + $0x780] sm:$0xff]
        %538 = vst [vmem:[%s56 + $0x780] sm:$0xff] %v537
        %v539 = vld [vmem:[%s55 + $0x788] sm:$0xff]
        %540 = vst [vmem:[%s56 + $0x788] sm:$0xff] %v539
        %v541 = vld [vmem:[%s55 + $0x790] sm:$0xff]
        %542 = vst [vmem:[%s56 + $0x790] sm:$0xff] %v541
        %v543 = vld [vmem:[%s55 + $0x798] sm:$0xff]
        %544 = vst [vmem:[%s56 + $0x798] sm:$0xff] %v543
        %v545 = vld [vmem:[%s55 + $0x7a0] sm:$0xff]
        %546 = vst [vmem:[%s56 + $0x7a0] sm:$0xff] %v545
        %v547 = vld [vmem:[%s55 + $0x7a8] sm:$0xff]
        %548 = vst [vmem:[%s56 + $0x7a8] sm:$0xff] %v547
        %v549 = vld [vmem:[%s55 + $0x7b0] sm:$0xff]
        %550 = vst [vmem:[%s56 + $0x7b0] sm:$0xff] %v549
        %v551 = vld [vmem:[%s55 + $0x7b8] sm:$0xff]
        %552 = vst [vmem:[%s56 + $0x7b8] sm:$0xff] %v551
        %v553 = vld [vmem:[%s55 + $0x7c0] sm:$0xff]
        %554 = vst [vmem:[%s56 + $0x7c0] sm:$0xff] %v553
        %v555 = vld [vmem:[%s55 + $0x7c8] sm:$0xff]
        %556 = vst [vmem:[%s56 + $0x7c8] sm:$0xff] %v555
        %v557 = vld [vmem:[%s55 + $0x7d0] sm:$0xff]
        %558 = vst [vmem:[%s56 + $0x7d0] sm:$0xff] %v557
        %v559 = vld [vmem:[%s55 + $0x7d8] sm:$0xff]
        %560 = vst [vmem:[%s56 + $0x7d8] sm:$0xff] %v559
        %v561 = vld [vmem:[%s55 + $0x7e0] sm:$0xff]
        %562 = vst [vmem:[%s56 + $0x7e0] sm:$0xff] %v561
        %v563 = vld [vmem:[%s55 + $0x7e8] sm:$0xff]
        %564 = vst [vmem:[%s56 + $0x7e8] sm:$0xff] %v563
        %v565 = vld [vmem:[%s55 + $0x7f0] sm:$0xff]
        %566 = vst [vmem:[%s56 + $0x7f0] sm:$0xff] %v565
        %v567 = vld [vmem:[%s55 + $0x7f8] sm:$0xff]
        %568 = vst [vmem:[%s56 + $0x7f8] sm:$0xff] %v567
        %v569 = vld [vmem:[%s55 + $0x800] sm:$0xff]
        %570 = vst [vmem:[%s56 + $0x800] sm:$0xff] %v569
        %v571 = vld [vmem:[%s55 + $0x808] sm:$0xff]
        %572 = vst [vmem:[%s56 + $0x808] sm:$0xff] %v571
        %v573 = vld [vmem:[%s55 + $0x810] sm:$0xff]
        %574 = vst [vmem:[%s56 + $0x810] sm:$0xff] %v573
        %v575 = vld [vmem:[%s55 + $0x818] sm:$0xff]
        %576 = vst [vmem:[%s56 + $0x818] sm:$0xff] %v575
        %v577 = vld [vmem:[%s55 + $0x820] sm:$0xff]
        %578 = vst [vmem:[%s56 + $0x820] sm:$0xff] %v577
        %v579 = vld [vmem:[%s55 + $0x828] sm:$0xff]
        %580 = vst [vmem:[%s56 + $0x828] sm:$0xff] %v579
        %v581 = vld [vmem:[%s55 + $0x830] sm:$0xff]
        %582 = vst [vmem:[%s56 + $0x830] sm:$0xff] %v581
        %v583 = vld [vmem:[%s55 + $0x838] sm:$0xff]
        %584 = vst [vmem:[%s56 + $0x838] sm:$0xff] %v583
        %v585 = vld [vmem:[%s55 + $0x840] sm:$0xff]
        %586 = vst [vmem:[%s56 + $0x840] sm:$0xff] %v585
        %v587 = vld [vmem:[%s55 + $0x848] sm:$0xff]
        %588 = vst [vmem:[%s56 + $0x848] sm:$0xff] %v587
        %v589 = vld [vmem:[%s55 + $0x850] sm:$0xff]
        %590 = vst [vmem:[%s56 + $0x850] sm:$0xff] %v589
        %v591 = vld [vmem:[%s55 + $0x858] sm:$0xff]
        %592 = vst [vmem:[%s56 + $0x858] sm:$0xff] %v591
        %v593 = vld [vmem:[%s55 + $0x860] sm:$0xff]
        %594 = vst [vmem:[%s56 + $0x860] sm:$0xff] %v593
        %v595 = vld [vmem:[%s55 + $0x868] sm:$0xff]
        %596 = vst [vmem:[%s56 + $0x868] sm:$0xff] %v595
        %v597 = vld [vmem:[%s55 + $0x870] sm:$0xff]
        %598 = vst [vmem:[%s56 + $0x870] sm:$0xff] %v597
        %v599 = vld [vmem:[%s55 + $0x878] sm:$0xff]
        %600 = vst [vmem:[%s56 + $0x878] sm:$0xff] %v599
        %v601 = vld [vmem:[%s55 + $0x880] sm:$0xff]
        %602 = vst [vmem:[%s56 + $0x880] sm:$0xff] %v601
        %v603 = vld [vmem:[%s55 + $0x888] sm:$0xff]
        %604 = vst [vmem:[%s56 + $0x888] sm:$0xff] %v603
        %v605 = vld [vmem:[%s55 + $0x890] sm:$0xff]
        %606 = vst [vmem:[%s56 + $0x890] sm:$0xff] %v605
        %v607 = vld [vmem:[%s55 + $0x898] sm:$0xff]
        %608 = vst [vmem:[%s56 + $0x898] sm:$0xff] %v607
        %v609 = vld [vmem:[%s55 + $0x8a0] sm:$0xff]
        %610 = vst [vmem:[%s56 + $0x8a0] sm:$0xff] %v609
        %v611 = vld [vmem:[%s55 + $0x8a8] sm:$0xff]
        %612 = vst [vmem:[%s56 + $0x8a8] sm:$0xff] %v611
        %v613 = vld [vmem:[%s55 + $0x8b0] sm:$0xff]
        %614 = vst [vmem:[%s56 + $0x8b0] sm:$0xff] %v613
        %v615 = vld [vmem:[%s55 + $0x8b8] sm:$0xff]
        %616 = vst [vmem:[%s56 + $0x8b8] sm:$0xff] %v615
        %v617 = vld [vmem:[%s55 + $0x8c0] sm:$0xff]
        %618 = vst [vmem:[%s56 + $0x8c0] sm:$0xff] %v617
        %v619 = vld [vmem:[%s55 + $0x8c8] sm:$0xff]
        %620 = vst [vmem:[%s56 + $0x8c8] sm:$0xff] %v619
        %v621 = vld [vmem:[%s55 + $0x8d0] sm:$0xff]
        %622 = vst [vmem:[%s56 + $0x8d0] sm:$0xff] %v621
        %v623 = vld [vmem:[%s55 + $0x8d8] sm:$0xff]
        %624 = vst [vmem:[%s56 + $0x8d8] sm:$0xff] %v623
        %v625 = vld [vmem:[%s55 + $0x8e0] sm:$0xff]
        %626 = vst [vmem:[%s56 + $0x8e0] sm:$0xff] %v625
        %v627 = vld [vmem:[%s55 + $0x8e8] sm:$0xff]
        %628 = vst [vmem:[%s56 + $0x8e8] sm:$0xff] %v627
        %v629 = vld [vmem:[%s55 + $0x8f0] sm:$0xff]
        %630 = vst [vmem:[%s56 + $0x8f0] sm:$0xff] %v629
        %v631 = vld [vmem:[%s55 + $0x8f8] sm:$0xff]
        %632 = vst [vmem:[%s56 + $0x8f8] sm:$0xff] %v631
      $region46: #{cnn_forward.1} parent=40 // loop_footer
        %s54 = sadd.s32 1, %s50
      $region47: #{cnn_forward.1} parent=40 // loop_footer_branch
        %49 = sbr.rel target = $region43
      $region48: #{cnn_forward.1} parent=40 // loop_exit
        _
    $region41: #{cnn_forward.1} parent=1 // pred_fallthru
      _
    // Predicated region
    $region49: #{cnn_forward.1} parent=1 // pred_check
      _
    $region50: #{cnn_forward.1} parent=1 // pred_check_branch
      %634 = sbr.rel target = $region52
    $region51: #{cnn_forward.1} parent=1 // pred_region
      _
    $region52: #{cnn_forward.1} parent=1 // pred_fallthru
      _
    // Predicated region
    $region53: #{cnn_forward.1} parent=1 // pred_check
      _
    $region54: #{cnn_forward.1} parent=1 // pred_check_branch
      %637 = sbr.rel (0) target = $region56
    $region55: #{cnn_forward.1} parent=1 // pred_region
      %638 = vsyncadd [#allocation6], 36864
    $region56: #{cnn_forward.1} parent=1 // pred_fallthru
      _
    %v639 = vld [vmem:[%s0] sm:$0xff]
    %v640 = vld [vmem:[%s0 + $0x8] sm:$0xff]
    %v641 = vld [vmem:[%s0 + $0x10] sm:$0xff]
    %v642 = vld [vmem:[%s0 + $0x18] sm:$0xff]
    %v643 = vld [vmem:[%s0 + $0x20] sm:$0xff]
    %v644 = vld [vmem:[%s0 + $0x28] sm:$0xff]
    %v645 = vld [vmem:[%s0 + $0x30] sm:$0xff]
    %v646 = vld [vmem:[%s0 + $0x38] sm:$0xff]
    %v647 = vld [vmem:[%s0 + $0x40] sm:$0xff]
    %v648 = vld [vmem:[%s0 + $0x48] sm:$0xff]
    %v649 = vld [vmem:[%s0 + $0x50] sm:$0xff]
    %v650 = vld [vmem:[%s0 + $0x58] sm:$0xff]
    %v651 = vld [vmem:[%s0 + $0x60] sm:$0xff]
    %v652 = vld [vmem:[%s0 + $0x68] sm:$0xff]
    %v653 = vld [vmem:[%s0 + $0x70] sm:$0xff]
    %v654 = vld [vmem:[%s0 + $0x78] sm:$0xff]
    %v655 = vld [vmem:[%s0 + $0x80] sm:$0xff]
    %v656 = vld [vmem:[%s0 + $0x88] sm:$0xff]
    %v657 = vld [vmem:[%s0 + $0x90] sm:$0xff]
    %v658 = vld [vmem:[%s0 + $0x98] sm:$0xff]
    %v659 = vld [vmem:[%s0 + $0xa0] sm:$0xff]
    %v660 = vld [vmem:[%s0 + $0xa8] sm:$0xff]
    %v661 = vld [vmem:[%s0 + $0xb0] sm:$0xff]
    %v662 = vld [vmem:[%s0 + $0xb8] sm:$0xff]
    %v663 = vld [vmem:[%s0 + $0xc0] sm:$0xff]
    %v664 = vld [vmem:[%s0 + $0xc8] sm:$0xff]
    %v665 = vld [vmem:[%s0 + $0xd0] sm:$0xff]
    %v666 = vld [vmem:[%s0 + $0xd8] sm:$0xff]
    %v667 = vld [vmem:[%s0 + $0xe0] sm:$0xff]
    %v668 = vld [vmem:[%s0 + $0xe8] sm:$0xff]
    %v669 = vld [vmem:[%s0 + $0xf0] sm:$0xff]
    %v670 = vld [vmem:[%s0 + $0xf8] sm:$0xff]
    %v671 = vld [vmem:[%s0 + $0x100] sm:$0xff]
    %v672 = vld [vmem:[%s0 + $0x108] sm:$0xff]
    %v673 = vld [vmem:[%s0 + $0x110] sm:$0xff]
    %v674 = vld [vmem:[%s0 + $0x118] sm:$0xff]
    %v675 = vld [vmem:[%s0 + $0x120] sm:$0xff]
    %v676 = vld [vmem:[%s0 + $0x128] sm:$0xff]
    %v677 = vld [vmem:[%s0 + $0x130] sm:$0xff]
    %v678 = vld [vmem:[%s0 + $0x138] sm:$0xff]
    %v679 = vld [vmem:[%s0 + $0x140] sm:$0xff]
    %v680 = vld [vmem:[%s0 + $0x148] sm:$0xff]
    %v681 = vld [vmem:[%s0 + $0x150] sm:$0xff]
    %v682 = vld [vmem:[%s0 + $0x158] sm:$0xff]
    %v683 = vld [vmem:[%s0 + $0x160] sm:$0xff]
    %v684 = vld [vmem:[%s0 + $0x168] sm:$0xff]
    %v685 = vld [vmem:[%s0 + $0x170] sm:$0xff]
    %v686 = vld [vmem:[%s0 + $0x178] sm:$0xff]
    %v687 = vld [vmem:[%s0 + $0x180] sm:$0xff]
    %v688 = vld [vmem:[%s0 + $0x188] sm:$0xff]
    %v689 = vld [vmem:[%s0 + $0x190] sm:$0xff]
    %v690 = vld [vmem:[%s0 + $0x198] sm:$0xff]
    %v691 = vld [vmem:[%s0 + $0x1a0] sm:$0xff]
    %v692 = vld [vmem:[%s0 + $0x1a8] sm:$0xff]
    %v693 = vld [vmem:[%s0 + $0x1b0] sm:$0xff]
    %v694 = vld [vmem:[%s0 + $0x1b8] sm:$0xff]
    %v695 = vld [vmem:[%s0 + $0x1c0] sm:$0xff]
    %v696 = vld [vmem:[%s0 + $0x1c8] sm:$0xff]
    %v697 = vld [vmem:[%s0 + $0x1d0] sm:$0xff]
    %v698 = vld [vmem:[%s0 + $0x1d8] sm:$0xff]
    %v699 = vld [vmem:[%s0 + $0x1e0] sm:$0xff]
    %v700 = vld [vmem:[%s0 + $0x1e8] sm:$0xff]
    %v701 = vld [vmem:[%s0 + $0x1f0] sm:$0xff]
    %v702 = vld [vmem:[%s0 + $0x1f8] sm:$0xff]
    %v703 = vld [vmem:[#allocation7] sm:$0xff]
    %v704 = vld [vmem:[#allocation7 + $0x8] sm:$0xff]
    %v705 = vld [vmem:[#allocation7 + $0x10] sm:$0xff]
    %v706 = vld [vmem:[#allocation7 + $0x18] sm:$0xff]
    %v707 = vld [vmem:[#allocation7 + $0x20] sm:$0xff]
    %v708 = vld [vmem:[#allocation7 + $0x28] sm:$0x1f]
    %v709 = vld [vmem:[%s2] sm:$0x1]
    %v711 = vperm.slane %v709, 0
    %vm713 = vcmask 367616
    %v715 = vsel %vm713, %v639, 0
    %v718 = vsel %vm713, %v640, 0
    %v721 = vsel %vm713, %v641, 0
    %v724 = vsel %vm713, %v642, 0
    %v727 = vsel %vm713, %v643, 0
    %v730 = vsel %vm713, %v644, 0
    %v733 = vsel %vm713, %v645, 0
    %v736 = vsel %vm713, %v646, 0
    %v739 = vsel %vm713, %v647, 0
    %v742 = vsel %vm713, %v648, 0
    %v745 = vsel %vm713, %v649, 0
    %v748 = vsel %vm713, %v650, 0
    %v751 = vsel %vm713, %v651, 0
    %v754 = vsel %vm713, %v652, 0
    %v757 = vsel %vm713, %v653, 0
    %v760 = vsel %vm713, %v654, 0
    %v763 = vsel %vm713, %v655, 0
    %v766 = vsel %vm713, %v656, 0
    %v769 = vsel %vm713, %v657, 0
    %v772 = vsel %vm713, %v658, 0
    %v775 = vsel %vm713, %v659, 0
    %v778 = vsel %vm713, %v660, 0
    %v781 = vsel %vm713, %v661, 0
    %v784 = vsel %vm713, %v662, 0
    %v787 = vsel %vm713, %v663, 0
    %v790 = vsel %vm713, %v664, 0
    %v793 = vsel %vm713, %v665, 0
    %v796 = vsel %vm713, %v666, 0
    %v799 = vsel %vm713, %v667, 0
    %v802 = vsel %vm713, %v668, 0
    %v805 = vsel %vm713, %v669, 0
    %v808 = vsel %vm713, %v670, 0
    %v811 = vsel %vm713, %v671, 0
    %v814 = vsel %vm713, %v672, 0
    %v817 = vsel %vm713, %v673, 0
    %v820 = vsel %vm713, %v674, 0
    %v823 = vsel %vm713, %v675, 0
    %v826 = vsel %vm713, %v676, 0
    %v829 = vsel %vm713, %v677, 0
    %v832 = vsel %vm713, %v678, 0
    %v835 = vsel %vm713, %v679, 0
    %v838 = vsel %vm713, %v680, 0
    %v841 = vsel %vm713, %v681, 0
    %v844 = vsel %vm713, %v682, 0
    %v847 = vsel %vm713, %v683, 0
    %v850 = vsel %vm713, %v684, 0
    %v853 = vsel %vm713, %v685, 0
    %v856 = vsel %vm713, %v686, 0
    %v859 = vsel %vm713, %v687, 0
    %v862 = vsel %vm713, %v688, 0
    %v865 = vsel %vm713, %v689, 0
    %v868 = vsel %vm713, %v690, 0
    %v871 = vsel %vm713, %v691, 0
    %v874 = vsel %vm713, %v692, 0
    %v877 = vsel %vm713, %v693, 0
    %v880 = vsel %vm713, %v694, 0
    %v883 = vsel %vm713, %v695, 0
    %v886 = vsel %vm713, %v696, 0
    %v889 = vsel %vm713, %v697, 0
    %v892 = vsel %vm713, %v698, 0
    %v895 = vsel %vm713, %v699, 0
    %v898 = vsel %vm713, %v700, 0
    %v901 = vsel %vm713, %v701, 0
    %v904 = vsel %vm713, %v702, 0
    %vm906 = vcmask 1044480
    %v908 = vsel %vm906, %v708, 0
    %910 = vmatpush.msra.mxu0 0.0
    %911 = vmatpush.msra.mxu0 0.0
    %912 = vmatpush.msra.mxu0 0.0
    %913 = vmatpush.msra.mxu0 0.0
    %914 = vmatpush.msra.mxu0 0.0
    %915 = vmatpush.msra.mxu0 0.0
    %916 = vmatpush.msra.mxu0 0.0
    %917 = vmatpush.msra.mxu0 0.0
    %918 = vmatpush.msra.mxu0 0.0
    %919 = vmatpush.msra.mxu0 0.0
    %920 = vmatpush.msra.mxu0 %v908
    %921 = vmatpush.msra.mxu0 %v707
    %922 = vmatpush.msra.mxu0 %v706
    %923 = vmatpush.msra.mxu0 %v705
    %924 = vmatpush.msra.mxu0 %v704
    %925 = vmatpush.msra.mxu0 %v703
    %926 = vmatmul.f32.gmra.mxu0 %v715
    %v927 = vpop.f32.mrf.mxu0
    %v928 = vadd.f32 %v711, %v927
    %929 = vmatmul.f32.gmra.mxu0 %v718
    %v930 = vpop.f32.mrf.mxu0
    %v931 = vadd.f32 %v711, %v930
    %932 = vmatmul.f32.gmra.mxu0 %v721
    %v933 = vpop.f32.mrf.mxu0
    %v934 = vadd.f32 %v711, %v933
    %935 = vmatmul.f32.gmra.mxu0 %v724
    %v936 = vpop.f32.mrf.mxu0
    %v937 = vadd.f32 %v711, %v936
    %938 = vmatmul.f32.gmra.mxu0 %v727
    %v939 = vpop.f32.mrf.mxu0
    %v940 = vadd.f32 %v711, %v939
    %941 = vmatmul.f32.gmra.mxu0 %v730
    %v942 = vpop.f32.mrf.mxu0
    %v943 = vadd.f32 %v711, %v942
    %944 = vmatmul.f32.gmra.mxu0 %v733
    %v945 = vpop.f32.mrf.mxu0
    %v946 = vadd.f32 %v711, %v945
    %947 = vmatmul.f32.gmra.mxu0 %v736
    %v948 = vpop.f32.mrf.mxu0
    %v949 = vadd.f32 %v711, %v948
    %950 = vmatmul.f32.gmra.mxu0 %v739
    %v951 = vpop.f32.mrf.mxu0
    %v952 = vadd.f32 %v711, %v951
    %953 = vmatmul.f32.gmra.mxu0 %v742
    %v954 = vpop.f32.mrf.mxu0
    %v955 = vadd.f32 %v711, %v954
    %956 = vmatmul.f32.gmra.mxu0 %v745
    %v957 = vpop.f32.mrf.mxu0
    %v958 = vadd.f32 %v711, %v957
    %959 = vmatmul.f32.gmra.mxu0 %v748
    %v960 = vpop.f32.mrf.mxu0
    %v961 = vadd.f32 %v711, %v960
    %962 = vmatmul.f32.gmra.mxu0 %v751
    %v963 = vpop.f32.mrf.mxu0
    %v964 = vadd.f32 %v711, %v963
    %965 = vmatmul.f32.gmra.mxu0 %v754
    %v966 = vpop.f32.mrf.mxu0
    %v967 = vadd.f32 %v711, %v966
    %968 = vmatmul.f32.gmra.mxu0 %v757
    %v969 = vpop.f32.mrf.mxu0
    %v970 = vadd.f32 %v711, %v969
    %971 = vmatmul.f32.gmra.mxu0 %v760
    %v972 = vpop.f32.mrf.mxu0
    %v973 = vadd.f32 %v711, %v972
    %974 = vmatmul.f32.gmra.mxu0 %v763
    %v975 = vpop.f32.mrf.mxu0
    %v976 = vadd.f32 %v711, %v975
    %977 = vmatmul.f32.gmra.mxu0 %v766
    %v978 = vpop.f32.mrf.mxu0
    %v979 = vadd.f32 %v711, %v978
    %980 = vmatmul.f32.gmra.mxu0 %v769
    %v981 = vpop.f32.mrf.mxu0
    %v982 = vadd.f32 %v711, %v981
    %983 = vmatmul.f32.gmra.mxu0 %v772
    %v984 = vpop.f32.mrf.mxu0
    %v985 = vadd.f32 %v711, %v984
    %986 = vmatmul.f32.gmra.mxu0 %v775
    %v987 = vpop.f32.mrf.mxu0
    %v988 = vadd.f32 %v711, %v987
    %989 = vmatmul.f32.gmra.mxu0 %v778
    %v990 = vpop.f32.mrf.mxu0
    %v991 = vadd.f32 %v711, %v990
    %992 = vmatmul.f32.gmra.mxu0 %v781
    %v993 = vpop.f32.mrf.mxu0
    %v994 = vadd.f32 %v711, %v993
    %995 = vmatmul.f32.gmra.mxu0 %v784
    %v996 = vpop.f32.mrf.mxu0
    %v997 = vadd.f32 %v711, %v996
    %998 = vmatmul.f32.gmra.mxu0 %v787
    %v999 = vpop.f32.mrf.mxu0
    %v1000 = vadd.f32 %v711, %v999
    %1001 = vmatmul.f32.gmra.mxu0 %v790
    %v1002 = vpop.f32.mrf.mxu0
    %v1003 = vadd.f32 %v711, %v1002
    %1004 = vmatmul.f32.gmra.mxu0 %v793
    %v1005 = vpop.f32.mrf.mxu0
    %v1006 = vadd.f32 %v711, %v1005
    %1007 = vmatmul.f32.gmra.mxu0 %v796
    %v1008 = vpop.f32.mrf.mxu0
    %v1009 = vadd.f32 %v711, %v1008
    %1010 = vmatmul.f32.gmra.mxu0 %v799
    %v1011 = vpop.f32.mrf.mxu0
    %v1012 = vadd.f32 %v711, %v1011
    %1013 = vmatmul.f32.gmra.mxu0 %v802
    %v1014 = vpop.f32.mrf.mxu0
    %v1015 = vadd.f32 %v711, %v1014
    %1016 = vmatmul.f32.gmra.mxu0 %v805
    %v1017 = vpop.f32.mrf.mxu0
    %v1018 = vadd.f32 %v711, %v1017
    %1019 = vmatmul.f32.gmra.mxu0 %v808
    %v1020 = vpop.f32.mrf.mxu0
    %v1021 = vadd.f32 %v711, %v1020
    %1022 = vmatmul.f32.gmra.mxu0 %v811
    %v1023 = vpop.f32.mrf.mxu0
    %v1024 = vadd.f32 %v711, %v1023
    %1025 = vmatmul.f32.gmra.mxu0 %v814
    %v1026 = vpop.f32.mrf.mxu0
    %v1027 = vadd.f32 %v711, %v1026
    %1028 = vmatmul.f32.gmra.mxu0 %v817
    %v1029 = vpop.f32.mrf.mxu0
    %v1030 = vadd.f32 %v711, %v1029
    %1031 = vmatmul.f32.gmra.mxu0 %v820
    %v1032 = vpop.f32.mrf.mxu0
    %v1033 = vadd.f32 %v711, %v1032
    %1034 = vmatmul.f32.gmra.mxu0 %v823
    %v1035 = vpop.f32.mrf.mxu0
    %v1036 = vadd.f32 %v711, %v1035
    %1037 = vmatmul.f32.gmra.mxu0 %v826
    %v1038 = vpop.f32.mrf.mxu0
    %v1039 = vadd.f32 %v711, %v1038
    %1040 = vmatmul.f32.gmra.mxu0 %v829
    %v1041 = vpop.f32.mrf.mxu0
    %v1042 = vadd.f32 %v711, %v1041
    %1043 = vmatmul.f32.gmra.mxu0 %v832
    %v1044 = vpop.f32.mrf.mxu0
    %v1045 = vadd.f32 %v711, %v1044
    %1046 = vmatmul.f32.gmra.mxu0 %v835
    %v1047 = vpop.f32.mrf.mxu0
    %v1048 = vadd.f32 %v711, %v1047
    %1049 = vmatmul.f32.gmra.mxu0 %v838
    %v1050 = vpop.f32.mrf.mxu0
    %v1051 = vadd.f32 %v711, %v1050
    %1052 = vmatmul.f32.gmra.mxu0 %v841
    %v1053 = vpop.f32.mrf.mxu0
    %v1054 = vadd.f32 %v711, %v1053
    %1055 = vmatmul.f32.gmra.mxu0 %v844
    %v1056 = vpop.f32.mrf.mxu0
    %v1057 = vadd.f32 %v711, %v1056
    %1058 = vmatmul.f32.gmra.mxu0 %v847
    %v1059 = vpop.f32.mrf.mxu0
    %v1060 = vadd.f32 %v711, %v1059
    %1061 = vmatmul.f32.gmra.mxu0 %v850
    %v1062 = vpop.f32.mrf.mxu0
    %v1063 = vadd.f32 %v711, %v1062
    %1064 = vmatmul.f32.gmra.mxu0 %v853
    %v1065 = vpop.f32.mrf.mxu0
    %v1066 = vadd.f32 %v711, %v1065
    %1067 = vmatmul.f32.gmra.mxu0 %v856
    %v1068 = vpop.f32.mrf.mxu0
    %v1069 = vadd.f32 %v711, %v1068
    %1070 = vmatmul.f32.gmra.mxu0 %v859
    %v1071 = vpop.f32.mrf.mxu0
    %v1072 = vadd.f32 %v711, %v1071
    %1073 = vmatmul.f32.gmra.mxu0 %v862
    %v1074 = vpop.f32.mrf.mxu0
    %v1075 = vadd.f32 %v711, %v1074
    %1076 = vmatmul.f32.gmra.mxu0 %v865
    %v1077 = vpop.f32.mrf.mxu0
    %v1078 = vadd.f32 %v711, %v1077
    %1079 = vmatmul.f32.gmra.mxu0 %v868
    %v1080 = vpop.f32.mrf.mxu0
    %v1081 = vadd.f32 %v711, %v1080
    %1082 = vmatmul.f32.gmra.mxu0 %v871
    %v1083 = vpop.f32.mrf.mxu0
    %v1084 = vadd.f32 %v711, %v1083
    %1085 = vmatmul.f32.gmra.mxu0 %v874
    %v1086 = vpop.f32.mrf.mxu0
    %v1087 = vadd.f32 %v711, %v1086
    %1088 = vmatmul.f32.gmra.mxu0 %v877
    %v1089 = vpop.f32.mrf.mxu0
    %v1090 = vadd.f32 %v711, %v1089
    %1091 = vmatmul.f32.gmra.mxu0 %v880
    %v1092 = vpop.f32.mrf.mxu0
    %v1093 = vadd.f32 %v711, %v1092
    %1094 = vmatmul.f32.gmra.mxu0 %v883
    %v1095 = vpop.f32.mrf.mxu0
    %v1096 = vadd.f32 %v711, %v1095
    %1097 = vmatmul.f32.gmra.mxu0 %v886
    %v1098 = vpop.f32.mrf.mxu0
    %v1099 = vadd.f32 %v711, %v1098
    %1100 = vmatmul.f32.gmra.mxu0 %v889
    %v1101 = vpop.f32.mrf.mxu0
    %v1102 = vadd.f32 %v711, %v1101
    %1103 = vmatmul.f32.gmra.mxu0 %v892
    %v1104 = vpop.f32.mrf.mxu0
    %v1105 = vadd.f32 %v711, %v1104
    %1106 = vmatmul.f32.gmra.mxu0 %v895
    %v1107 = vpop.f32.mrf.mxu0
    %v1108 = vadd.f32 %v711, %v1107
    %1109 = vmatmul.f32.gmra.mxu0 %v898
    %v1110 = vpop.f32.mrf.mxu0
    %v1111 = vadd.f32 %v711, %v1110
    %1112 = vmatmul.f32.gmra.mxu0 %v901
    %v1113 = vpop.f32.mrf.mxu0
    %v1114 = vadd.f32 %v711, %v1113
    %1115 = vmatmul.f32.gmra.mxu0 %v904
    %v1116 = vpop.f32.mrf.mxu0
    %v1117 = vadd.f32 %v711, %v1116
    %1118 = vdwg.mxu0
    %v1119 = vmax.f32 %v928, 0.0
    %v1120 = vmax.f32 %v931, 0.0
    %v1121 = vmax.f32 %v934, 0.0
    %v1122 = vmax.f32 %v937, 0.0
    %v1123 = vmax.f32 %v940, 0.0
    %v1124 = vmax.f32 %v943, 0.0
    %v1125 = vmax.f32 %v946, 0.0
    %v1126 = vmax.f32 %v949, 0.0
    %v1127 = vmax.f32 %v952, 0.0
    %v1128 = vmax.f32 %v955, 0.0
    %v1129 = vmax.f32 %v958, 0.0
    %v1130 = vmax.f32 %v961, 0.0
    %v1131 = vmax.f32 %v964, 0.0
    %v1132 = vmax.f32 %v967, 0.0
    %v1133 = vmax.f32 %v970, 0.0
    %v1134 = vmax.f32 %v973, 0.0
    %v1135 = vmax.f32 %v976, 0.0
    %v1136 = vmax.f32 %v979, 0.0
    %v1137 = vmax.f32 %v982, 0.0
    %v1138 = vmax.f32 %v985, 0.0
    %v1139 = vmax.f32 %v988, 0.0
    %v1140 = vmax.f32 %v991, 0.0
    %v1141 = vmax.f32 %v994, 0.0
    %v1142 = vmax.f32 %v997, 0.0
    %v1143 = vmax.f32 %v1000, 0.0
    %v1144 = vmax.f32 %v1003, 0.0
    %v1145 = vmax.f32 %v1006, 0.0
    %v1146 = vmax.f32 %v1009, 0.0
    %v1147 = vmax.f32 %v1012, 0.0
    %v1148 = vmax.f32 %v1015, 0.0
    %v1149 = vmax.f32 %v1018, 0.0
    %v1150 = vmax.f32 %v1021, 0.0
    %v1151 = vmax.f32 %v1024, 0.0
    %v1152 = vmax.f32 %v1027, 0.0
    %v1153 = vmax.f32 %v1030, 0.0
    %v1154 = vmax.f32 %v1033, 0.0
    %v1155 = vmax.f32 %v1036, 0.0
    %v1156 = vmax.f32 %v1039, 0.0
    %v1157 = vmax.f32 %v1042, 0.0
    %v1158 = vmax.f32 %v1045, 0.0
    %v1159 = vmax.f32 %v1048, 0.0
    %v1160 = vmax.f32 %v1051, 0.0
    %v1161 = vmax.f32 %v1054, 0.0
    %v1162 = vmax.f32 %v1057, 0.0
    %v1163 = vmax.f32 %v1060, 0.0
    %v1164 = vmax.f32 %v1063, 0.0
    %v1165 = vmax.f32 %v1066, 0.0
    %v1166 = vmax.f32 %v1069, 0.0
    %v1167 = vmax.f32 %v1072, 0.0
    %v1168 = vmax.f32 %v1075, 0.0
    %v1169 = vmax.f32 %v1078, 0.0
    %v1170 = vmax.f32 %v1081, 0.0
    %v1171 = vmax.f32 %v1084, 0.0
    %v1172 = vmax.f32 %v1087, 0.0
    %v1173 = vmax.f32 %v1090, 0.0
    %v1174 = vmax.f32 %v1093, 0.0
    %v1175 = vmax.f32 %v1096, 0.0
    %v1176 = vmax.f32 %v1099, 0.0
    %v1177 = vmax.f32 %v1102, 0.0
    %v1178 = vmax.f32 %v1105, 0.0
    %v1179 = vmax.f32 %v1108, 0.0
    %v1180 = vmax.f32 %v1111, 0.0
    %v1181 = vmax.f32 %v1114, 0.0
    %v1182 = vmax.f32 %v1117, 0.0
    %vm1183 = vcmask 785408
    %1184 = vst.msk [vmem:[#allocation2] sm:$0xff] %vm1183, %v1119
    %1185 = vst.msk [vmem:[#allocation2 + $0x8] sm:$0xff] %vm1183, %v1120
    %1186 = vst.msk [vmem:[#allocation2 + $0x10] sm:$0xff] %vm1183, %v1121
    %1187 = vst.msk [vmem:[#allocation2 + $0x18] sm:$0xff] %vm1183, %v1122
    %1188 = vst.msk [vmem:[#allocation2 + $0x20] sm:$0xff] %vm1183, %v1123
    %1189 = vst.msk [vmem:[#allocation2 + $0x28] sm:$0xff] %vm1183, %v1124
    %1190 = vst.msk [vmem:[#allocation2 + $0x30] sm:$0xff] %vm1183, %v1125
    %1191 = vst.msk [vmem:[#allocation2 + $0x38] sm:$0xff] %vm1183, %v1126
    %1192 = vst.msk [vmem:[#allocation2 + $0x40] sm:$0xff] %vm1183, %v1127
    %1193 = vst.msk [vmem:[#allocation2 + $0x48] sm:$0xff] %vm1183, %v1128
    %1194 = vst.msk [vmem:[#allocation2 + $0x50] sm:$0xff] %vm1183, %v1129
    %1195 = vst.msk [vmem:[#allocation2 + $0x58] sm:$0xff] %vm1183, %v1130
    %1196 = vst.msk [vmem:[#allocation2 + $0x60] sm:$0xff] %vm1183, %v1131
    %1197 = vst.msk [vmem:[#allocation2 + $0x68] sm:$0xff] %vm1183, %v1132
    %1198 = vst.msk [vmem:[#allocation2 + $0x70] sm:$0xff] %vm1183, %v1133
    %1199 = vst.msk [vmem:[#allocation2 + $0x78] sm:$0xff] %vm1183, %v1134
    %1200 = vst.msk [vmem:[#allocation2 + $0x80] sm:$0xff] %vm1183, %v1135
    %1201 = vst.msk [vmem:[#allocation2 + $0x88] sm:$0xff] %vm1183, %v1136
    %1202 = vst.msk [vmem:[#allocation2 + $0x90] sm:$0xff] %vm1183, %v1137
    %1203 = vst.msk [vmem:[#allocation2 + $0x98] sm:$0xff] %vm1183, %v1138
    %1204 = vst.msk [vmem:[#allocation2 + $0xa0] sm:$0xff] %vm1183, %v1139
    %1205 = vst.msk [vmem:[#allocation2 + $0xa8] sm:$0xff] %vm1183, %v1140
    %1206 = vst.msk [vmem:[#allocation2 + $0xb0] sm:$0xff] %vm1183, %v1141
    %1207 = vst.msk [vmem:[#allocation2 + $0xb8] sm:$0xff] %vm1183, %v1142
    %1208 = vst.msk [vmem:[#allocation2 + $0xc0] sm:$0xff] %vm1183, %v1143
    %1209 = vst.msk [vmem:[#allocation2 + $0xc8] sm:$0xff] %vm1183, %v1144
    %1210 = vst.msk [vmem:[#allocation2 + $0xd0] sm:$0xff] %vm1183, %v1145
    %1211 = vst.msk [vmem:[#allocation2 + $0xd8] sm:$0xff] %vm1183, %v1146
    %1212 = vst.msk [vmem:[#allocation2 + $0xe0] sm:$0xff] %vm1183, %v1147
    %1213 = vst.msk [vmem:[#allocation2 + $0xe8] sm:$0xff] %vm1183, %v1148
    %1214 = vst.msk [vmem:[#allocation2 + $0xf0] sm:$0xff] %vm1183, %v1149
    %1215 = vst.msk [vmem:[#allocation2 + $0xf8] sm:$0xff] %vm1183, %v1150
    %1216 = vst.msk [vmem:[#allocation2 + $0x100] sm:$0xff] %vm1183, %v1151
    %1217 = vst.msk [vmem:[#allocation2 + $0x108] sm:$0xff] %vm1183, %v1152
    %1218 = vst.msk [vmem:[#allocation2 + $0x110] sm:$0xff] %vm1183, %v1153
    %1219 = vst.msk [vmem:[#allocation2 + $0x118] sm:$0xff] %vm1183, %v1154
    %1220 = vst.msk [vmem:[#allocation2 + $0x120] sm:$0xff] %vm1183, %v1155
    %1221 = vst.msk [vmem:[#allocation2 + $0x128] sm:$0xff] %vm1183, %v1156
    %1222 = vst.msk [vmem:[#allocation2 + $0x130] sm:$0xff] %vm1183, %v1157
    %1223 = vst.msk [vmem:[#allocation2 + $0x138] sm:$0xff] %vm1183, %v1158
    %1224 = vst.msk [vmem:[#allocation2 + $0x140] sm:$0xff] %vm1183, %v1159
    %1225 = vst.msk [vmem:[#allocation2 + $0x148] sm:$0xff] %vm1183, %v1160
    %1226 = vst.msk [vmem:[#allocation2 + $0x150] sm:$0xff] %vm1183, %v1161
    %1227 = vst.msk [vmem:[#allocation2 + $0x158] sm:$0xff] %vm1183, %v1162
    %1228 = vst.msk [vmem:[#allocation2 + $0x160] sm:$0xff] %vm1183, %v1163
    %1229 = vst.msk [vmem:[#allocation2 + $0x168] sm:$0xff] %vm1183, %v1164
    %1230 = vst.msk [vmem:[#allocation2 + $0x170] sm:$0xff] %vm1183, %v1165
    %1231 = vst.msk [vmem:[#allocation2 + $0x178] sm:$0xff] %vm1183, %v1166
    %1232 = vst.msk [vmem:[#allocation2 + $0x180] sm:$0xff] %vm1183, %v1167
    %1233 = vst.msk [vmem:[#allocation2 + $0x188] sm:$0xff] %vm1183, %v1168
    %1234 = vst.msk [vmem:[#allocation2 + $0x190] sm:$0xff] %vm1183, %v1169
    %1235 = vst.msk [vmem:[#allocation2 + $0x198] sm:$0xff] %vm1183, %v1170
    %1236 = vst.msk [vmem:[#allocation2 + $0x1a0] sm:$0xff] %vm1183, %v1171
    %1237 = vst.msk [vmem:[#allocation2 + $0x1a8] sm:$0xff] %vm1183, %v1172
    %1238 = vst.msk [vmem:[#allocation2 + $0x1b0] sm:$0xff] %vm1183, %v1173
    %1239 = vst.msk [vmem:[#allocation2 + $0x1b8] sm:$0xff] %vm1183, %v1174
    %1240 = vst.msk [vmem:[#allocation2 + $0x1c0] sm:$0xff] %vm1183, %v1175
    %1241 = vst.msk [vmem:[#allocation2 + $0x1c8] sm:$0xff] %vm1183, %v1176
    %1242 = vst.msk [vmem:[#allocation2 + $0x1d0] sm:$0xff] %vm1183, %v1177
    %1243 = vst.msk [vmem:[#allocation2 + $0x1d8] sm:$0xff] %vm1183, %v1178
    %1244 = vst.msk [vmem:[#allocation2 + $0x1e0] sm:$0xff] %vm1183, %v1179
    %1245 = vst.msk [vmem:[#allocation2 + $0x1e8] sm:$0xff] %vm1183, %v1180
    %1246 = vst.msk [vmem:[#allocation2 + $0x1f0] sm:$0xff] %vm1183, %v1181
    %1247 = vst.msk [vmem:[#allocation2 + $0x1f8] sm:$0xff] %vm1183, %v1182
    %v1248 = vld [vmem:[#allocation2] sm:$0xff]
    %v1249 = vld [vmem:[#allocation2 + $0x8] sm:$0xff]
    %v1250 = vld [vmem:[#allocation2 + $0x10] sm:$0xff]
    %v1251 = vld [vmem:[#allocation2 + $0x18] sm:$0xff]
    %v1252 = vld [vmem:[#allocation2 + $0x20] sm:$0xff]
    %v1253 = vld [vmem:[#allocation2 + $0x28] sm:$0xff]
    %v1254 = vld [vmem:[#allocation2 + $0x30] sm:$0xff]
    %v1255 = vld [vmem:[#allocation2 + $0x38] sm:$0xff]
    %v1256 = vld [vmem:[#allocation2 + $0x40] sm:$0xff]
    %v1257 = vld [vmem:[#allocation2 + $0x48] sm:$0xff]
    %v1258 = vld [vmem:[#allocation2 + $0x50] sm:$0xff]
    %v1259 = vld [vmem:[#allocation2 + $0x58] sm:$0xff]
    %v1260 = vld [vmem:[#allocation2 + $0x60] sm:$0xff]
    %v1261 = vld [vmem:[#allocation2 + $0x68] sm:$0xff]
    %v1262 = vld [vmem:[#allocation2 + $0x70] sm:$0xff]
    %v1263 = vld [vmem:[#allocation2 + $0x78] sm:$0xff]
    %v1264 = vld [vmem:[#allocation2 + $0x80] sm:$0xff]
    %v1265 = vld [vmem:[#allocation2 + $0x88] sm:$0xff]
    %v1266 = vld [vmem:[#allocation2 + $0x90] sm:$0xff]
    %v1267 = vld [vmem:[#allocation2 + $0x98] sm:$0xff]
    %v1268 = vld [vmem:[#allocation2 + $0xa0] sm:$0xff]
    %v1269 = vld [vmem:[#allocation2 + $0xa8] sm:$0xff]
    %v1270 = vld [vmem:[#allocation2 + $0xb0] sm:$0xff]
    %v1271 = vld [vmem:[#allocation2 + $0xb8] sm:$0xff]
    %v1272 = vld [vmem:[#allocation2 + $0xc0] sm:$0xff]
    %v1273 = vld [vmem:[#allocation2 + $0xc8] sm:$0xff]
    %v1274 = vld [vmem:[#allocation2 + $0xd0] sm:$0xff]
    %v1275 = vld [vmem:[#allocation2 + $0xd8] sm:$0xff]
    %v1276 = vld [vmem:[#allocation2 + $0xe0] sm:$0xff]
    %v1277 = vld [vmem:[#allocation2 + $0xe8] sm:$0xff]
    %v1278 = vld [vmem:[#allocation2 + $0xf0] sm:$0xff]
    %v1279 = vld [vmem:[#allocation2 + $0xf8] sm:$0xff]
    %v1280 = vld [vmem:[#allocation2 + $0x100] sm:$0xff]
    %v1281 = vld [vmem:[#allocation2 + $0x108] sm:$0xff]
    %v1282 = vld [vmem:[#allocation2 + $0x110] sm:$0xff]
    %v1283 = vld [vmem:[#allocation2 + $0x118] sm:$0xff]
    %v1284 = vld [vmem:[#allocation2 + $0x120] sm:$0xff]
    %v1285 = vld [vmem:[#allocation2 + $0x128] sm:$0xff]
    %v1286 = vld [vmem:[#allocation2 + $0x130] sm:$0xff]
    %v1287 = vld [vmem:[#allocation2 + $0x138] sm:$0xff]
    %v1288 = vld [vmem:[#allocation2 + $0x140] sm:$0xff]
    %v1289 = vld [vmem:[#allocation2 + $0x148] sm:$0xff]
    %v1290 = vld [vmem:[#allocation2 + $0x150] sm:$0xff]
    %v1291 = vld [vmem:[#allocation2 + $0x158] sm:$0xff]
    %v1292 = vld [vmem:[#allocation2 + $0x160] sm:$0xff]
    %v1293 = vld [vmem:[#allocation2 + $0x168] sm:$0xff]
    %v1294 = vld [vmem:[#allocation2 + $0x170] sm:$0xff]
    %v1295 = vld [vmem:[#allocation2 + $0x178] sm:$0xff]
    %v1296 = vld [vmem:[#allocation2 + $0x180] sm:$0xff]
    %v1297 = vld [vmem:[#allocation2 + $0x188] sm:$0xff]
    %v1298 = vld [vmem:[#allocation2 + $0x190] sm:$0xff]
    %v1299 = vld [vmem:[#allocation2 + $0x198] sm:$0xff]
    %v1300 = vld [vmem:[#allocation2 + $0x1a0] sm:$0xff]
    %v1301 = vld [vmem:[#allocation2 + $0x1a8] sm:$0xff]
    %v1302 = vld [vmem:[#allocation2 + $0x1b0] sm:$0xff]
    %v1303 = vld [vmem:[#allocation2 + $0x1b8] sm:$0xff]
    %v1304 = vld [vmem:[#allocation2 + $0x1c0] sm:$0xff]
    %v1305 = vld [vmem:[#allocation2 + $0x1c8] sm:$0xff]
    %v1306 = vld [vmem:[#allocation2 + $0x1d0] sm:$0xff]
    %v1307 = vld [vmem:[#allocation2 + $0x1d8] sm:$0xff]
    %v1308 = vld [vmem:[%s3] sm:$0xff]
    %v1309 = vld [vmem:[%s3 + $0x8] sm:$0xff]
    %v1310 = vld [vmem:[%s3 + $0x10] sm:$0xff]
    %v1311 = vld [vmem:[%s3 + $0x18] sm:$0xff]
    %v1312 = vld [vmem:[%s3 + $0x20] sm:$0xff]
    %v1313 = vld [vmem:[%s3 + $0x28] sm:$0xff]
    %v1314 = vld [vmem:[%s3 + $0x30] sm:$0xff]
    %v1315 = vld [vmem:[%s3 + $0x38] sm:$0xff]
    %v1316 = vld [vmem:[%s3 + $0x40] sm:$0xff]
    %v1317 = vld [vmem:[%s3 + $0x48] sm:$0xff]
    %v1318 = vld [vmem:[%s3 + $0x50] sm:$0xff]
    %v1319 = vld [vmem:[%s3 + $0x58] sm:$0xff]
    %v1320 = vld [vmem:[#allocation2 + $0x1e0] sm:$0xff]
    %v1321 = vld [vmem:[#allocation2 + $0x1e8] sm:$0xff]
    %v1322 = vld [vmem:[%s3 + $0x60] sm:$0xff]
    %v1323 = vld [vmem:[%s3 + $0x68] sm:$0xff]
    %v1324 = vld [vmem:[%s3 + $0x70] sm:$0xff]
    %v1325 = vld [vmem:[%s3 + $0x78] sm:$0xff]
    %v1326 = vld [vmem:[%s3 + $0x80] sm:$0xff]
    %v1327 = vld [vmem:[%s3 + $0x88] sm:$0xff]
    %v1328 = vld [vmem:[%s3 + $0x90] sm:$0xff]
    %v1329 = vld [vmem:[%s3 + $0x98] sm:$0xff]
    %v1330 = vld [vmem:[%s3 + $0xa0] sm:$0xff]
    %v1331 = vld [vmem:[%s3 + $0xa8] sm:$0xff]
    %v1332 = vld [vmem:[%s3 + $0xb0] sm:$0xff]
    %v1333 = vld [vmem:[%s3 + $0xb8] sm:$0xff]
    %v1335 = vsel %vm1183, %v1250, 0
    %v1338 = vsel %vm1183, %v1251, 0
    %v1341 = vsel %vm1183, %v1252, 0
    %v1344 = vsel %vm1183, %v1253, 0
    %v1347 = vsel %vm1183, %v1254, 0
    %v1350 = vsel %vm1183, %v1255, 0
    %v1353 = vsel %vm1183, %v1256, 0
    %v1356 = vsel %vm1183, %v1257, 0
    %v1359 = vsel %vm1183, %v1258, 0
    %v1362 = vsel %vm1183, %v1259, 0
    %v1365 = vsel %vm1183, %v1260, 0
    %v1368 = vsel %vm1183, %v1261, 0
    %v1371 = vsel %vm1183, %v1262, 0
    %v1374 = vsel %vm1183, %v1263, 0
    %v1377 = vsel %vm1183, %v1264, 0
    %v1380 = vsel %vm1183, %v1265, 0
    %v1383 = vsel %vm1183, %v1266, 0
    %v1386 = vsel %vm1183, %v1267, 0
    %v1389 = vsel %vm1183, %v1268, 0
    %v1392 = vsel %vm1183, %v1269, 0
    %v1395 = vsel %vm1183, %v1270, 0
    %v1398 = vsel %vm1183, %v1271, 0
    %v1401 = vsel %vm1183, %v1272, 0
    %v1404 = vsel %vm1183, %v1273, 0
    %v1407 = vsel %vm1183, %v1274, 0
    %v1410 = vsel %vm1183, %v1275, 0
    %v1413 = vsel %vm1183, %v1276, 0
    %v1416 = vsel %vm1183, %v1277, 0
    %v1419 = vsel %vm1183, %v1278, 0
    %v1422 = vsel %vm1183, %v1279, 0
    %v1425 = vsel %vm1183, %v1280, 0
    %v1428 = vsel %vm1183, %v1281, 0
    %v1431 = vsel %vm1183, %v1282, 0
    %v1434 = vsel %vm1183, %v1283, 0
    %v1437 = vsel %vm1183, %v1284, 0
    %v1440 = vsel %vm1183, %v1285, 0
    %v1443 = vsel %vm1183, %v1286, 0
    %v1446 = vsel %vm1183, %v1287, 0
    %v1449 = vsel %vm1183, %v1288, 0
    %v1452 = vsel %vm1183, %v1289, 0
    %v1455 = vsel %vm1183, %v1290, 0
    %v1458 = vsel %vm1183, %v1291, 0
    %v1461 = vsel %vm1183, %v1292, 0
    %v1464 = vsel %vm1183, %v1293, 0
    %v1467 = vsel %vm1183, %v1294, 0
    %v1470 = vsel %vm1183, %v1295, 0
    %v1473 = vsel %vm1183, %v1296, 0
    %v1476 = vsel %vm1183, %v1297, 0
    %v1479 = vsel %vm1183, %v1298, 0
    %v1482 = vsel %vm1183, %v1299, 0
    %v1485 = vsel %vm1183, %v1300, 0
    %v1488 = vsel %vm1183, %v1301, 0
    %v1491 = vsel %vm1183, %v1302, 0
    %v1494 = vsel %vm1183, %v1303, 0
    %v1497 = vsel %vm1183, %v1304, 0
    %v1500 = vsel %vm1183, %v1305, 0
    %v1503 = vsel %vm1183, %v1306, 0
    %v1506 = vsel %vm1183, %v1307, 0
    %v1509 = vsel %vm1183, %v1320, 0
    %v1512 = vsel %vm1183, %v1321, 0
    %1514 = vmatpush.msra.mxu0 0.0
    %1515 = vmatpush.msra.mxu0 0.0
    %1516 = vmatpush.msra.mxu0 0.0
    %1517 = vmatpush.msra.mxu0 0.0
    %1518 = vmatpush.msra.mxu0 %v1333
    %1519 = vmatpush.msra.mxu0 %v1332
    %1520 = vmatpush.msra.mxu0 %v1331
    %1521 = vmatpush.msra.mxu0 %v1330
    %1522 = vmatpush.msra.mxu0 %v1329
    %1523 = vmatpush.msra.mxu0 %v1328
    %1524 = vmatpush.msra.mxu0 %v1327
    %1525 = vmatpush.msra.mxu0 %v1326
    %1526 = vmatpush.msra.mxu0 %v1325
    %1527 = vmatpush.msra.mxu0 %v1324
    %1528 = vmatpush.msra.mxu0 %v1323
    %1529 = vmatpush.msra.mxu0 %v1322
    %1530 = vmatmul.f32.gmra.mxu0 %v1335
    %v1531 = vpop.f32.mrf.mxu0
    %v1532 = vadd.f32 0.0, %v1531
    %1533 = vmatmul.f32.gmra.mxu0 %v1338
    %v1534 = vpop.f32.mrf.mxu0
    %v1535 = vadd.f32 0.0, %v1534
    %1536 = vmatmul.f32.gmra.mxu0 %v1341
    %v1537 = vpop.f32.mrf.mxu0
    %v1538 = vadd.f32 0.0, %v1537
    %1539 = vmatmul.f32.gmra.mxu0 %v1344
    %v1540 = vpop.f32.mrf.mxu0
    %v1541 = vadd.f32 0.0, %v1540
    %1542 = vmatmul.f32.gmra.mxu0 %v1347
    %v1543 = vpop.f32.mrf.mxu0
    %v1544 = vadd.f32 0.0, %v1543
    %1545 = vmatmul.f32.gmra.mxu0 %v1350
    %v1546 = vpop.f32.mrf.mxu0
    %v1547 = vadd.f32 0.0, %v1546
    %1548 = vmatmul.f32.gmra.mxu0 %v1353
    %v1549 = vpop.f32.mrf.mxu0
    %v1550 = vadd.f32 0.0, %v1549
    %1551 = vmatmul.f32.gmra.mxu0 %v1356
    %v1552 = vpop.f32.mrf.mxu0
    %v1553 = vadd.f32 0.0, %v1552
    %1554 = vmatmul.f32.gmra.mxu0 %v1359
    %v1555 = vpop.f32.mrf.mxu0
    %v1556 = vadd.f32 0.0, %v1555
    %1557 = vmatmul.f32.gmra.mxu0 %v1362
    %v1558 = vpop.f32.mrf.mxu0
    %v1559 = vadd.f32 0.0, %v1558
    %1560 = vmatmul.f32.gmra.mxu0 %v1365
    %v1561 = vpop.f32.mrf.mxu0
    %v1562 = vadd.f32 0.0, %v1561
    %1563 = vmatmul.f32.gmra.mxu0 %v1368
    %v1564 = vpop.f32.mrf.mxu0
    %v1565 = vadd.f32 0.0, %v1564
    %1566 = vmatmul.f32.gmra.mxu0 %v1371
    %v1567 = vpop.f32.mrf.mxu0
    %v1568 = vadd.f32 0.0, %v1567
    %1569 = vmatmul.f32.gmra.mxu0 %v1374
    %v1570 = vpop.f32.mrf.mxu0
    %v1571 = vadd.f32 0.0, %v1570
    %1572 = vmatmul.f32.gmra.mxu0 %v1377
    %v1573 = vpop.f32.mrf.mxu0
    %v1574 = vadd.f32 0.0, %v1573
    %1575 = vmatmul.f32.gmra.mxu0 %v1380
    %v1576 = vpop.f32.mrf.mxu0
    %v1577 = vadd.f32 0.0, %v1576
    %1578 = vmatmul.f32.gmra.mxu0 %v1383
    %v1579 = vpop.f32.mrf.mxu0
    %v1580 = vadd.f32 0.0, %v1579
    %1581 = vmatmul.f32.gmra.mxu0 %v1386
    %v1582 = vpop.f32.mrf.mxu0
    %v1583 = vadd.f32 0.0, %v1582
    %1584 = vmatmul.f32.gmra.mxu0 %v1389
    %v1585 = vpop.f32.mrf.mxu0
    %v1586 = vadd.f32 0.0, %v1585
    %1587 = vmatmul.f32.gmra.mxu0 %v1392
    %v1588 = vpop.f32.mrf.mxu0
    %v1589 = vadd.f32 0.0, %v1588
    %1590 = vmatmul.f32.gmra.mxu0 %v1395
    %v1591 = vpop.f32.mrf.mxu0
    %v1592 = vadd.f32 0.0, %v1591
    %1593 = vmatmul.f32.gmra.mxu0 %v1398
    %v1594 = vpop.f32.mrf.mxu0
    %v1595 = vadd.f32 0.0, %v1594
    %1596 = vmatmul.f32.gmra.mxu0 %v1401
    %v1597 = vpop.f32.mrf.mxu0
    %v1598 = vadd.f32 0.0, %v1597
    %1599 = vmatmul.f32.gmra.mxu0 %v1404
    %v1600 = vpop.f32.mrf.mxu0
    %v1601 = vadd.f32 0.0, %v1600
    %1602 = vmatmul.f32.gmra.mxu0 %v1407
    %v1603 = vpop.f32.mrf.mxu0
    %v1604 = vadd.f32 0.0, %v1603
    %1605 = vmatmul.f32.gmra.mxu0 %v1410
    %v1606 = vpop.f32.mrf.mxu0
    %v1607 = vadd.f32 0.0, %v1606
    %1608 = vmatmul.f32.gmra.mxu0 %v1413
    %v1609 = vpop.f32.mrf.mxu0
    %v1610 = vadd.f32 0.0, %v1609
    %1611 = vmatmul.f32.gmra.mxu0 %v1416
    %v1612 = vpop.f32.mrf.mxu0
    %v1613 = vadd.f32 0.0, %v1612
    %1614 = vmatmul.f32.gmra.mxu0 %v1419
    %v1615 = vpop.f32.mrf.mxu0
    %v1616 = vadd.f32 0.0, %v1615
    %1617 = vmatmul.f32.gmra.mxu0 %v1422
    %v1618 = vpop.f32.mrf.mxu0
    %v1619 = vadd.f32 0.0, %v1618
    %1620 = vmatmul.f32.gmra.mxu0 %v1425
    %v1621 = vpop.f32.mrf.mxu0
    %v1622 = vadd.f32 0.0, %v1621
    %1623 = vmatmul.f32.gmra.mxu0 %v1428
    %v1624 = vpop.f32.mrf.mxu0
    %v1625 = vadd.f32 0.0, %v1624
    %1626 = vmatmul.f32.gmra.mxu0 %v1431
    %v1627 = vpop.f32.mrf.mxu0
    %v1628 = vadd.f32 0.0, %v1627
    %1629 = vmatmul.f32.gmra.mxu0 %v1434
    %v1630 = vpop.f32.mrf.mxu0
    %v1631 = vadd.f32 0.0, %v1630
    %1632 = vmatmul.f32.gmra.mxu0 %v1437
    %v1633 = vpop.f32.mrf.mxu0
    %v1634 = vadd.f32 0.0, %v1633
    %1635 = vmatmul.f32.gmra.mxu0 %v1440
    %v1636 = vpop.f32.mrf.mxu0
    %v1637 = vadd.f32 0.0, %v1636
    %1638 = vmatmul.f32.gmra.mxu0 %v1443
    %v1639 = vpop.f32.mrf.mxu0
    %v1640 = vadd.f32 0.0, %v1639
    %1641 = vmatmul.f32.gmra.mxu0 %v1446
    %v1642 = vpop.f32.mrf.mxu0
    %v1643 = vadd.f32 0.0, %v1642
    %1644 = vmatmul.f32.gmra.mxu0 %v1449
    %v1645 = vpop.f32.mrf.mxu0
    %v1646 = vadd.f32 0.0, %v1645
    %1647 = vmatmul.f32.gmra.mxu0 %v1452
    %v1648 = vpop.f32.mrf.mxu0
    %v1649 = vadd.f32 0.0, %v1648
    %1650 = vmatmul.f32.gmra.mxu0 %v1455
    %v1651 = vpop.f32.mrf.mxu0
    %v1652 = vadd.f32 0.0, %v1651
    %1653 = vmatmul.f32.gmra.mxu0 %v1458
    %v1654 = vpop.f32.mrf.mxu0
    %v1655 = vadd.f32 0.0, %v1654
    %1656 = vmatmul.f32.gmra.mxu0 %v1461
    %v1657 = vpop.f32.mrf.mxu0
    %v1658 = vadd.f32 0.0, %v1657
    %1659 = vmatmul.f32.gmra.mxu0 %v1464
    %v1660 = vpop.f32.mrf.mxu0
    %v1661 = vadd.f32 0.0, %v1660
    %1662 = vmatmul.f32.gmra.mxu0 %v1467
    %v1663 = vpop.f32.mrf.mxu0
    %v1664 = vadd.f32 0.0, %v1663
    %1665 = vmatmul.f32.gmra.mxu0 %v1470
    %v1666 = vpop.f32.mrf.mxu0
    %v1667 = vadd.f32 0.0, %v1666
    %1668 = vmatmul.f32.gmra.mxu0 %v1473
    %v1669 = vpop.f32.mrf.mxu0
    %v1670 = vadd.f32 0.0, %v1669
    %1671 = vmatmul.f32.gmra.mxu0 %v1476
    %v1672 = vpop.f32.mrf.mxu0
    %v1673 = vadd.f32 0.0, %v1672
    %1674 = vmatmul.f32.gmra.mxu0 %v1479
    %v1675 = vpop.f32.mrf.mxu0
    %v1676 = vadd.f32 0.0, %v1675
    %1677 = vmatmul.f32.gmra.mxu0 %v1482
    %v1678 = vpop.f32.mrf.mxu0
    %v1679 = vadd.f32 0.0, %v1678
    %1680 = vmatmul.f32.gmra.mxu0 %v1485
    %v1681 = vpop.f32.mrf.mxu0
    %v1682 = vadd.f32 0.0, %v1681
    %1683 = vmatmul.f32.gmra.mxu0 %v1488
    %v1684 = vpop.f32.mrf.mxu0
    %v1685 = vadd.f32 0.0, %v1684
    %1686 = vmatmul.f32.gmra.mxu0 %v1491
    %v1687 = vpop.f32.mrf.mxu0
    %v1688 = vadd.f32 0.0, %v1687
    %1689 = vmatmul.f32.gmra.mxu0 %v1494
    %v1690 = vpop.f32.mrf.mxu0
    %v1691 = vadd.f32 0.0, %v1690
    %1692 = vmatmul.f32.gmra.mxu0 %v1497
    %v1693 = vpop.f32.mrf.mxu0
    %v1694 = vadd.f32 0.0, %v1693
    %1695 = vmatmul.f32.gmra.mxu0 %v1500
    %v1696 = vpop.f32.mrf.mxu0
    %v1697 = vadd.f32 0.0, %v1696
    %1698 = vmatmul.f32.gmra.mxu0 %v1503
    %v1699 = vpop.f32.mrf.mxu0
    %v1700 = vadd.f32 0.0, %v1699
    %1701 = vmatmul.f32.gmra.mxu0 %v1506
    %v1702 = vpop.f32.mrf.mxu0
    %v1703 = vadd.f32 0.0, %v1702
    %1704 = vmatmul.f32.gmra.mxu0 %v1509
    %v1705 = vpop.f32.mrf.mxu0
    %v1706 = vadd.f32 0.0, %v1705
    %1707 = vmatmul.f32.gmra.mxu0 %v1512
    %v1708 = vpop.f32.mrf.mxu0
    %v1709 = vadd.f32 0.0, %v1708
    %1710 = vdwg.mxu0
    %v1712 = vsel %vm1183, %v1248, 0
    %v1715 = vsel %vm1183, %v1249, 0
    %1717 = vmatpush.msra.mxu0 0.0
    %1718 = vmatpush.msra.mxu0 0.0
    %1719 = vmatpush.msra.mxu0 0.0
    %1720 = vmatpush.msra.mxu0 0.0
    %1721 = vmatpush.msra.mxu0 %v1319
    %1722 = vmatpush.msra.mxu0 %v1318
    %1723 = vmatpush.msra.mxu0 %v1317
    %1724 = vmatpush.msra.mxu0 %v1316
    %1725 = vmatpush.msra.mxu0 %v1315
    %1726 = vmatpush.msra.mxu0 %v1314
    %1727 = vmatpush.msra.mxu0 %v1313
    %1728 = vmatpush.msra.mxu0 %v1312
    %1729 = vmatpush.msra.mxu0 %v1311
    %1730 = vmatpush.msra.mxu0 %v1310
    %1731 = vmatpush.msra.mxu0 %v1309
    %1732 = vmatpush.msra.mxu0 %v1308
    %1733 = vmatmul.f32.gmra.mxu0 %v1712
    %v1734 = vpop.f32.mrf.mxu0
    %v1735 = vadd.f32 %v1532, %v1734
    %1736 = vmatmul.f32.gmra.mxu0 %v1715
    %v1737 = vpop.f32.mrf.mxu0
    %v1738 = vadd.f32 %v1535, %v1737
    %1739 = vmatmul.f32.gmra.mxu0 %v1335
    %v1740 = vpop.f32.mrf.mxu0
    %v1741 = vadd.f32 %v1538, %v1740
    %1742 = vmatmul.f32.gmra.mxu0 %v1338
    %v1743 = vpop.f32.mrf.mxu0
    %v1744 = vadd.f32 %v1541, %v1743
    %1745 = vmatmul.f32.gmra.mxu0 %v1341
    %v1746 = vpop.f32.mrf.mxu0
    %v1747 = vadd.f32 %v1544, %v1746
    %1748 = vmatmul.f32.gmra.mxu0 %v1344
    %v1749 = vpop.f32.mrf.mxu0
    %v1750 = vadd.f32 %v1547, %v1749
    %1751 = vmatmul.f32.gmra.mxu0 %v1347
    %v1752 = vpop.f32.mrf.mxu0
    %v1753 = vadd.f32 %v1550, %v1752
    %1754 = vmatmul.f32.gmra.mxu0 %v1350
    %v1755 = vpop.f32.mrf.mxu0
    %v1756 = vadd.f32 %v1553, %v1755
    %1757 = vmatmul.f32.gmra.mxu0 %v1353
    %v1758 = vpop.f32.mrf.mxu0
    %v1759 = vadd.f32 %v1556, %v1758
    %1760 = vmatmul.f32.gmra.mxu0 %v1356
    %v1761 = vpop.f32.mrf.mxu0
    %v1762 = vadd.f32 %v1559, %v1761
    %1763 = vmatmul.f32.gmra.mxu0 %v1359
    %v1764 = vpop.f32.mrf.mxu0
    %v1765 = vadd.f32 %v1562, %v1764
    %1766 = vmatmul.f32.gmra.mxu0 %v1362
    %v1767 = vpop.f32.mrf.mxu0
    %v1768 = vadd.f32 %v1565, %v1767
    %1769 = vmatmul.f32.gmra.mxu0 %v1365
    %v1770 = vpop.f32.mrf.mxu0
    %v1771 = vadd.f32 %v1568, %v1770
    %1772 = vmatmul.f32.gmra.mxu0 %v1368
    %v1773 = vpop.f32.mrf.mxu0
    %v1774 = vadd.f32 %v1571, %v1773
    %1775 = vmatmul.f32.gmra.mxu0 %v1371
    %v1776 = vpop.f32.mrf.mxu0
    %v1777 = vadd.f32 %v1574, %v1776
    %1778 = vmatmul.f32.gmra.mxu0 %v1374
    %v1779 = vpop.f32.mrf.mxu0
    %v1780 = vadd.f32 %v1577, %v1779
    %1781 = vmatmul.f32.gmra.mxu0 %v1377
    %v1782 = vpop.f32.mrf.mxu0
    %v1783 = vadd.f32 %v1580, %v1782
    %1784 = vmatmul.f32.gmra.mxu0 %v1380
    %v1785 = vpop.f32.mrf.mxu0
    %v1786 = vadd.f32 %v1583, %v1785
    %1787 = vmatmul.f32.gmra.mxu0 %v1383
    %v1788 = vpop.f32.mrf.mxu0
    %v1789 = vadd.f32 %v1586, %v1788
    %1790 = vmatmul.f32.gmra.mxu0 %v1386
    %v1791 = vpop.f32.mrf.mxu0
    %v1792 = vadd.f32 %v1589, %v1791
    %1793 = vmatmul.f32.gmra.mxu0 %v1389
    %v1794 = vpop.f32.mrf.mxu0
    %v1795 = vadd.f32 %v1592, %v1794
    %1796 = vmatmul.f32.gmra.mxu0 %v1392
    %v1797 = vpop.f32.mrf.mxu0
    %v1798 = vadd.f32 %v1595, %v1797
    %1799 = vmatmul.f32.gmra.mxu0 %v1395
    %v1800 = vpop.f32.mrf.mxu0
    %v1801 = vadd.f32 %v1598, %v1800
    %1802 = vmatmul.f32.gmra.mxu0 %v1398
    %v1803 = vpop.f32.mrf.mxu0
    %v1804 = vadd.f32 %v1601, %v1803
    %1805 = vmatmul.f32.gmra.mxu0 %v1401
    %v1806 = vpop.f32.mrf.mxu0
    %v1807 = vadd.f32 %v1604, %v1806
    %1808 = vmatmul.f32.gmra.mxu0 %v1404
    %v1809 = vpop.f32.mrf.mxu0
    %v1810 = vadd.f32 %v1607, %v1809
    %1811 = vmatmul.f32.gmra.mxu0 %v1407
    %v1812 = vpop.f32.mrf.mxu0
    %v1813 = vadd.f32 %v1610, %v1812
    %1814 = vmatmul.f32.gmra.mxu0 %v1410
    %v1815 = vpop.f32.mrf.mxu0
    %v1816 = vadd.f32 %v1613, %v1815
    %1817 = vmatmul.f32.gmra.mxu0 %v1413
    %v1818 = vpop.f32.mrf.mxu0
    %v1819 = vadd.f32 %v1616, %v1818
    %1820 = vmatmul.f32.gmra.mxu0 %v1416
    %v1821 = vpop.f32.mrf.mxu0
    %v1822 = vadd.f32 %v1619, %v1821
    %1823 = vmatmul.f32.gmra.mxu0 %v1419
    %v1824 = vpop.f32.mrf.mxu0
    %v1825 = vadd.f32 %v1622, %v1824
    %1826 = vmatmul.f32.gmra.mxu0 %v1422
    %v1827 = vpop.f32.mrf.mxu0
    %v1828 = vadd.f32 %v1625, %v1827
    %1829 = vmatmul.f32.gmra.mxu0 %v1425
    %v1830 = vpop.f32.mrf.mxu0
    %v1831 = vadd.f32 %v1628, %v1830
    %1832 = vmatmul.f32.gmra.mxu0 %v1428
    %v1833 = vpop.f32.mrf.mxu0
    %v1834 = vadd.f32 %v1631, %v1833
    %1835 = vmatmul.f32.gmra.mxu0 %v1431
    %v1836 = vpop.f32.mrf.mxu0
    %v1837 = vadd.f32 %v1634, %v1836
    %1838 = vmatmul.f32.gmra.mxu0 %v1434
    %v1839 = vpop.f32.mrf.mxu0
    %v1840 = vadd.f32 %v1637, %v1839
    %1841 = vmatmul.f32.gmra.mxu0 %v1437
    %v1842 = vpop.f32.mrf.mxu0
    %v1843 = vadd.f32 %v1640, %v1842
    %1844 = vmatmul.f32.gmra.mxu0 %v1440
    %v1845 = vpop.f32.mrf.mxu0
    %v1846 = vadd.f32 %v1643, %v1845
    %1847 = vmatmul.f32.gmra.mxu0 %v1443
    %v1848 = vpop.f32.mrf.mxu0
    %v1849 = vadd.f32 %v1646, %v1848
    %1850 = vmatmul.f32.gmra.mxu0 %v1446
    %v1851 = vpop.f32.mrf.mxu0
    %v1852 = vadd.f32 %v1649, %v1851
    %1853 = vmatmul.f32.gmra.mxu0 %v1449
    %v1854 = vpop.f32.mrf.mxu0
    %v1855 = vadd.f32 %v1652, %v1854
    %1856 = vmatmul.f32.gmra.mxu0 %v1452
    %v1857 = vpop.f32.mrf.mxu0
    %v1858 = vadd.f32 %v1655, %v1857
    %1859 = vmatmul.f32.gmra.mxu0 %v1455
    %v1860 = vpop.f32.mrf.mxu0
    %v1861 = vadd.f32 %v1658, %v1860
    %1862 = vmatmul.f32.gmra.mxu0 %v1458
    %v1863 = vpop.f32.mrf.mxu0
    %v1864 = vadd.f32 %v1661, %v1863
    %1865 = vmatmul.f32.gmra.mxu0 %v1461
    %v1866 = vpop.f32.mrf.mxu0
    %v1867 = vadd.f32 %v1664, %v1866
    %1868 = vmatmul.f32.gmra.mxu0 %v1464
    %v1869 = vpop.f32.mrf.mxu0
    %v1870 = vadd.f32 %v1667, %v1869
    %1871 = vmatmul.f32.gmra.mxu0 %v1467
    %v1872 = vpop.f32.mrf.mxu0
    %v1873 = vadd.f32 %v1670, %v1872
    %1874 = vmatmul.f32.gmra.mxu0 %v1470
    %v1875 = vpop.f32.mrf.mxu0
    %v1876 = vadd.f32 %v1673, %v1875
    %1877 = vmatmul.f32.gmra.mxu0 %v1473
    %v1878 = vpop.f32.mrf.mxu0
    %v1879 = vadd.f32 %v1676, %v1878
    %1880 = vmatmul.f32.gmra.mxu0 %v1476
    %v1881 = vpop.f32.mrf.mxu0
    %v1882 = vadd.f32 %v1679, %v1881
    %1883 = vmatmul.f32.gmra.mxu0 %v1479
    %v1884 = vpop.f32.mrf.mxu0
    %v1885 = vadd.f32 %v1682, %v1884
    %1886 = vmatmul.f32.gmra.mxu0 %v1482
    %v1887 = vpop.f32.mrf.mxu0
    %v1888 = vadd.f32 %v1685, %v1887
    %1889 = vmatmul.f32.gmra.mxu0 %v1485
    %v1890 = vpop.f32.mrf.mxu0
    %v1891 = vadd.f32 %v1688, %v1890
    %1892 = vmatmul.f32.gmra.mxu0 %v1488
    %v1893 = vpop.f32.mrf.mxu0
    %v1894 = vadd.f32 %v1691, %v1893
    %1895 = vmatmul.f32.gmra.mxu0 %v1491
    %v1896 = vpop.f32.mrf.mxu0
    %v1897 = vadd.f32 %v1694, %v1896
    %1898 = vmatmul.f32.gmra.mxu0 %v1494
    %v1899 = vpop.f32.mrf.mxu0
    %v1900 = vadd.f32 %v1697, %v1899
    %1901 = vmatmul.f32.gmra.mxu0 %v1497
    %v1902 = vpop.f32.mrf.mxu0
    %v1903 = vadd.f32 %v1700, %v1902
    %1904 = vmatmul.f32.gmra.mxu0 %v1500
    %v1905 = vpop.f32.mrf.mxu0
    %v1906 = vadd.f32 %v1703, %v1905
    %1907 = vmatmul.f32.gmra.mxu0 %v1503
    %v1908 = vpop.f32.mrf.mxu0
    %v1909 = vadd.f32 %v1706, %v1908
    %1910 = vmatmul.f32.gmra.mxu0 %v1506
    %v1911 = vpop.f32.mrf.mxu0
    %v1912 = vadd.f32 %v1709, %v1911
    %1913 = vdwg.mxu0
    %v1914 = vld [vmem:[#allocation2 + $0x20] sm:$0xff]
    %v1915 = vld [vmem:[#allocation2 + $0x28] sm:$0xff]
    %v1916 = vld [vmem:[#allocation2 + $0x30] sm:$0xff]
    %v1917 = vld [vmem:[#allocation2 + $0x38] sm:$0xff]
    %v1918 = vld [vmem:[#allocation2 + $0x40] sm:$0xff]
    %v1919 = vld [vmem:[#allocation2 + $0x48] sm:$0xff]
    %v1920 = vld [vmem:[#allocation2 + $0x50] sm:$0xff]
    %v1921 = vld [vmem:[#allocation2 + $0x58] sm:$0xff]
    %v1922 = vld [vmem:[#allocation2 + $0x60] sm:$0xff]
    %v1923 = vld [vmem:[#allocation2 + $0x68] sm:$0xff]
    %v1924 = vld [vmem:[#allocation2 + $0x70] sm:$0xff]
    %v1925 = vld [vmem:[#allocation2 + $0x78] sm:$0xff]
    %v1926 = vld [vmem:[#allocation2 + $0x80] sm:$0xff]
    %v1927 = vld [vmem:[#allocation2 + $0x88] sm:$0xff]
    %v1928 = vld [vmem:[#allocation2 + $0x90] sm:$0xff]
    %v1929 = vld [vmem:[#allocation2 + $0x98] sm:$0xff]
    %v1930 = vld [vmem:[#allocation2 + $0xa0] sm:$0xff]
    %v1931 = vld [vmem:[#allocation2 + $0xa8] sm:$0xff]
    %v1932 = vld [vmem:[#allocation2 + $0xb0] sm:$0xff]
    %v1933 = vld [vmem:[#allocation2 + $0xb8] sm:$0xff]
    %v1934 = vld [vmem:[#allocation2 + $0xc0] sm:$0xff]
    %v1935 = vld [vmem:[#allocation2 + $0xc8] sm:$0xff]
    %v1936 = vld [vmem:[#allocation2 + $0xd0] sm:$0xff]
    %v1937 = vld [vmem:[#allocation2 + $0xd8] sm:$0xff]
    %v1938 = vld [vmem:[#allocation2 + $0xe0] sm:$0xff]
    %v1939 = vld [vmem:[#allocation2 + $0xe8] sm:$0xff]
    %v1940 = vld [vmem:[#allocation2 + $0xf0] sm:$0xff]
    %v1941 = vld [vmem:[#allocation2 + $0xf8] sm:$0xff]
    %v1942 = vld [vmem:[#allocation2 + $0x100] sm:$0xff]
    %v1943 = vld [vmem:[#allocation2 + $0x108] sm:$0xff]
    %v1944 = vld [vmem:[#allocation2 + $0x110] sm:$0xff]
    %v1945 = vld [vmem:[#allocation2 + $0x118] sm:$0xff]
    %v1946 = vld [vmem:[#allocation2 + $0x120] sm:$0xff]
    %v1947 = vld [vmem:[#allocation2 + $0x128] sm:$0xff]
    %v1948 = vld [vmem:[#allocation2 + $0x130] sm:$0xff]
    %v1949 = vld [vmem:[#allocation2 + $0x138] sm:$0xff]
    %v1950 = vld [vmem:[#allocation2 + $0x140] sm:$0xff]
    %v1951 = vld [vmem:[#allocation2 + $0x148] sm:$0xff]
    %v1952 = vld [vmem:[#allocation2 + $0x150] sm:$0xff]
    %v1953 = vld [vmem:[#allocation2 + $0x158] sm:$0xff]
    %v1954 = vld [vmem:[#allocation2 + $0x160] sm:$0xff]
    %v1955 = vld [vmem:[#allocation2 + $0x168] sm:$0xff]
    %v1956 = vld [vmem:[#allocation2 + $0x170] sm:$0xff]
    %v1957 = vld [vmem:[#allocation2 + $0x178] sm:$0xff]
    %v1958 = vld [vmem:[#allocation2 + $0x180] sm:$0xff]
    %v1959 = vld [vmem:[#allocation2 + $0x188] sm:$0xff]
    %v1960 = vld [vmem:[#allocation2 + $0x190] sm:$0xff]
    %v1961 = vld [vmem:[#allocation2 + $0x198] sm:$0xff]
    %v1962 = vld [vmem:[#allocation2 + $0x1a0] sm:$0xff]
    %v1963 = vld [vmem:[#allocation2 + $0x1a8] sm:$0xff]
    %v1964 = vld [vmem:[#allocation2 + $0x1b0] sm:$0xff]
    %v1965 = vld [vmem:[#allocation2 + $0x1b8] sm:$0xff]
    %v1966 = vld [vmem:[#allocation2 + $0x1c0] sm:$0xff]
    %v1967 = vld [vmem:[#allocation2 + $0x1c8] sm:$0xff]
    %v1968 = vld [vmem:[#allocation2 + $0x1d0] sm:$0xff]
    %v1969 = vld [vmem:[#allocation2 + $0x1d8] sm:$0xff]
    %v1970 = vld [vmem:[#allocation2 + $0x1e0] sm:$0xff]
    %v1971 = vld [vmem:[#allocation2 + $0x1e8] sm:$0xff]
    %v1972 = vld [vmem:[#allocation2 + $0x1f0] sm:$0xff]
    %v1973 = vld [vmem:[#allocation2 + $0x1f8] sm:$0xff]
    %v1974 = vld [vmem:[%s3 + $0xc0] sm:$0xff]
    %v1975 = vld [vmem:[%s3 + $0xc8] sm:$0xff]
    %v1976 = vld [vmem:[%s3 + $0xd0] sm:$0xff]
    %v1977 = vld [vmem:[%s3 + $0xd8] sm:$0xff]
    %v1978 = vld [vmem:[%s3 + $0xe0] sm:$0xff]
    %v1979 = vld [vmem:[%s3 + $0xe8] sm:$0xff]
    %v1980 = vld [vmem:[%s3 + $0xf0] sm:$0xff]
    %v1981 = vld [vmem:[%s3 + $0xf8] sm:$0xff]
    %v1982 = vld [vmem:[%s3 + $0x100] sm:$0xff]
    %v1983 = vld [vmem:[%s3 + $0x108] sm:$0xff]
    %v1984 = vld [vmem:[%s3 + $0x110] sm:$0xff]
    %v1985 = vld [vmem:[%s3 + $0x118] sm:$0xff]
    %v1987 = vsel %vm1183, %v1914, 0
    %v1990 = vsel %vm1183, %v1915, 0
    %v1993 = vsel %vm1183, %v1916, 0
    %v1996 = vsel %vm1183, %v1917, 0
    %v1999 = vsel %vm1183, %v1918, 0
    %v2002 = vsel %vm1183, %v1919, 0
    %v2005 = vsel %vm1183, %v1920, 0
    %v2008 = vsel %vm1183, %v1921, 0
    %v2011 = vsel %vm1183, %v1922, 0
    %v2014 = vsel %vm1183, %v1923, 0
    %v2017 = vsel %vm1183, %v1924, 0
    %v2020 = vsel %vm1183, %v1925, 0
    %v2023 = vsel %vm1183, %v1926, 0
    %v2026 = vsel %vm1183, %v1927, 0
    %v2029 = vsel %vm1183, %v1928, 0
    %v2032 = vsel %vm1183, %v1929, 0
    %v2035 = vsel %vm1183, %v1930, 0
    %v2038 = vsel %vm1183, %v1931, 0
    %v2041 = vsel %vm1183, %v1932, 0
    %v2044 = vsel %vm1183, %v1933, 0
    %v2047 = vsel %vm1183, %v1934, 0
    %v2050 = vsel %vm1183, %v1935, 0
    %v2053 = vsel %vm1183, %v1936, 0
    %v2056 = vsel %vm1183, %v1937, 0
    %v2059 = vsel %vm1183, %v1938, 0
    %v2062 = vsel %vm1183, %v1939, 0
    %v2065 = vsel %vm1183, %v1940, 0
    %v2068 = vsel %vm1183, %v1941, 0
    %v2071 = vsel %vm1183, %v1942, 0
    %v2074 = vsel %vm1183, %v1943, 0
    %v2077 = vsel %vm1183, %v1944, 0
    %v2080 = vsel %vm1183, %v1945, 0
    %v2083 = vsel %vm1183, %v1946, 0
    %v2086 = vsel %vm1183, %v1947, 0
    %v2089 = vsel %vm1183, %v1948, 0
    %v2092 = vsel %vm1183, %v1949, 0
    %v2095 = vsel %vm1183, %v1950, 0
    %v2098 = vsel %vm1183, %v1951, 0
    %v2101 = vsel %vm1183, %v1952, 0
    %v2104 = vsel %vm1183, %v1953, 0
    %v2107 = vsel %vm1183, %v1954, 0
    %v2110 = vsel %vm1183, %v1955, 0
    %v2113 = vsel %vm1183, %v1956, 0
    %v2116 = vsel %vm1183, %v1957, 0
    %v2119 = vsel %vm1183, %v1958, 0
    %v2122 = vsel %vm1183, %v1959, 0
    %v2125 = vsel %vm1183, %v1960, 0
    %v2128 = vsel %vm1183, %v1961, 0
    %v2131 = vsel %vm1183, %v1962, 0
    %v2134 = vsel %vm1183, %v1963, 0
    %v2137 = vsel %vm1183, %v1964, 0
    %v2140 = vsel %vm1183, %v1965, 0
    %v2143 = vsel %vm1183, %v1966, 0
    %v2146 = vsel %vm1183, %v1967, 0
    %v2149 = vsel %vm1183, %v1968, 0
    %v2152 = vsel %vm1183, %v1969, 0
    %v2155 = vsel %vm1183, %v1970, 0
    %v2158 = vsel %vm1183, %v1971, 0
    %v2161 = vsel %vm1183, %v1972, 0
    %v2164 = vsel %vm1183, %v1973, 0
    %2166 = vmatpush.msra.mxu0 0.0
    %2167 = vmatpush.msra.mxu0 0.0
    %2168 = vmatpush.msra.mxu0 0.0
    %2169 = vmatpush.msra.mxu0 0.0
    %2170 = vmatpush.msra.mxu0 %v1985
    %2171 = vmatpush.msra.mxu0 %v1984
    %2172 = vmatpush.msra.mxu0 %v1983
    %2173 = vmatpush.msra.mxu0 %v1982
    %2174 = vmatpush.msra.mxu0 %v1981
    %2175 = vmatpush.msra.mxu0 %v1980
    %2176 = vmatpush.msra.mxu0 %v1979
    %2177 = vmatpush.msra.mxu0 %v1978
    %2178 = vmatpush.msra.mxu0 %v1977
    %2179 = vmatpush.msra.mxu0 %v1976
    %2180 = vmatpush.msra.mxu0 %v1975
    %2181 = vmatpush.msra.mxu0 %v1974
    %2182 = vmatmul.f32.gmra.mxu0 %v1987
    %v2183 = vpop.f32.mrf.mxu0
    %v2184 = vadd.f32 0.0, %v2183
    %2185 = vmatmul.f32.gmra.mxu0 %v1990
    %v2186 = vpop.f32.mrf.mxu0
    %v2187 = vadd.f32 0.0, %v2186
    %2188 = vmatmul.f32.gmra.mxu0 %v1993
    %v2189 = vpop.f32.mrf.mxu0
    %v2190 = vadd.f32 0.0, %v2189
    %2191 = vmatmul.f32.gmra.mxu0 %v1996
    %v2192 = vpop.f32.mrf.mxu0
    %v2193 = vadd.f32 0.0, %v2192
    %2194 = vmatmul.f32.gmra.mxu0 %v1999
    %v2195 = vpop.f32.mrf.mxu0
    %v2196 = vadd.f32 0.0, %v2195
    %2197 = vmatmul.f32.gmra.mxu0 %v2002
    %v2198 = vpop.f32.mrf.mxu0
    %v2199 = vadd.f32 0.0, %v2198
    %2200 = vmatmul.f32.gmra.mxu0 %v2005
    %v2201 = vpop.f32.mrf.mxu0
    %v2202 = vadd.f32 0.0, %v2201
    %2203 = vmatmul.f32.gmra.mxu0 %v2008
    %v2204 = vpop.f32.mrf.mxu0
    %v2205 = vadd.f32 0.0, %v2204
    %2206 = vmatmul.f32.gmra.mxu0 %v2011
    %v2207 = vpop.f32.mrf.mxu0
    %v2208 = vadd.f32 0.0, %v2207
    %2209 = vmatmul.f32.gmra.mxu0 %v2014
    %v2210 = vpop.f32.mrf.mxu0
    %v2211 = vadd.f32 0.0, %v2210
    %2212 = vmatmul.f32.gmra.mxu0 %v2017
    %v2213 = vpop.f32.mrf.mxu0
    %v2214 = vadd.f32 0.0, %v2213
    %2215 = vmatmul.f32.gmra.mxu0 %v2020
    %v2216 = vpop.f32.mrf.mxu0
    %v2217 = vadd.f32 0.0, %v2216
    %2218 = vmatmul.f32.gmra.mxu0 %v2023
    %v2219 = vpop.f32.mrf.mxu0
    %v2220 = vadd.f32 0.0, %v2219
    %2221 = vmatmul.f32.gmra.mxu0 %v2026
    %v2222 = vpop.f32.mrf.mxu0
    %v2223 = vadd.f32 0.0, %v2222
    %2224 = vmatmul.f32.gmra.mxu0 %v2029
    %v2225 = vpop.f32.mrf.mxu0
    %v2226 = vadd.f32 0.0, %v2225
    %2227 = vmatmul.f32.gmra.mxu0 %v2032
    %v2228 = vpop.f32.mrf.mxu0
    %v2229 = vadd.f32 0.0, %v2228
    %2230 = vmatmul.f32.gmra.mxu0 %v2035
    %v2231 = vpop.f32.mrf.mxu0
    %v2232 = vadd.f32 0.0, %v2231
    %2233 = vmatmul.f32.gmra.mxu0 %v2038
    %v2234 = vpop.f32.mrf.mxu0
    %v2235 = vadd.f32 0.0, %v2234
    %2236 = vmatmul.f32.gmra.mxu0 %v2041
    %v2237 = vpop.f32.mrf.mxu0
    %v2238 = vadd.f32 0.0, %v2237
    %2239 = vmatmul.f32.gmra.mxu0 %v2044
    %v2240 = vpop.f32.mrf.mxu0
    %v2241 = vadd.f32 0.0, %v2240
    %2242 = vmatmul.f32.gmra.mxu0 %v2047
    %v2243 = vpop.f32.mrf.mxu0
    %v2244 = vadd.f32 0.0, %v2243
    %2245 = vmatmul.f32.gmra.mxu0 %v2050
    %v2246 = vpop.f32.mrf.mxu0
    %v2247 = vadd.f32 0.0, %v2246
    %2248 = vmatmul.f32.gmra.mxu0 %v2053
    %v2249 = vpop.f32.mrf.mxu0
    %v2250 = vadd.f32 0.0, %v2249
    %2251 = vmatmul.f32.gmra.mxu0 %v2056
    %v2252 = vpop.f32.mrf.mxu0
    %v2253 = vadd.f32 0.0, %v2252
    %2254 = vmatmul.f32.gmra.mxu0 %v2059
    %v2255 = vpop.f32.mrf.mxu0
    %v2256 = vadd.f32 0.0, %v2255
    %2257 = vmatmul.f32.gmra.mxu0 %v2062
    %v2258 = vpop.f32.mrf.mxu0
    %v2259 = vadd.f32 0.0, %v2258
    %2260 = vmatmul.f32.gmra.mxu0 %v2065
    %v2261 = vpop.f32.mrf.mxu0
    %v2262 = vadd.f32 0.0, %v2261
    %2263 = vmatmul.f32.gmra.mxu0 %v2068
    %v2264 = vpop.f32.mrf.mxu0
    %v2265 = vadd.f32 0.0, %v2264
    %2266 = vmatmul.f32.gmra.mxu0 %v2071
    %v2267 = vpop.f32.mrf.mxu0
    %v2268 = vadd.f32 0.0, %v2267
    %2269 = vmatmul.f32.gmra.mxu0 %v2074
    %v2270 = vpop.f32.mrf.mxu0
    %v2271 = vadd.f32 0.0, %v2270
    %2272 = vmatmul.f32.gmra.mxu0 %v2077
    %v2273 = vpop.f32.mrf.mxu0
    %v2274 = vadd.f32 0.0, %v2273
    %2275 = vmatmul.f32.gmra.mxu0 %v2080
    %v2276 = vpop.f32.mrf.mxu0
    %v2277 = vadd.f32 0.0, %v2276
    %2278 = vmatmul.f32.gmra.mxu0 %v2083
    %v2279 = vpop.f32.mrf.mxu0
    %v2280 = vadd.f32 0.0, %v2279
    %2281 = vmatmul.f32.gmra.mxu0 %v2086
    %v2282 = vpop.f32.mrf.mxu0
    %v2283 = vadd.f32 0.0, %v2282
    %2284 = vmatmul.f32.gmra.mxu0 %v2089
    %v2285 = vpop.f32.mrf.mxu0
    %v2286 = vadd.f32 0.0, %v2285
    %2287 = vmatmul.f32.gmra.mxu0 %v2092
    %v2288 = vpop.f32.mrf.mxu0
    %v2289 = vadd.f32 0.0, %v2288
    %2290 = vmatmul.f32.gmra.mxu0 %v2095
    %v2291 = vpop.f32.mrf.mxu0
    %v2292 = vadd.f32 0.0, %v2291
    %2293 = vmatmul.f32.gmra.mxu0 %v2098
    %v2294 = vpop.f32.mrf.mxu0
    %v2295 = vadd.f32 0.0, %v2294
    %2296 = vmatmul.f32.gmra.mxu0 %v2101
    %v2297 = vpop.f32.mrf.mxu0
    %v2298 = vadd.f32 0.0, %v2297
    %2299 = vmatmul.f32.gmra.mxu0 %v2104
    %v2300 = vpop.f32.mrf.mxu0
    %v2301 = vadd.f32 0.0, %v2300
    %2302 = vmatmul.f32.gmra.mxu0 %v2107
    %v2303 = vpop.f32.mrf.mxu0
    %v2304 = vadd.f32 0.0, %v2303
    %2305 = vmatmul.f32.gmra.mxu0 %v2110
    %v2306 = vpop.f32.mrf.mxu0
    %v2307 = vadd.f32 0.0, %v2306
    %2308 = vmatmul.f32.gmra.mxu0 %v2113
    %v2309 = vpop.f32.mrf.mxu0
    %v2310 = vadd.f32 0.0, %v2309
    %2311 = vmatmul.f32.gmra.mxu0 %v2116
    %v2312 = vpop.f32.mrf.mxu0
    %v2313 = vadd.f32 0.0, %v2312
    %2314 = vmatmul.f32.gmra.mxu0 %v2119
    %v2315 = vpop.f32.mrf.mxu0
    %v2316 = vadd.f32 0.0, %v2315
    %2317 = vmatmul.f32.gmra.mxu0 %v2122
    %v2318 = vpop.f32.mrf.mxu0
    %v2319 = vadd.f32 0.0, %v2318
    %2320 = vmatmul.f32.gmra.mxu0 %v2125
    %v2321 = vpop.f32.mrf.mxu0
    %v2322 = vadd.f32 0.0, %v2321
    %2323 = vmatmul.f32.gmra.mxu0 %v2128
    %v2324 = vpop.f32.mrf.mxu0
    %v2325 = vadd.f32 0.0, %v2324
    %2326 = vmatmul.f32.gmra.mxu0 %v2131
    %v2327 = vpop.f32.mrf.mxu0
    %v2328 = vadd.f32 0.0, %v2327
    %2329 = vmatmul.f32.gmra.mxu0 %v2134
    %v2330 = vpop.f32.mrf.mxu0
    %v2331 = vadd.f32 0.0, %v2330
    %2332 = vmatmul.f32.gmra.mxu0 %v2137
    %v2333 = vpop.f32.mrf.mxu0
    %v2334 = vadd.f32 0.0, %v2333
    %2335 = vmatmul.f32.gmra.mxu0 %v2140
    %v2336 = vpop.f32.mrf.mxu0
    %v2337 = vadd.f32 0.0, %v2336
    %2338 = vmatmul.f32.gmra.mxu0 %v2143
    %v2339 = vpop.f32.mrf.mxu0
    %v2340 = vadd.f32 0.0, %v2339
    %2341 = vmatmul.f32.gmra.mxu0 %v2146
    %v2342 = vpop.f32.mrf.mxu0
    %v2343 = vadd.f32 0.0, %v2342
    %2344 = vmatmul.f32.gmra.mxu0 %v2149
    %v2345 = vpop.f32.mrf.mxu0
    %v2346 = vadd.f32 0.0, %v2345
    %2347 = vmatmul.f32.gmra.mxu0 %v2152
    %v2348 = vpop.f32.mrf.mxu0
    %v2349 = vadd.f32 0.0, %v2348
    %2350 = vmatmul.f32.gmra.mxu0 %v2155
    %v2351 = vpop.f32.mrf.mxu0
    %v2352 = vadd.f32 0.0, %v2351
    %2353 = vmatmul.f32.gmra.mxu0 %v2158
    %v2354 = vpop.f32.mrf.mxu0
    %v2355 = vadd.f32 0.0, %v2354
    %2356 = vmatmul.f32.gmra.mxu0 %v2161
    %v2357 = vpop.f32.mrf.mxu0
    %v2358 = vadd.f32 0.0, %v2357
    %2359 = vmatmul.f32.gmra.mxu0 %v2164
    %v2360 = vpop.f32.mrf.mxu0
    %v2361 = vadd.f32 0.0, %v2360
    %2362 = vdwg.mxu0
    %v2363 = vadd.f32 %v1735, %v2184
    %v2364 = vadd.f32 %v1738, %v2187
    %v2365 = vadd.f32 %v1741, %v2190
    %v2366 = vadd.f32 %v1744, %v2193
    %v2367 = vadd.f32 %v1747, %v2196
    %v2368 = vadd.f32 %v1750, %v2199
    %v2369 = vadd.f32 %v1753, %v2202
    %v2370 = vadd.f32 %v1756, %v2205
    %v2371 = vadd.f32 %v1759, %v2208
    %v2372 = vadd.f32 %v1762, %v2211
    %v2373 = vadd.f32 %v1765, %v2214
    %v2374 = vadd.f32 %v1768, %v2217
    %v2375 = vadd.f32 %v1771, %v2220
    %v2376 = vadd.f32 %v1774, %v2223
    %v2377 = vadd.f32 %v1777, %v2226
    %v2378 = vadd.f32 %v1780, %v2229
    %v2379 = vadd.f32 %v1783, %v2232
    %v2380 = vadd.f32 %v1786, %v2235
    %v2381 = vadd.f32 %v1789, %v2238
    %v2382 = vadd.f32 %v1792, %v2241
    %v2383 = vadd.f32 %v1795, %v2244
    %v2384 = vadd.f32 %v1798, %v2247
    %v2385 = vadd.f32 %v1801, %v2250
    %v2386 = vadd.f32 %v1804, %v2253
    %v2387 = vadd.f32 %v1807, %v2256
    %v2388 = vadd.f32 %v1810, %v2259
    %v2389 = vadd.f32 %v1813, %v2262
    %v2390 = vadd.f32 %v1816, %v2265
    %v2391 = vadd.f32 %v1819, %v2268
    %v2392 = vadd.f32 %v1822, %v2271
    %v2393 = vadd.f32 %v1825, %v2274
    %v2394 = vadd.f32 %v1828, %v2277
    %v2395 = vadd.f32 %v1831, %v2280
    %v2396 = vadd.f32 %v1834, %v2283
    %v2397 = vadd.f32 %v1837, %v2286
    %v2398 = vadd.f32 %v1840, %v2289
    %v2399 = vadd.f32 %v1843, %v2292
    %v2400 = vadd.f32 %v1846, %v2295
    %v2401 = vadd.f32 %v1849, %v2298
    %v2402 = vadd.f32 %v1852, %v2301
    %v2403 = vadd.f32 %v1855, %v2304
    %v2404 = vadd.f32 %v1858, %v2307
    %v2405 = vadd.f32 %v1861, %v2310
    %v2406 = vadd.f32 %v1864, %v2313
    %v2407 = vadd.f32 %v1867, %v2316
    %v2408 = vadd.f32 %v1870, %v2319
    %v2409 = vadd.f32 %v1873, %v2322
    %v2410 = vadd.f32 %v1876, %v2325
    %v2411 = vadd.f32 %v1879, %v2328
    %v2412 = vadd.f32 %v1882, %v2331
    %v2413 = vadd.f32 %v1885, %v2334
    %v2414 = vadd.f32 %v1888, %v2337
    %v2415 = vadd.f32 %v1891, %v2340
    %v2416 = vadd.f32 %v1894, %v2343
    %v2417 = vadd.f32 %v1897, %v2346
    %v2418 = vadd.f32 %v1900, %v2349
    %v2419 = vadd.f32 %v1903, %v2352
    %v2420 = vadd.f32 %v1906, %v2355
    %v2421 = vadd.f32 %v1909, %v2358
    %v2422 = vadd.f32 %v1912, %v2361
    %v2423 = vld [vmem:[%s4] sm:$0x1]
    %v2425 = vperm.slane %v2423, 0
    %v2427 = vadd.f32 %v2363, %v2425
    %v2428 = vadd.f32 %v2364, %v2425
    %v2429 = vadd.f32 %v2365, %v2425
    %v2430 = vadd.f32 %v2366, %v2425
    %v2431 = vadd.f32 %v2367, %v2425
    %v2432 = vadd.f32 %v2368, %v2425
    %v2433 = vadd.f32 %v2369, %v2425
    %v2434 = vadd.f32 %v2370, %v2425
    %v2435 = vadd.f32 %v2371, %v2425
    %v2436 = vadd.f32 %v2372, %v2425
    %v2437 = vadd.f32 %v2373, %v2425
    %v2438 = vadd.f32 %v2374, %v2425
    %v2439 = vadd.f32 %v2375, %v2425
    %v2440 = vadd.f32 %v2376, %v2425
    %v2441 = vadd.f32 %v2377, %v2425
    %v2442 = vadd.f32 %v2378, %v2425
    %v2443 = vadd.f32 %v2379, %v2425
    %v2444 = vadd.f32 %v2380, %v2425
    %v2445 = vadd.f32 %v2381, %v2425
    %v2446 = vadd.f32 %v2382, %v2425
    %v2447 = vadd.f32 %v2383, %v2425
    %v2448 = vadd.f32 %v2384, %v2425
    %v2449 = vadd.f32 %v2385, %v2425
    %v2450 = vadd.f32 %v2386, %v2425
    %v2451 = vadd.f32 %v2387, %v2425
    %v2452 = vadd.f32 %v2388, %v2425
    %v2453 = vadd.f32 %v2389, %v2425
    %v2454 = vadd.f32 %v2390, %v2425
    %v2455 = vadd.f32 %v2391, %v2425
    %v2456 = vadd.f32 %v2392, %v2425
    %v2457 = vadd.f32 %v2393, %v2425
    %v2458 = vadd.f32 %v2394, %v2425
    %v2459 = vadd.f32 %v2395, %v2425
    %v2460 = vadd.f32 %v2396, %v2425
    %v2461 = vadd.f32 %v2397, %v2425
    %v2462 = vadd.f32 %v2398, %v2425
    %v2463 = vadd.f32 %v2399, %v2425
    %v2464 = vadd.f32 %v2400, %v2425
    %v2465 = vadd.f32 %v2401, %v2425
    %v2466 = vadd.f32 %v2402, %v2425
    %v2467 = vadd.f32 %v2403, %v2425
    %v2468 = vadd.f32 %v2404, %v2425
    %v2469 = vadd.f32 %v2405, %v2425
    %v2470 = vadd.f32 %v2406, %v2425
    %v2471 = vadd.f32 %v2407, %v2425
    %v2472 = vadd.f32 %v2408, %v2425
    %v2473 = vadd.f32 %v2409, %v2425
    %v2474 = vadd.f32 %v2410, %v2425
    %v2475 = vadd.f32 %v2411, %v2425
    %v2476 = vadd.f32 %v2412, %v2425
    %v2477 = vadd.f32 %v2413, %v2425
    %v2478 = vadd.f32 %v2414, %v2425
    %v2479 = vadd.f32 %v2415, %v2425
    %v2480 = vadd.f32 %v2416, %v2425
    %v2481 = vadd.f32 %v2417, %v2425
    %v2482 = vadd.f32 %v2418, %v2425
    %v2483 = vadd.f32 %v2419, %v2425
    %v2484 = vadd.f32 %v2420, %v2425
    %v2485 = vadd.f32 %v2421, %v2425
    %v2486 = vadd.f32 %v2422, %v2425
    %v2487 = vmax.f32 %v2427, 0.0
    %v2488 = vmax.f32 %v2428, 0.0
    %v2489 = vmax.f32 %v2429, 0.0
    %v2490 = vmax.f32 %v2430, 0.0
    %v2491 = vmax.f32 %v2431, 0.0
    %v2492 = vmax.f32 %v2432, 0.0
    %v2493 = vmax.f32 %v2433, 0.0
    %v2494 = vmax.f32 %v2434, 0.0
    %v2495 = vmax.f32 %v2435, 0.0
    %v2496 = vmax.f32 %v2436, 0.0
    %v2497 = vmax.f32 %v2437, 0.0
    %v2498 = vmax.f32 %v2438, 0.0
    %v2499 = vmax.f32 %v2439, 0.0
    %v2500 = vmax.f32 %v2440, 0.0
    %v2501 = vmax.f32 %v2441, 0.0
    %v2502 = vmax.f32 %v2442, 0.0
    %v2503 = vmax.f32 %v2443, 0.0
    %v2504 = vmax.f32 %v2444, 0.0
    %v2505 = vmax.f32 %v2445, 0.0
    %v2506 = vmax.f32 %v2446, 0.0
    %v2507 = vmax.f32 %v2447, 0.0
    %v2508 = vmax.f32 %v2448, 0.0
    %v2509 = vmax.f32 %v2449, 0.0
    %v2510 = vmax.f32 %v2450, 0.0
    %v2511 = vmax.f32 %v2451, 0.0
    %v2512 = vmax.f32 %v2452, 0.0
    %v2513 = vmax.f32 %v2453, 0.0
    %v2514 = vmax.f32 %v2454, 0.0
    %v2515 = vmax.f32 %v2455, 0.0
    %v2516 = vmax.f32 %v2456, 0.0
    %v2517 = vmax.f32 %v2457, 0.0
    %v2518 = vmax.f32 %v2458, 0.0
    %v2519 = vmax.f32 %v2459, 0.0
    %v2520 = vmax.f32 %v2460, 0.0
    %v2521 = vmax.f32 %v2461, 0.0
    %v2522 = vmax.f32 %v2462, 0.0
    %v2523 = vmax.f32 %v2463, 0.0
    %v2524 = vmax.f32 %v2464, 0.0
    %v2525 = vmax.f32 %v2465, 0.0
    %v2526 = vmax.f32 %v2466, 0.0
    %v2527 = vmax.f32 %v2467, 0.0
    %v2528 = vmax.f32 %v2468, 0.0
    %v2529 = vmax.f32 %v2469, 0.0
    %v2530 = vmax.f32 %v2470, 0.0
    %v2531 = vmax.f32 %v2471, 0.0
    %v2532 = vmax.f32 %v2472, 0.0
    %v2533 = vmax.f32 %v2473, 0.0
    %v2534 = vmax.f32 %v2474, 0.0
    %v2535 = vmax.f32 %v2475, 0.0
    %v2536 = vmax.f32 %v2476, 0.0
    %v2537 = vmax.f32 %v2477, 0.0
    %v2538 = vmax.f32 %v2478, 0.0
    %v2539 = vmax.f32 %v2479, 0.0
    %v2540 = vmax.f32 %v2480, 0.0
    %v2541 = vmax.f32 %v2481, 0.0
    %v2542 = vmax.f32 %v2482, 0.0
    %v2543 = vmax.f32 %v2483, 0.0
    %v2544 = vmax.f32 %v2484, 0.0
    %v2545 = vmax.f32 %v2485, 0.0
    %v2546 = vmax.f32 %v2486, 0.0
    %vm2547 = vcmask 523264
    %2548 = vst.msk [vmem:[#allocation3] sm:$0xff] %vm2547, %v2487
    %2549 = vst.msk [vmem:[#allocation3 + $0x8] sm:$0xff] %vm2547, %v2488
    %2550 = vst.msk [vmem:[#allocation3 + $0x10] sm:$0xff] %vm2547, %v2489
    %2551 = vst.msk [vmem:[#allocation3 + $0x18] sm:$0xff] %vm2547, %v2490
    %2552 = vst.msk [vmem:[#allocation3 + $0x20] sm:$0xff] %vm2547, %v2491
    %2553 = vst.msk [vmem:[#allocation3 + $0x28] sm:$0xff] %vm2547, %v2492
    %2554 = vst.msk [vmem:[#allocation3 + $0x30] sm:$0xff] %vm2547, %v2493
    %2555 = vst.msk [vmem:[#allocation3 + $0x38] sm:$0xff] %vm2547, %v2494
    %2556 = vst.msk [vmem:[#allocation3 + $0x40] sm:$0xff] %vm2547, %v2495
    %2557 = vst.msk [vmem:[#allocation3 + $0x48] sm:$0xff] %vm2547, %v2496
    %2558 = vst.msk [vmem:[#allocation3 + $0x50] sm:$0xff] %vm2547, %v2497
    %2559 = vst.msk [vmem:[#allocation3 + $0x58] sm:$0xff] %vm2547, %v2498
    %2560 = vst.msk [vmem:[#allocation3 + $0x60] sm:$0xff] %vm2547, %v2499
    %2561 = vst.msk [vmem:[#allocation3 + $0x68] sm:$0xff] %vm2547, %v2500
    %2562 = vst.msk [vmem:[#allocation3 + $0x70] sm:$0xff] %vm2547, %v2501
    %2563 = vst.msk [vmem:[#allocation3 + $0x78] sm:$0xff] %vm2547, %v2502
    %2564 = vst.msk [vmem:[#allocation3 + $0x80] sm:$0xff] %vm2547, %v2503
    %2565 = vst.msk [vmem:[#allocation3 + $0x88] sm:$0xff] %vm2547, %v2504
    %2566 = vst.msk [vmem:[#allocation3 + $0x90] sm:$0xff] %vm2547, %v2505
    %2567 = vst.msk [vmem:[#allocation3 + $0x98] sm:$0xff] %vm2547, %v2506
    %2568 = vst.msk [vmem:[#allocation3 + $0xa0] sm:$0xff] %vm2547, %v2507
    %2569 = vst.msk [vmem:[#allocation3 + $0xa8] sm:$0xff] %vm2547, %v2508
    %2570 = vst.msk [vmem:[#allocation3 + $0xb0] sm:$0xff] %vm2547, %v2509
    %2571 = vst.msk [vmem:[#allocation3 + $0xb8] sm:$0xff] %vm2547, %v2510
    %2572 = vst.msk [vmem:[#allocation3 + $0xc0] sm:$0xff] %vm2547, %v2511
    %2573 = vst.msk [vmem:[#allocation3 + $0xc8] sm:$0xff] %vm2547, %v2512
    %2574 = vst.msk [vmem:[#allocation3 + $0xd0] sm:$0xff] %vm2547, %v2513
    %2575 = vst.msk [vmem:[#allocation3 + $0xd8] sm:$0xff] %vm2547, %v2514
    %2576 = vst.msk [vmem:[#allocation3 + $0xe0] sm:$0xff] %vm2547, %v2515
    %2577 = vst.msk [vmem:[#allocation3 + $0xe8] sm:$0xff] %vm2547, %v2516
    %2578 = vst.msk [vmem:[#allocation3 + $0xf0] sm:$0xff] %vm2547, %v2517
    %2579 = vst.msk [vmem:[#allocation3 + $0xf8] sm:$0xff] %vm2547, %v2518
    %2580 = vst.msk [vmem:[#allocation3 + $0x100] sm:$0xff] %vm2547, %v2519
    %2581 = vst.msk [vmem:[#allocation3 + $0x108] sm:$0xff] %vm2547, %v2520
    %2582 = vst.msk [vmem:[#allocation3 + $0x110] sm:$0xff] %vm2547, %v2521
    %2583 = vst.msk [vmem:[#allocation3 + $0x118] sm:$0xff] %vm2547, %v2522
    %2584 = vst.msk [vmem:[#allocation3 + $0x120] sm:$0xff] %vm2547, %v2523
    %2585 = vst.msk [vmem:[#allocation3 + $0x128] sm:$0xff] %vm2547, %v2524
    %2586 = vst.msk [vmem:[#allocation3 + $0x130] sm:$0xff] %vm2547, %v2525
    %2587 = vst.msk [vmem:[#allocation3 + $0x138] sm:$0xff] %vm2547, %v2526
    %2588 = vst.msk [vmem:[#allocation3 + $0x140] sm:$0xff] %vm2547, %v2527
    %2589 = vst.msk [vmem:[#allocation3 + $0x148] sm:$0xff] %vm2547, %v2528
    %2590 = vst.msk [vmem:[#allocation3 + $0x150] sm:$0xff] %vm2547, %v2529
    %2591 = vst.msk [vmem:[#allocation3 + $0x158] sm:$0xff] %vm2547, %v2530
    %2592 = vst.msk [vmem:[#allocation3 + $0x160] sm:$0xff] %vm2547, %v2531
    %2593 = vst.msk [vmem:[#allocation3 + $0x168] sm:$0xff] %vm2547, %v2532
    %2594 = vst.msk [vmem:[#allocation3 + $0x170] sm:$0xff] %vm2547, %v2533
    %2595 = vst.msk [vmem:[#allocation3 + $0x178] sm:$0xff] %vm2547, %v2534
    %2596 = vst.msk [vmem:[#allocation3 + $0x180] sm:$0xff] %vm2547, %v2535
    %2597 = vst.msk [vmem:[#allocation3 + $0x188] sm:$0xff] %vm2547, %v2536
    %2598 = vst.msk [vmem:[#allocation3 + $0x190] sm:$0xff] %vm2547, %v2537
    %2599 = vst.msk [vmem:[#allocation3 + $0x198] sm:$0xff] %vm2547, %v2538
    %2600 = vst.msk [vmem:[#allocation3 + $0x1a0] sm:$0xff] %vm2547, %v2539
    %2601 = vst.msk [vmem:[#allocation3 + $0x1a8] sm:$0xff] %vm2547, %v2540
    %2602 = vst.msk [vmem:[#allocation3 + $0x1b0] sm:$0xff] %vm2547, %v2541
    %2603 = vst.msk [vmem:[#allocation3 + $0x1b8] sm:$0xff] %vm2547, %v2542
    %2604 = vst.msk [vmem:[#allocation3 + $0x1c0] sm:$0xff] %vm2547, %v2543
    %2605 = vst.msk [vmem:[#allocation3 + $0x1c8] sm:$0xff] %vm2547, %v2544
    %2606 = vst.msk [vmem:[#allocation3 + $0x1d0] sm:$0xff] %vm2547, %v2545
    %2607 = vst.msk [vmem:[#allocation3 + $0x1d8] sm:$0xff] %vm2547, %v2546
    %v2608 = vld [vmem:[#allocation3] sm:$0xff]
    %v2609 = vld [vmem:[#allocation3 + $0x8] sm:$0xff]
    %v2610 = vld [vmem:[#allocation3 + $0x10] sm:$0xff]
    %v2611 = vld [vmem:[#allocation3 + $0x18] sm:$0xff]
    %v2612 = vld [vmem:[#allocation3 + $0x20] sm:$0xff]
    %v2613 = vld [vmem:[#allocation3 + $0x28] sm:$0xff]
    %v2614 = vld [vmem:[#allocation3 + $0x30] sm:$0xff]
    %v2615 = vld [vmem:[#allocation3 + $0x38] sm:$0xff]
    %v2616 = vld [vmem:[#allocation3 + $0x40] sm:$0xff]
    %v2617 = vld [vmem:[#allocation3 + $0x48] sm:$0xff]
    %v2618 = vld [vmem:[#allocation3 + $0x50] sm:$0xff]
    %v2619 = vld [vmem:[#allocation3 + $0x58] sm:$0xff]
    %v2620 = vld [vmem:[#allocation3 + $0x60] sm:$0xff]
    %v2621 = vld [vmem:[#allocation3 + $0x68] sm:$0xff]
    %v2622 = vld [vmem:[#allocation3 + $0x70] sm:$0xff]
    %v2623 = vld [vmem:[#allocation3 + $0x78] sm:$0xff]
    %v2624 = vld [vmem:[#allocation3 + $0x80] sm:$0xff]
    %v2625 = vld [vmem:[#allocation3 + $0x88] sm:$0xff]
    %v2626 = vld [vmem:[#allocation3 + $0x90] sm:$0xff]
    %v2627 = vld [vmem:[#allocation3 + $0x98] sm:$0xff]
    %v2628 = vld [vmem:[#allocation3 + $0xa0] sm:$0xff]
    %v2629 = vld [vmem:[#allocation3 + $0xa8] sm:$0xff]
    %v2630 = vld [vmem:[#allocation3 + $0xb0] sm:$0xff]
    %v2631 = vld [vmem:[#allocation3 + $0xb8] sm:$0xff]
    %v2632 = vld [vmem:[#allocation3 + $0xc0] sm:$0xff]
    %v2633 = vld [vmem:[#allocation3 + $0xc8] sm:$0xff]
    %v2634 = vld [vmem:[#allocation3 + $0xd0] sm:$0xff]
    %v2635 = vld [vmem:[#allocation3 + $0xd8] sm:$0xff]
    %v2636 = vld [vmem:[#allocation3 + $0xe0] sm:$0xff]
    %v2637 = vld [vmem:[#allocation3 + $0xe8] sm:$0xff]
    %v2638 = vld [vmem:[#allocation3 + $0xf0] sm:$0xff]
    %v2639 = vld [vmem:[#allocation3 + $0xf8] sm:$0xff]
    %v2640 = vld [vmem:[#allocation3 + $0x100] sm:$0xff]
    %v2641 = vld [vmem:[#allocation3 + $0x108] sm:$0xff]
    %v2642 = vld [vmem:[#allocation3 + $0x110] sm:$0xff]
    %v2643 = vld [vmem:[#allocation3 + $0x118] sm:$0xff]
    %v2644 = vld [vmem:[#allocation3 + $0x120] sm:$0xff]
    %v2645 = vld [vmem:[#allocation3 + $0x128] sm:$0xff]
    %v2646 = vld [vmem:[#allocation3 + $0x130] sm:$0xff]
    %v2647 = vld [vmem:[#allocation3 + $0x138] sm:$0xff]
    %v2648 = vld [vmem:[#allocation3 + $0x140] sm:$0xff]
    %v2649 = vld [vmem:[#allocation3 + $0x148] sm:$0xff]
    %v2650 = vld [vmem:[#allocation3 + $0x150] sm:$0xff]
    %v2651 = vld [vmem:[#allocation3 + $0x158] sm:$0xff]
    %v2652 = vld [vmem:[#allocation3 + $0x160] sm:$0xff]
    %v2653 = vld [vmem:[#allocation3 + $0x168] sm:$0xff]
    %v2654 = vld [vmem:[#allocation3 + $0x170] sm:$0xff]
    %v2655 = vld [vmem:[#allocation3 + $0x178] sm:$0xff]
    %v2656 = vld [vmem:[#allocation3 + $0x180] sm:$0xff]
    %v2657 = vld [vmem:[#allocation3 + $0x188] sm:$0xff]
    %v2658 = vld [vmem:[#allocation3 + $0x190] sm:$0xff]
    %v2659 = vld [vmem:[#allocation3 + $0x198] sm:$0xff]
    %v2660 = vld [vmem:[#allocation3 + $0x1a0] sm:$0xff]
    %v2661 = vld [vmem:[#allocation3 + $0x1a8] sm:$0xff]
    %v2662 = vld [vmem:[#allocation3 + $0x1] sm:$0xff]
    %v2663 = vld [vmem:[#allocation3 + $0x9] sm:$0xff]
    %v2664 = vld [vmem:[#allocation3 + $0x11] sm:$0xff]
    %v2665 = vld [vmem:[#allocation3 + $0x19] sm:$0xff]
    %v2666 = vld [vmem:[#allocation3 + $0x21] sm:$0xff]
    %v2667 = vld [vmem:[#allocation3 + $0x29] sm:$0xff]
    %v2668 = vld [vmem:[#allocation3 + $0x31] sm:$0xff]
    %v2669 = vld [vmem:[#allocation3 + $0x39] sm:$0xff]
    %v2670 = vld [vmem:[#allocation3 + $0x41] sm:$0xff]
    %v2671 = vld [vmem:[#allocation3 + $0x49] sm:$0xff]
    %v2672 = vld [vmem:[#allocation3 + $0x51] sm:$0xff]
    %v2673 = vld [vmem:[#allocation3 + $0x59] sm:$0xff]
    %v2674 = vld [vmem:[#allocation3 + $0x61] sm:$0xff]
    %v2675 = vld [vmem:[#allocation3 + $0x69] sm:$0xff]
    %v2676 = vld [vmem:[#allocation3 + $0x71] sm:$0xff]
    %v2677 = vld [vmem:[#allocation3 + $0x79] sm:$0xff]
    %v2678 = vld [vmem:[#allocation3 + $0x81] sm:$0xff]
    %v2679 = vld [vmem:[#allocation3 + $0x89] sm:$0xff]
    %v2680 = vld [vmem:[#allocation3 + $0x91] sm:$0xff]
    %v2681 = vld [vmem:[#allocation3 + $0x99] sm:$0xff]
    %v2682 = vld [vmem:[#allocation3 + $0xa1] sm:$0xff]
    %v2683 = vld [vmem:[#allocation3 + $0xa9] sm:$0xff]
    %v2684 = vld [vmem:[#allocation3 + $0xb1] sm:$0xff]
    %v2685 = vld [vmem:[#allocation3 + $0xb9] sm:$0xff]
    %v2686 = vld [vmem:[#allocation3 + $0xc1] sm:$0xff]
    %v2687 = vld [vmem:[#allocation3 + $0xc9] sm:$0xff]
    %v2688 = vld [vmem:[#allocation3 + $0xd1] sm:$0xff]
    %v2689 = vld [vmem:[#allocation3 + $0xd9] sm:$0xff]
    %v2690 = vld [vmem:[#allocation3 + $0xe1] sm:$0xff]
    %v2691 = vld [vmem:[#allocation3 + $0xe9] sm:$0xff]
    %v2692 = vld [vmem:[#allocation3 + $0xf1] sm:$0xff]
    %v2693 = vld [vmem:[#allocation3 + $0xf9] sm:$0xff]
    %v2694 = vld [vmem:[#allocation3 + $0x101] sm:$0xff]
    %v2695 = vld [vmem:[#allocation3 + $0x109] sm:$0xff]
    %v2696 = vld [vmem:[#allocation3 + $0x111] sm:$0xff]
    %v2697 = vld [vmem:[#allocation3 + $0x119] sm:$0xff]
    %v2698 = vld [vmem:[#allocation3 + $0x121] sm:$0xff]
    %v2699 = vld [vmem:[#allocation3 + $0x129] sm:$0xff]
    %v2700 = vld [vmem:[#allocation3 + $0x131] sm:$0xff]
    %v2701 = vld [vmem:[#allocation3 + $0x139] sm:$0xff]
    %v2702 = vld [vmem:[#allocation3 + $0x141] sm:$0xff]
    %v2703 = vld [vmem:[#allocation3 + $0x149] sm:$0xff]
    %v2704 = vld [vmem:[#allocation3 + $0x151] sm:$0xff]
    %v2705 = vld [vmem:[#allocation3 + $0x159] sm:$0xff]
    %v2706 = vld [vmem:[#allocation3 + $0x161] sm:$0xff]
    %v2707 = vld [vmem:[#allocation3 + $0x169] sm:$0xff]
    %v2708 = vld [vmem:[#allocation3 + $0x171] sm:$0xff]
    %v2709 = vld [vmem:[#allocation3 + $0x179] sm:$0xff]
    %v2710 = vld [vmem:[#allocation3 + $0x181] sm:$0xff]
    %v2711 = vld [vmem:[#allocation3 + $0x189] sm:$0xff]
    %v2712 = vld [vmem:[#allocation3 + $0x191] sm:$0xff]
    %v2713 = vld [vmem:[#allocation3 + $0x199] sm:$0xff]
    %v2714 = vld [vmem:[#allocation3 + $0x1a1] sm:$0xff]
    %v2715 = vld [vmem:[#allocation3 + $0x1a9] sm:$0xff]
    %v2716 = vmax.f32 %v2608, %v2662
    %v2717 = vmax.f32 %v2609, %v2663
    %v2718 = vmax.f32 %v2610, %v2664
    %v2719 = vmax.f32 %v2611, %v2665
    %v2720 = vmax.f32 %v2612, %v2666
    %v2721 = vmax.f32 %v2613, %v2667
    %v2722 = vmax.f32 %v2614, %v2668
    %v2723 = vmax.f32 %v2615, %v2669
    %v2724 = vmax.f32 %v2616, %v2670
    %v2725 = vmax.f32 %v2617, %v2671
    %v2726 = vmax.f32 %v2618, %v2672
    %v2727 = vmax.f32 %v2619, %v2673
    %v2728 = vmax.f32 %v2620, %v2674
    %v2729 = vmax.f32 %v2621, %v2675
    %v2730 = vmax.f32 %v2622, %v2676
    %v2731 = vmax.f32 %v2623, %v2677
    %v2732 = vmax.f32 %v2624, %v2678
    %v2733 = vmax.f32 %v2625, %v2679
    %v2734 = vmax.f32 %v2626, %v2680
    %v2735 = vmax.f32 %v2627, %v2681
    %v2736 = vmax.f32 %v2628, %v2682
    %v2737 = vmax.f32 %v2629, %v2683
    %v2738 = vmax.f32 %v2630, %v2684
    %v2739 = vmax.f32 %v2631, %v2685
    %v2740 = vmax.f32 %v2632, %v2686
    %v2741 = vmax.f32 %v2633, %v2687
    %v2742 = vmax.f32 %v2634, %v2688
    %v2743 = vmax.f32 %v2635, %v2689
    %v2744 = vmax.f32 %v2636, %v2690
    %v2745 = vmax.f32 %v2637, %v2691
    %v2746 = vmax.f32 %v2638, %v2692
    %v2747 = vmax.f32 %v2639, %v2693
    %v2748 = vmax.f32 %v2640, %v2694
    %v2749 = vmax.f32 %v2641, %v2695
    %v2750 = vmax.f32 %v2642, %v2696
    %v2751 = vmax.f32 %v2643, %v2697
    %v2752 = vmax.f32 %v2644, %v2698
    %v2753 = vmax.f32 %v2645, %v2699
    %v2754 = vmax.f32 %v2646, %v2700
    %v2755 = vmax.f32 %v2647, %v2701
    %v2756 = vmax.f32 %v2648, %v2702
    %v2757 = vmax.f32 %v2649, %v2703
    %v2758 = vmax.f32 %v2650, %v2704
    %v2759 = vmax.f32 %v2651, %v2705
    %v2760 = vmax.f32 %v2652, %v2706
    %v2761 = vmax.f32 %v2653, %v2707
    %v2762 = vmax.f32 %v2654, %v2708
    %v2763 = vmax.f32 %v2655, %v2709
    %v2764 = vmax.f32 %v2656, %v2710
    %v2765 = vmax.f32 %v2657, %v2711
    %v2766 = vmax.f32 %v2658, %v2712
    %v2767 = vmax.f32 %v2659, %v2713
    %v2768 = vmax.f32 %v2660, %v2714
    %v2769 = vmax.f32 %v2661, %v2715
    %v2770 = vld [vmem:[#allocation3 + $0x1b0] sm:$0xff]
    %v2771 = vld [vmem:[#allocation3 + $0x1b8] sm:$0xff]
    %v2772 = vld [vmem:[#allocation3 + $0x1b1] sm:$0xff]
    %v2773 = vld [vmem:[#allocation3 + $0x1b9] sm:$0xff]
    %v2774 = vmax.f32 %v2770, %v2772
    %v2775 = vmax.f32 %v2771, %v2773
    %v2776 = vmax.f32 %v2716, %v2718
    %v2777 = vmax.f32 %v2717, %v2719
    %v2778 = vmax.f32 %v2718, %v2720
    %v2779 = vmax.f32 %v2719, %v2721
    %v2780 = vmax.f32 %v2720, %v2722
    %v2781 = vmax.f32 %v2721, %v2723
    %v2782 = vmax.f32 %v2722, %v2724
    %v2783 = vmax.f32 %v2723, %v2725
    %v2784 = vmax.f32 %v2724, %v2726
    %v2785 = vmax.f32 %v2725, %v2727
    %v2786 = vmax.f32 %v2726, %v2728
    %v2787 = vmax.f32 %v2727, %v2729
    %v2788 = vmax.f32 %v2728, %v2730
    %v2789 = vmax.f32 %v2729, %v2731
    %v2790 = vmax.f32 %v2730, %v2732
    %v2791 = vmax.f32 %v2731, %v2733
    %v2792 = vmax.f32 %v2732, %v2734
    %v2793 = vmax.f32 %v2733, %v2735
    %v2794 = vmax.f32 %v2734, %v2736
    %v2795 = vmax.f32 %v2735, %v2737
    %v2796 = vmax.f32 %v2736, %v2738
    %v2797 = vmax.f32 %v2737, %v2739
    %v2798 = vmax.f32 %v2738, %v2740
    %v2799 = vmax.f32 %v2739, %v2741
    %v2800 = vmax.f32 %v2740, %v2742
    %v2801 = vmax.f32 %v2741, %v2743
    %v2802 = vmax.f32 %v2742, %v2744
    %v2803 = vmax.f32 %v2743, %v2745
    %v2804 = vmax.f32 %v2744, %v2746
    %v2805 = vmax.f32 %v2745, %v2747
    %v2806 = vmax.f32 %v2746, %v2748
    %v2807 = vmax.f32 %v2747, %v2749
    %v2808 = vmax.f32 %v2748, %v2750
    %v2809 = vmax.f32 %v2749, %v2751
    %v2810 = vmax.f32 %v2750, %v2752
    %v2811 = vmax.f32 %v2751, %v2753
    %v2812 = vmax.f32 %v2752, %v2754
    %v2813 = vmax.f32 %v2753, %v2755
    %v2814 = vmax.f32 %v2754, %v2756
    %v2815 = vmax.f32 %v2755, %v2757
    %v2816 = vmax.f32 %v2756, %v2758
    %v2817 = vmax.f32 %v2757, %v2759
    %v2818 = vmax.f32 %v2758, %v2760
    %v2819 = vmax.f32 %v2759, %v2761
    %v2820 = vmax.f32 %v2760, %v2762
    %v2821 = vmax.f32 %v2761, %v2763
    %v2822 = vmax.f32 %v2762, %v2764
    %v2823 = vmax.f32 %v2763, %v2765
    %v2824 = vmax.f32 %v2764, %v2766
    %v2825 = vmax.f32 %v2765, %v2767
    %v2826 = vmax.f32 %v2766, %v2768
    %v2827 = vmax.f32 %v2767, %v2769
    %v2828 = vmax.f32 %v2768, %v2774
    %v2829 = vmax.f32 %v2769, %v2775
    %2830 = vst.msk [vmem:[#allocation4] sm:$0xff] %vm2547, %v2776
    %2831 = vst.msk [vmem:[#allocation4 + $0x8] sm:$0xff] %vm2547, %v2777
    %2832 = vst.msk [vmem:[#allocation4 + $0x10] sm:$0xff] %vm2547, %v2778
    %2833 = vst.msk [vmem:[#allocation4 + $0x18] sm:$0xff] %vm2547, %v2779
    %2834 = vst.msk [vmem:[#allocation4 + $0x20] sm:$0xff] %vm2547, %v2780
    %2835 = vst.msk [vmem:[#allocation4 + $0x28] sm:$0xff] %vm2547, %v2781
    %2836 = vst.msk [vmem:[#allocation4 + $0x30] sm:$0xff] %vm2547, %v2782
    %2837 = vst.msk [vmem:[#allocation4 + $0x38] sm:$0xff] %vm2547, %v2783
    %2838 = vst.msk [vmem:[#allocation4 + $0x40] sm:$0xff] %vm2547, %v2784
    %2839 = vst.msk [vmem:[#allocation4 + $0x48] sm:$0xff] %vm2547, %v2785
    %2840 = vst.msk [vmem:[#allocation4 + $0x50] sm:$0xff] %vm2547, %v2786
    %2841 = vst.msk [vmem:[#allocation4 + $0x58] sm:$0xff] %vm2547, %v2787
    %2842 = vst.msk [vmem:[#allocation4 + $0x60] sm:$0xff] %vm2547, %v2788
    %2843 = vst.msk [vmem:[#allocation4 + $0x68] sm:$0xff] %vm2547, %v2789
    %2844 = vst.msk [vmem:[#allocation4 + $0x70] sm:$0xff] %vm2547, %v2790
    %2845 = vst.msk [vmem:[#allocation4 + $0x78] sm:$0xff] %vm2547, %v2791
    %2846 = vst.msk [vmem:[#allocation4 + $0x80] sm:$0xff] %vm2547, %v2792
    %2847 = vst.msk [vmem:[#allocation4 + $0x88] sm:$0xff] %vm2547, %v2793
    %2848 = vst.msk [vmem:[#allocation4 + $0x90] sm:$0xff] %vm2547, %v2794
    %2849 = vst.msk [vmem:[#allocation4 + $0x98] sm:$0xff] %vm2547, %v2795
    %2850 = vst.msk [vmem:[#allocation4 + $0xa0] sm:$0xff] %vm2547, %v2796
    %2851 = vst.msk [vmem:[#allocation4 + $0xa8] sm:$0xff] %vm2547, %v2797
    %2852 = vst.msk [vmem:[#allocation4 + $0xb0] sm:$0xff] %vm2547, %v2798
    %2853 = vst.msk [vmem:[#allocation4 + $0xb8] sm:$0xff] %vm2547, %v2799
    %2854 = vst.msk [vmem:[#allocation4 + $0xc0] sm:$0xff] %vm2547, %v2800
    %2855 = vst.msk [vmem:[#allocation4 + $0xc8] sm:$0xff] %vm2547, %v2801
    %2856 = vst.msk [vmem:[#allocation4 + $0xd0] sm:$0xff] %vm2547, %v2802
    %2857 = vst.msk [vmem:[#allocation4 + $0xd8] sm:$0xff] %vm2547, %v2803
    %2858 = vst.msk [vmem:[#allocation4 + $0xe0] sm:$0xff] %vm2547, %v2804
    %2859 = vst.msk [vmem:[#allocation4 + $0xe8] sm:$0xff] %vm2547, %v2805
    %2860 = vst.msk [vmem:[#allocation4 + $0xf0] sm:$0xff] %vm2547, %v2806
    %2861 = vst.msk [vmem:[#allocation4 + $0xf8] sm:$0xff] %vm2547, %v2807
    %2862 = vst.msk [vmem:[#allocation4 + $0x100] sm:$0xff] %vm2547, %v2808
    %2863 = vst.msk [vmem:[#allocation4 + $0x108] sm:$0xff] %vm2547, %v2809
    %2864 = vst.msk [vmem:[#allocation4 + $0x110] sm:$0xff] %vm2547, %v2810
    %2865 = vst.msk [vmem:[#allocation4 + $0x118] sm:$0xff] %vm2547, %v2811
    %2866 = vst.msk [vmem:[#allocation4 + $0x120] sm:$0xff] %vm2547, %v2812
    %2867 = vst.msk [vmem:[#allocation4 + $0x128] sm:$0xff] %vm2547, %v2813
    %2868 = vst.msk [vmem:[#allocation4 + $0x130] sm:$0xff] %vm2547, %v2814
    %2869 = vst.msk [vmem:[#allocation4 + $0x138] sm:$0xff] %vm2547, %v2815
    %2870 = vst.msk [vmem:[#allocation4 + $0x140] sm:$0xff] %vm2547, %v2816
    %2871 = vst.msk [vmem:[#allocation4 + $0x148] sm:$0xff] %vm2547, %v2817
    %2872 = vst.msk [vmem:[#allocation4 + $0x150] sm:$0xff] %vm2547, %v2818
    %2873 = vst.msk [vmem:[#allocation4 + $0x158] sm:$0xff] %vm2547, %v2819
    %2874 = vst.msk [vmem:[#allocation4 + $0x160] sm:$0xff] %vm2547, %v2820
    %2875 = vst.msk [vmem:[#allocation4 + $0x168] sm:$0xff] %vm2547, %v2821
    %2876 = vst.msk [vmem:[#allocation4 + $0x170] sm:$0xff] %vm2547, %v2822
    %2877 = vst.msk [vmem:[#allocation4 + $0x178] sm:$0xff] %vm2547, %v2823
    %2878 = vst.msk [vmem:[#allocation4 + $0x180] sm:$0xff] %vm2547, %v2824
    %2879 = vst.msk [vmem:[#allocation4 + $0x188] sm:$0xff] %vm2547, %v2825
    %2880 = vst.msk [vmem:[#allocation4 + $0x190] sm:$0xff] %vm2547, %v2826
    %2881 = vst.msk [vmem:[#allocation4 + $0x198] sm:$0xff] %vm2547, %v2827
    %2882 = vst.msk [vmem:[#allocation4 + $0x1a0] sm:$0xff] %vm2547, %v2828
    %2883 = vst.msk [vmem:[#allocation4 + $0x1a8] sm:$0xff] %vm2547, %v2829
    %s2884 = smul.u32 2304, 1
    %s2885 = sshll.u32 %s2884, 4
    %2886 = dma.done [#allocation6], %s2885
    %v2887 = vld [vmem:[#allocation4] sm:$0x1]
    %v2888 = vld [vmem:[#allocation4 + $0x100] sm:$0x1]
    %v2890 = vrot.slane %v2888, 7
    %vm2892 = vcmask 1040384
    %v2893 = vsel %vm2892, %v2887, %v2890
    %v2894 = vld [vmem:[#allocation5] sm:$0xff]
    %v2895 = vld [vmem:[#allocation5 + $0x8] sm:$0xff]
    %v2896 = vld [vmem:[#allocation5 + $0x10] sm:$0xff]
    %v2897 = vld [vmem:[#allocation5 + $0x18] sm:$0xff]
    %v2898 = vld [vmem:[#allocation5 + $0x20] sm:$0xff]
    %v2899 = vld [vmem:[#allocation5 + $0x28] sm:$0xff]
    %v2900 = vld [vmem:[#allocation5 + $0x30] sm:$0xff]
    %v2901 = vld [vmem:[#allocation5 + $0x38] sm:$0xff]
    %v2902 = vld [vmem:[#allocation4 + $0x2] sm:$0x1]
    %v2903 = vld [vmem:[#allocation4 + $0x102] sm:$0x1]
    %v2905 = vrot.slane %v2903, 7
    %v2907 = vsel %vm2892, %v2902, %v2905
    %v2908 = vld [vmem:[#allocation5 + $0x40] sm:$0xff]
    %v2909 = vld [vmem:[#allocation5 + $0x48] sm:$0xff]
    %v2910 = vld [vmem:[#allocation5 + $0x50] sm:$0xff]
    %v2911 = vld [vmem:[#allocation5 + $0x58] sm:$0xff]
    %v2912 = vld [vmem:[#allocation5 + $0x60] sm:$0xff]
    %v2913 = vld [vmem:[#allocation5 + $0x68] sm:$0xff]
    %v2914 = vld [vmem:[#allocation5 + $0x70] sm:$0xff]
    %v2915 = vld [vmem:[#allocation5 + $0x78] sm:$0xff]
    %v2917 = vsel %vm2547, %v2907, 0
    %2919 = vmatpush.msra.mxu0 0.0
    %2920 = vmatpush.msra.mxu0 0.0
    %2921 = vmatpush.msra.mxu0 0.0
    %2922 = vmatpush.msra.mxu0 0.0
    %2923 = vmatpush.msra.mxu0 0.0
    %2924 = vmatpush.msra.mxu0 0.0
    %2925 = vmatpush.msra.mxu0 0.0
    %2926 = vmatpush.msra.mxu0 0.0
    %2927 = vmatpush.msra.mxu0 %v2915
    %2928 = vmatpush.msra.mxu0 %v2914
    %2929 = vmatpush.msra.mxu0 %v2913
    %2930 = vmatpush.msra.mxu0 %v2912
    %2931 = vmatpush.msra.mxu0 %v2911
    %2932 = vmatpush.msra.mxu0 %v2910
    %2933 = vmatpush.msra.mxu0 %v2909
    %2934 = vmatpush.msra.mxu0 %v2908
    %2935 = vmatmul.f32.gmra.mxu0 %v2917
    %v2936 = vpop.f32.mrf.mxu0
    %v2937 = vadd.f32 0.0, %v2936
    %2938 = vdwg.mxu0
    %v2940 = vsel %vm2547, %v2893, 0
    %2942 = vmatpush.msra.mxu0 0.0
    %2943 = vmatpush.msra.mxu0 0.0
    %2944 = vmatpush.msra.mxu0 0.0
    %2945 = vmatpush.msra.mxu0 0.0
    %2946 = vmatpush.msra.mxu0 0.0
    %2947 = vmatpush.msra.mxu0 0.0
    %2948 = vmatpush.msra.mxu0 0.0
    %2949 = vmatpush.msra.mxu0 0.0
    %2950 = vmatpush.msra.mxu0 %v2901
    %2951 = vmatpush.msra.mxu0 %v2900
    %2952 = vmatpush.msra.mxu0 %v2899
    %2953 = vmatpush.msra.mxu0 %v2898
    %2954 = vmatpush.msra.mxu0 %v2897
    %2955 = vmatpush.msra.mxu0 %v2896
    %2956 = vmatpush.msra.mxu0 %v2895
    %2957 = vmatpush.msra.mxu0 %v2894
    %2958 = vmatmul.f32.gmra.mxu0 %v2940
    %v2959 = vpop.f32.mrf.mxu0
    %v2960 = vadd.f32 %v2937, %v2959
    %2961 = vdwg.mxu0
    %v2962 = vld [vmem:[#allocation4 + $0x4] sm:$0x1]
    %v2963 = vld [vmem:[#allocation4 + $0x104] sm:$0x1]
    %v2965 = vrot.slane %v2963, 7
    %v2967 = vsel %vm2892, %v2962, %v2965
    %v2968 = vld [vmem:[#allocation5 + $0x80] sm:$0xff]
    %v2969 = vld [vmem:[#allocation5 + $0x88] sm:$0xff]
    %v2970 = vld [vmem:[#allocation5 + $0x90] sm:$0xff]
    %v2971 = vld [vmem:[#allocation5 + $0x98] sm:$0xff]
    %v2972 = vld [vmem:[#allocation5 + $0xa0] sm:$0xff]
    %v2973 = vld [vmem:[#allocation5 + $0xa8] sm:$0xff]
    %v2974 = vld [vmem:[#allocation5 + $0xb0] sm:$0xff]
    %v2975 = vld [vmem:[#allocation5 + $0xb8] sm:$0xff]
    %v2977 = vsel %vm2547, %v2967, 0
    %2979 = vmatpush.msra.mxu0 0.0
    %2980 = vmatpush.msra.mxu0 0.0
    %2981 = vmatpush.msra.mxu0 0.0
    %2982 = vmatpush.msra.mxu0 0.0
    %2983 = vmatpush.msra.mxu0 0.0
    %2984 = vmatpush.msra.mxu0 0.0
    %2985 = vmatpush.msra.mxu0 0.0
    %2986 = vmatpush.msra.mxu0 0.0
    %2987 = vmatpush.msra.mxu0 %v2975
    %2988 = vmatpush.msra.mxu0 %v2974
    %2989 = vmatpush.msra.mxu0 %v2973
    %2990 = vmatpush.msra.mxu0 %v2972
    %2991 = vmatpush.msra.mxu0 %v2971
    %2992 = vmatpush.msra.mxu0 %v2970
    %2993 = vmatpush.msra.mxu0 %v2969
    %2994 = vmatpush.msra.mxu0 %v2968
    %2995 = vmatmul.f32.gmra.mxu0 %v2977
    %v2996 = vpop.f32.mrf.mxu0
    %v2997 = vadd.f32 0.0, %v2996
    %2998 = vdwg.mxu0
    %v2999 = vadd.f32 %v2960, %v2997
    %v3000 = vld [vmem:[#allocation4 + $0x6] sm:$0x1]
    %v3001 = vld [vmem:[#allocation4 + $0x106] sm:$0x1]
    %v3003 = vrot.slane %v3001, 7
    %v3005 = vsel %vm2892, %v3000, %v3003
    %v3006 = vld [vmem:[#allocation5 + $0xc0] sm:$0xff]
    %v3007 = vld [vmem:[#allocation5 + $0xc8] sm:$0xff]
    %v3008 = vld [vmem:[#allocation5 + $0xd0] sm:$0xff]
    %v3009 = vld [vmem:[#allocation5 + $0xd8] sm:$0xff]
    %v3010 = vld [vmem:[#allocation5 + $0xe0] sm:$0xff]
    %v3011 = vld [vmem:[#allocation5 + $0xe8] sm:$0xff]
    %v3012 = vld [vmem:[#allocation5 + $0xf0] sm:$0xff]
    %v3013 = vld [vmem:[#allocation5 + $0xf8] sm:$0xff]
    %v3015 = vsel %vm2547, %v3005, 0
    %3017 = vmatpush.msra.mxu0 0.0
    %3018 = vmatpush.msra.mxu0 0.0
    %3019 = vmatpush.msra.mxu0 0.0
    %3020 = vmatpush.msra.mxu0 0.0
    %3021 = vmatpush.msra.mxu0 0.0
    %3022 = vmatpush.msra.mxu0 0.0
    %3023 = vmatpush.msra.mxu0 0.0
    %3024 = vmatpush.msra.mxu0 0.0
    %3025 = vmatpush.msra.mxu0 %v3013
    %3026 = vmatpush.msra.mxu0 %v3012
    %3027 = vmatpush.msra.mxu0 %v3011
    %3028 = vmatpush.msra.mxu0 %v3010
    %3029 = vmatpush.msra.mxu0 %v3009
    %3030 = vmatpush.msra.mxu0 %v3008
    %3031 = vmatpush.msra.mxu0 %v3007
    %3032 = vmatpush.msra.mxu0 %v3006
    %3033 = vmatmul.f32.gmra.mxu0 %v3015
    %v3034 = vpop.f32.mrf.mxu0
    %v3035 = vadd.f32 0.0, %v3034
    %3036 = vdwg.mxu0
    %v3037 = vadd.f32 %v2999, %v3035
    %v3038 = vld [vmem:[#allocation4 + $0x8] sm:$0x1]
    %v3039 = vld [vmem:[#allocation4 + $0x108] sm:$0x1]
    %v3041 = vrot.slane %v3039, 7
    %v3043 = vsel %vm2892, %v3038, %v3041
    %v3044 = vld [vmem:[#allocation5 + $0x100] sm:$0xff]
    %v3045 = vld [vmem:[#allocation5 + $0x108] sm:$0xff]
    %v3046 = vld [vmem:[#allocation5 + $0x110] sm:$0xff]
    %v3047 = vld [vmem:[#allocation5 + $0x118] sm:$0xff]
    %v3048 = vld [vmem:[#allocation5 + $0x120] sm:$0xff]
    %v3049 = vld [vmem:[#allocation5 + $0x128] sm:$0xff]
    %v3050 = vld [vmem:[#allocation5 + $0x130] sm:$0xff]
    %v3051 = vld [vmem:[#allocation5 + $0x138] sm:$0xff]
    %v3053 = vsel %vm2547, %v3043, 0
    %3055 = vmatpush.msra.mxu0 0.0
    %3056 = vmatpush.msra.mxu0 0.0
    %3057 = vmatpush.msra.mxu0 0.0
    %3058 = vmatpush.msra.mxu0 0.0
    %3059 = vmatpush.msra.mxu0 0.0
    %3060 = vmatpush.msra.mxu0 0.0
    %3061 = vmatpush.msra.mxu0 0.0
    %3062 = vmatpush.msra.mxu0 0.0
    %3063 = vmatpush.msra.mxu0 %v3051
    %3064 = vmatpush.msra.mxu0 %v3050
    %3065 = vmatpush.msra.mxu0 %v3049
    %3066 = vmatpush.msra.mxu0 %v3048
    %3067 = vmatpush.msra.mxu0 %v3047
    %3068 = vmatpush.msra.mxu0 %v3046
    %3069 = vmatpush.msra.mxu0 %v3045
    %3070 = vmatpush.msra.mxu0 %v3044
    %3071 = vmatmul.f32.gmra.mxu0 %v3053
    %v3072 = vpop.f32.mrf.mxu0
    %v3073 = vadd.f32 0.0, %v3072
    %3074 = vdwg.mxu0
    %v3075 = vadd.f32 %v3037, %v3073
    %v3076 = vld [vmem:[#allocation4 + $0xa] sm:$0x1]
    %v3077 = vld [vmem:[#allocation4 + $0x10a] sm:$0x1]
    %v3079 = vrot.slane %v3077, 7
    %v3081 = vsel %vm2892, %v3076, %v3079
    %v3082 = vld [vmem:[#allocation5 + $0x140] sm:$0xff]
    %v3083 = vld [vmem:[#allocation5 + $0x148] sm:$0xff]
    %v3084 = vld [vmem:[#allocation5 + $0x150] sm:$0xff]
    %v3085 = vld [vmem:[#allocation5 + $0x158] sm:$0xff]
    %v3086 = vld [vmem:[#allocation5 + $0x160] sm:$0xff]
    %v3087 = vld [vmem:[#allocation5 + $0x168] sm:$0xff]
    %v3088 = vld [vmem:[#allocation5 + $0x170] sm:$0xff]
    %v3089 = vld [vmem:[#allocation5 + $0x178] sm:$0xff]
    %v3091 = vsel %vm2547, %v3081, 0
    %3093 = vmatpush.msra.mxu0 0.0
    %3094 = vmatpush.msra.mxu0 0.0
    %3095 = vmatpush.msra.mxu0 0.0
    %3096 = vmatpush.msra.mxu0 0.0
    %3097 = vmatpush.msra.mxu0 0.0
    %3098 = vmatpush.msra.mxu0 0.0
    %3099 = vmatpush.msra.mxu0 0.0
    %3100 = vmatpush.msra.mxu0 0.0
    %3101 = vmatpush.msra.mxu0 %v3089
    %3102 = vmatpush.msra.mxu0 %v3088
    %3103 = vmatpush.msra.mxu0 %v3087
    %3104 = vmatpush.msra.mxu0 %v3086
    %3105 = vmatpush.msra.mxu0 %v3085
    %3106 = vmatpush.msra.mxu0 %v3084
    %3107 = vmatpush.msra.mxu0 %v3083
    %3108 = vmatpush.msra.mxu0 %v3082
    %3109 = vmatmul.f32.gmra.mxu0 %v3091
    %v3110 = vpop.f32.mrf.mxu0
    %v3111 = vadd.f32 0.0, %v3110
    %3112 = vdwg.mxu0
    %v3113 = vadd.f32 %v3075, %v3111
    %v3114 = vld [vmem:[#allocation4 + $0x20] sm:$0x1]
    %v3115 = vld [vmem:[#allocation4 + $0x120] sm:$0x1]
    %v3117 = vrot.slane %v3115, 7
    %v3119 = vsel %vm2892, %v3114, %v3117
    %v3120 = vld [vmem:[#allocation5 + $0x180] sm:$0xff]
    %v3121 = vld [vmem:[#allocation5 + $0x188] sm:$0xff]
    %v3122 = vld [vmem:[#allocation5 + $0x190] sm:$0xff]
    %v3123 = vld [vmem:[#allocation5 + $0x198] sm:$0xff]
    %v3124 = vld [vmem:[#allocation5 + $0x1a0] sm:$0xff]
    %v3125 = vld [vmem:[#allocation5 + $0x1a8] sm:$0xff]
    %v3126 = vld [vmem:[#allocation5 + $0x1b0] sm:$0xff]
    %v3127 = vld [vmem:[#allocation5 + $0x1b8] sm:$0xff]
    %v3129 = vsel %vm2547, %v3119, 0
    %3131 = vmatpush.msra.mxu0 0.0
    %3132 = vmatpush.msra.mxu0 0.0
    %3133 = vmatpush.msra.mxu0 0.0
    %3134 = vmatpush.msra.mxu0 0.0
    %3135 = vmatpush.msra.mxu0 0.0
    %3136 = vmatpush.msra.mxu0 0.0
    %3137 = vmatpush.msra.mxu0 0.0
    %3138 = vmatpush.msra.mxu0 0.0
    %3139 = vmatpush.msra.mxu0 %v3127
    %3140 = vmatpush.msra.mxu0 %v3126
    %3141 = vmatpush.msra.mxu0 %v3125
    %3142 = vmatpush.msra.mxu0 %v3124
    %3143 = vmatpush.msra.mxu0 %v3123
    %3144 = vmatpush.msra.mxu0 %v3122
    %3145 = vmatpush.msra.mxu0 %v3121
    %3146 = vmatpush.msra.mxu0 %v3120
    %3147 = vmatmul.f32.gmra.mxu0 %v3129
    %v3148 = vpop.f32.mrf.mxu0
    %v3149 = vadd.f32 0.0, %v3148
    %3150 = vdwg.mxu0
    %v3151 = vadd.f32 %v3113, %v3149
    %v3152 = vld [vmem:[#allocation4 + $0x22] sm:$0x1]
    %v3153 = vld [vmem:[#allocation4 + $0x122] sm:$0x1]
    %v3155 = vrot.slane %v3153, 7
    %v3157 = vsel %vm2892, %v3152, %v3155
    %v3158 = vld [vmem:[#allocation5 + $0x1c0] sm:$0xff]
    %v3159 = vld [vmem:[#allocation5 + $0x1c8] sm:$0xff]
    %v3160 = vld [vmem:[#allocation5 + $0x1d0] sm:$0xff]
    %v3161 = vld [vmem:[#allocation5 + $0x1d8] sm:$0xff]
    %v3162 = vld [vmem:[#allocation5 + $0x1e0] sm:$0xff]
    %v3163 = vld [vmem:[#allocation5 + $0x1e8] sm:$0xff]
    %v3164 = vld [vmem:[#allocation5 + $0x1f0] sm:$0xff]
    %v3165 = vld [vmem:[#allocation5 + $0x1f8] sm:$0xff]
    %v3167 = vsel %vm2547, %v3157, 0
    %3169 = vmatpush.msra.mxu0 0.0
    %3170 = vmatpush.msra.mxu0 0.0
    %3171 = vmatpush.msra.mxu0 0.0
    %3172 = vmatpush.msra.mxu0 0.0
    %3173 = vmatpush.msra.mxu0 0.0
    %3174 = vmatpush.msra.mxu0 0.0
    %3175 = vmatpush.msra.mxu0 0.0
    %3176 = vmatpush.msra.mxu0 0.0
    %3177 = vmatpush.msra.mxu0 %v3165
    %3178 = vmatpush.msra.mxu0 %v3164
    %3179 = vmatpush.msra.mxu0 %v3163
    %3180 = vmatpush.msra.mxu0 %v3162
    %3181 = vmatpush.msra.mxu0 %v3161
    %3182 = vmatpush.msra.mxu0 %v3160
    %3183 = vmatpush.msra.mxu0 %v3159
    %3184 = vmatpush.msra.mxu0 %v3158
    %3185 = vmatmul.f32.gmra.mxu0 %v3167
    %v3186 = vpop.f32.mrf.mxu0
    %v3187 = vadd.f32 0.0, %v3186
    %3188 = vdwg.mxu0
    %v3189 = vadd.f32 %v3151, %v3187
    %v3190 = vld [vmem:[#allocation4 + $0x24] sm:$0x1]
    %v3191 = vld [vmem:[#allocation4 + $0x124] sm:$0x1]
    %v3193 = vrot.slane %v3191, 7
    %v3195 = vsel %vm2892, %v3190, %v3193
    %v3196 = vld [vmem:[#allocation5 + $0x200] sm:$0xff]
    %v3197 = vld [vmem:[#allocation5 + $0x208] sm:$0xff]
    %v3198 = vld [vmem:[#allocation5 + $0x210] sm:$0xff]
    %v3199 = vld [vmem:[#allocation5 + $0x218] sm:$0xff]
    %v3200 = vld [vmem:[#allocation5 + $0x220] sm:$0xff]
    %v3201 = vld [vmem:[#allocation5 + $0x228] sm:$0xff]
    %v3202 = vld [vmem:[#allocation5 + $0x230] sm:$0xff]
    %v3203 = vld [vmem:[#allocation5 + $0x238] sm:$0xff]
    %v3205 = vsel %vm2547, %v3195, 0
    %3207 = vmatpush.msra.mxu0 0.0
    %3208 = vmatpush.msra.mxu0 0.0
    %3209 = vmatpush.msra.mxu0 0.0
    %3210 = vmatpush.msra.mxu0 0.0
    %3211 = vmatpush.msra.mxu0 0.0
    %3212 = vmatpush.msra.mxu0 0.0
    %3213 = vmatpush.msra.mxu0 0.0
    %3214 = vmatpush.msra.mxu0 0.0
    %3215 = vmatpush.msra.mxu0 %v3203
    %3216 = vmatpush.msra.mxu0 %v3202
    %3217 = vmatpush.msra.mxu0 %v3201
    %3218 = vmatpush.msra.mxu0 %v3200
    %3219 = vmatpush.msra.mxu0 %v3199
    %3220 = vmatpush.msra.mxu0 %v3198
    %3221 = vmatpush.msra.mxu0 %v3197
    %3222 = vmatpush.msra.mxu0 %v3196
    %3223 = vmatmul.f32.gmra.mxu0 %v3205
    %v3224 = vpop.f32.mrf.mxu0
    %v3225 = vadd.f32 0.0, %v3224
    %3226 = vdwg.mxu0
    %v3227 = vadd.f32 %v3189, %v3225
    %v3228 = vld [vmem:[#allocation4 + $0x26] sm:$0x1]
    %v3229 = vld [vmem:[#allocation4 + $0x126] sm:$0x1]
    %v3231 = vrot.slane %v3229, 7
    %v3233 = vsel %vm2892, %v3228, %v3231
    %v3234 = vld [vmem:[#allocation5 + $0x240] sm:$0xff]
    %v3235 = vld [vmem:[#allocation5 + $0x248] sm:$0xff]
    %v3236 = vld [vmem:[#allocation5 + $0x250] sm:$0xff]
    %v3237 = vld [vmem:[#allocation5 + $0x258] sm:$0xff]
    %v3238 = vld [vmem:[#allocation5 + $0x260] sm:$0xff]
    %v3239 = vld [vmem:[#allocation5 + $0x268] sm:$0xff]
    %v3240 = vld [vmem:[#allocation5 + $0x270] sm:$0xff]
    %v3241 = vld [vmem:[#allocation5 + $0x278] sm:$0xff]
    %v3243 = vsel %vm2547, %v3233, 0
    %3245 = vmatpush.msra.mxu0 0.0
    %3246 = vmatpush.msra.mxu0 0.0
    %3247 = vmatpush.msra.mxu0 0.0
    %3248 = vmatpush.msra.mxu0 0.0
    %3249 = vmatpush.msra.mxu0 0.0
    %3250 = vmatpush.msra.mxu0 0.0
    %3251 = vmatpush.msra.mxu0 0.0
    %3252 = vmatpush.msra.mxu0 0.0
    %3253 = vmatpush.msra.mxu0 %v3241
    %3254 = vmatpush.msra.mxu0 %v3240
    %3255 = vmatpush.msra.mxu0 %v3239
    %3256 = vmatpush.msra.mxu0 %v3238
    %3257 = vmatpush.msra.mxu0 %v3237
    %3258 = vmatpush.msra.mxu0 %v3236
    %3259 = vmatpush.msra.mxu0 %v3235
    %3260 = vmatpush.msra.mxu0 %v3234
    %3261 = vmatmul.f32.gmra.mxu0 %v3243
    %v3262 = vpop.f32.mrf.mxu0
    %v3263 = vadd.f32 0.0, %v3262
    %3264 = vdwg.mxu0
    %v3265 = vadd.f32 %v3227, %v3263
    %v3266 = vld [vmem:[#allocation4 + $0x28] sm:$0x1]
    %v3267 = vld [vmem:[#allocation4 + $0x128] sm:$0x1]
    %v3269 = vrot.slane %v3267, 7
    %v3271 = vsel %vm2892, %v3266, %v3269
    %v3272 = vld [vmem:[#allocation5 + $0x280] sm:$0xff]
    %v3273 = vld [vmem:[#allocation5 + $0x288] sm:$0xff]
    %v3274 = vld [vmem:[#allocation5 + $0x290] sm:$0xff]
    %v3275 = vld [vmem:[#allocation5 + $0x298] sm:$0xff]
    %v3276 = vld [vmem:[#allocation5 + $0x2a0] sm:$0xff]
    %v3277 = vld [vmem:[#allocation5 + $0x2a8] sm:$0xff]
    %v3278 = vld [vmem:[#allocation5 + $0x2b0] sm:$0xff]
    %v3279 = vld [vmem:[#allocation5 + $0x2b8] sm:$0xff]
    %v3281 = vsel %vm2547, %v3271, 0
    %3283 = vmatpush.msra.mxu0 0.0
    %3284 = vmatpush.msra.mxu0 0.0
    %3285 = vmatpush.msra.mxu0 0.0
    %3286 = vmatpush.msra.mxu0 0.0
    %3287 = vmatpush.msra.mxu0 0.0
    %3288 = vmatpush.msra.mxu0 0.0
    %3289 = vmatpush.msra.mxu0 0.0
    %3290 = vmatpush.msra.mxu0 0.0
    %3291 = vmatpush.msra.mxu0 %v3279
    %3292 = vmatpush.msra.mxu0 %v3278
    %3293 = vmatpush.msra.mxu0 %v3277
    %3294 = vmatpush.msra.mxu0 %v3276
    %3295 = vmatpush.msra.mxu0 %v3275
    %3296 = vmatpush.msra.mxu0 %v3274
    %3297 = vmatpush.msra.mxu0 %v3273
    %3298 = vmatpush.msra.mxu0 %v3272
    %3299 = vmatmul.f32.gmra.mxu0 %v3281
    %v3300 = vpop.f32.mrf.mxu0
    %v3301 = vadd.f32 0.0, %v3300
    %3302 = vdwg.mxu0
    %v3303 = vadd.f32 %v3265, %v3301
    %v3304 = vld [vmem:[#allocation4 + $0x2a] sm:$0x1]
    %v3305 = vld [vmem:[#allocation4 + $0x12a] sm:$0x1]
    %v3307 = vrot.slane %v3305, 7
    %v3309 = vsel %vm2892, %v3304, %v3307
    %v3310 = vld [vmem:[#allocation5 + $0x2c0] sm:$0xff]
    %v3311 = vld [vmem:[#allocation5 + $0x2c8] sm:$0xff]
    %v3312 = vld [vmem:[#allocation5 + $0x2d0] sm:$0xff]
    %v3313 = vld [vmem:[#allocation5 + $0x2d8] sm:$0xff]
    %v3314 = vld [vmem:[#allocation5 + $0x2e0] sm:$0xff]
    %v3315 = vld [vmem:[#allocation5 + $0x2e8] sm:$0xff]
    %v3316 = vld [vmem:[#allocation5 + $0x2f0] sm:$0xff]
    %v3317 = vld [vmem:[#allocation5 + $0x2f8] sm:$0xff]
    %v3319 = vsel %vm2547, %v3309, 0
    %3321 = vmatpush.msra.mxu0 0.0
    %3322 = vmatpush.msra.mxu0 0.0
    %3323 = vmatpush.msra.mxu0 0.0
    %3324 = vmatpush.msra.mxu0 0.0
    %3325 = vmatpush.msra.mxu0 0.0
    %3326 = vmatpush.msra.mxu0 0.0
    %3327 = vmatpush.msra.mxu0 0.0
    %3328 = vmatpush.msra.mxu0 0.0
    %3329 = vmatpush.msra.mxu0 %v3317
    %3330 = vmatpush.msra.mxu0 %v3316
    %3331 = vmatpush.msra.mxu0 %v3315
    %3332 = vmatpush.msra.mxu0 %v3314
    %3333 = vmatpush.msra.mxu0 %v3313
    %3334 = vmatpush.msra.mxu0 %v3312
    %3335 = vmatpush.msra.mxu0 %v3311
    %3336 = vmatpush.msra.mxu0 %v3310
    %3337 = vmatmul.f32.gmra.mxu0 %v3319
    %v3338 = vpop.f32.mrf.mxu0
    %v3339 = vadd.f32 0.0, %v3338
    %3340 = vdwg.mxu0
    %v3341 = vadd.f32 %v3303, %v3339
    %v3342 = vld [vmem:[#allocation4 + $0x40] sm:$0x1]
    %v3343 = vld [vmem:[#allocation4 + $0x140] sm:$0x1]
    %v3345 = vrot.slane %v3343, 7
    %v3347 = vsel %vm2892, %v3342, %v3345
    %v3348 = vld [vmem:[#allocation5 + $0x300] sm:$0xff]
    %v3349 = vld [vmem:[#allocation5 + $0x308] sm:$0xff]
    %v3350 = vld [vmem:[#allocation5 + $0x310] sm:$0xff]
    %v3351 = vld [vmem:[#allocation5 + $0x318] sm:$0xff]
    %v3352 = vld [vmem:[#allocation5 + $0x320] sm:$0xff]
    %v3353 = vld [vmem:[#allocation5 + $0x328] sm:$0xff]
    %v3354 = vld [vmem:[#allocation5 + $0x330] sm:$0xff]
    %v3355 = vld [vmem:[#allocation5 + $0x338] sm:$0xff]
    %v3357 = vsel %vm2547, %v3347, 0
    %3359 = vmatpush.msra.mxu0 0.0
    %3360 = vmatpush.msra.mxu0 0.0
    %3361 = vmatpush.msra.mxu0 0.0
    %3362 = vmatpush.msra.mxu0 0.0
    %3363 = vmatpush.msra.mxu0 0.0
    %3364 = vmatpush.msra.mxu0 0.0
    %3365 = vmatpush.msra.mxu0 0.0
    %3366 = vmatpush.msra.mxu0 0.0
    %3367 = vmatpush.msra.mxu0 %v3355
    %3368 = vmatpush.msra.mxu0 %v3354
    %3369 = vmatpush.msra.mxu0 %v3353
    %3370 = vmatpush.msra.mxu0 %v3352
    %3371 = vmatpush.msra.mxu0 %v3351
    %3372 = vmatpush.msra.mxu0 %v3350
    %3373 = vmatpush.msra.mxu0 %v3349
    %3374 = vmatpush.msra.mxu0 %v3348
    %3375 = vmatmul.f32.gmra.mxu0 %v3357
    %v3376 = vpop.f32.mrf.mxu0
    %v3377 = vadd.f32 0.0, %v3376
    %3378 = vdwg.mxu0
    %v3379 = vadd.f32 %v3341, %v3377
    %v3380 = vld [vmem:[#allocation4 + $0x42] sm:$0x1]
    %v3381 = vld [vmem:[#allocation4 + $0x142] sm:$0x1]
    %v3383 = vrot.slane %v3381, 7
    %v3385 = vsel %vm2892, %v3380, %v3383
    %v3386 = vld [vmem:[#allocation5 + $0x340] sm:$0xff]
    %v3387 = vld [vmem:[#allocation5 + $0x348] sm:$0xff]
    %v3388 = vld [vmem:[#allocation5 + $0x350] sm:$0xff]
    %v3389 = vld [vmem:[#allocation5 + $0x358] sm:$0xff]
    %v3390 = vld [vmem:[#allocation5 + $0x360] sm:$0xff]
    %v3391 = vld [vmem:[#allocation5 + $0x368] sm:$0xff]
    %v3392 = vld [vmem:[#allocation5 + $0x370] sm:$0xff]
    %v3393 = vld [vmem:[#allocation5 + $0x378] sm:$0xff]
    %v3395 = vsel %vm2547, %v3385, 0
    %3397 = vmatpush.msra.mxu0 0.0
    %3398 = vmatpush.msra.mxu0 0.0
    %3399 = vmatpush.msra.mxu0 0.0
    %3400 = vmatpush.msra.mxu0 0.0
    %3401 = vmatpush.msra.mxu0 0.0
    %3402 = vmatpush.msra.mxu0 0.0
    %3403 = vmatpush.msra.mxu0 0.0
    %3404 = vmatpush.msra.mxu0 0.0
    %3405 = vmatpush.msra.mxu0 %v3393
    %3406 = vmatpush.msra.mxu0 %v3392
    %3407 = vmatpush.msra.mxu0 %v3391
    %3408 = vmatpush.msra.mxu0 %v3390
    %3409 = vmatpush.msra.mxu0 %v3389
    %3410 = vmatpush.msra.mxu0 %v3388
    %3411 = vmatpush.msra.mxu0 %v3387
    %3412 = vmatpush.msra.mxu0 %v3386
    %3413 = vmatmul.f32.gmra.mxu0 %v3395
    %v3414 = vpop.f32.mrf.mxu0
    %v3415 = vadd.f32 0.0, %v3414
    %3416 = vdwg.mxu0
    %v3417 = vadd.f32 %v3379, %v3415
    %v3418 = vld [vmem:[#allocation4 + $0x44] sm:$0x1]
    %v3419 = vld [vmem:[#allocation4 + $0x144] sm:$0x1]
    %v3421 = vrot.slane %v3419, 7
    %v3423 = vsel %vm2892, %v3418, %v3421
    %v3424 = vld [vmem:[#allocation5 + $0x380] sm:$0xff]
    %v3425 = vld [vmem:[#allocation5 + $0x388] sm:$0xff]
    %v3426 = vld [vmem:[#allocation5 + $0x390] sm:$0xff]
    %v3427 = vld [vmem:[#allocation5 + $0x398] sm:$0xff]
    %v3428 = vld [vmem:[#allocation5 + $0x3a0] sm:$0xff]
    %v3429 = vld [vmem:[#allocation5 + $0x3a8] sm:$0xff]
    %v3430 = vld [vmem:[#allocation5 + $0x3b0] sm:$0xff]
    %v3431 = vld [vmem:[#allocation5 + $0x3b8] sm:$0xff]
    %v3433 = vsel %vm2547, %v3423, 0
    %3435 = vmatpush.msra.mxu0 0.0
    %3436 = vmatpush.msra.mxu0 0.0
    %3437 = vmatpush.msra.mxu0 0.0
    %3438 = vmatpush.msra.mxu0 0.0
    %3439 = vmatpush.msra.mxu0 0.0
    %3440 = vmatpush.msra.mxu0 0.0
    %3441 = vmatpush.msra.mxu0 0.0
    %3442 = vmatpush.msra.mxu0 0.0
    %3443 = vmatpush.msra.mxu0 %v3431
    %3444 = vmatpush.msra.mxu0 %v3430
    %3445 = vmatpush.msra.mxu0 %v3429
    %3446 = vmatpush.msra.mxu0 %v3428
    %3447 = vmatpush.msra.mxu0 %v3427
    %3448 = vmatpush.msra.mxu0 %v3426
    %3449 = vmatpush.msra.mxu0 %v3425
    %3450 = vmatpush.msra.mxu0 %v3424
    %3451 = vmatmul.f32.gmra.mxu0 %v3433
    %v3452 = vpop.f32.mrf.mxu0
    %v3453 = vadd.f32 0.0, %v3452
    %3454 = vdwg.mxu0
    %v3455 = vadd.f32 %v3417, %v3453
    %v3456 = vld [vmem:[#allocation4 + $0x46] sm:$0x1]
    %v3457 = vld [vmem:[#allocation4 + $0x146] sm:$0x1]
    %v3459 = vrot.slane %v3457, 7
    %v3461 = vsel %vm2892, %v3456, %v3459
    %v3462 = vld [vmem:[#allocation5 + $0x3c0] sm:$0xff]
    %v3463 = vld [vmem:[#allocation5 + $0x3c8] sm:$0xff]
    %v3464 = vld [vmem:[#allocation5 + $0x3d0] sm:$0xff]
    %v3465 = vld [vmem:[#allocation5 + $0x3d8] sm:$0xff]
    %v3466 = vld [vmem:[#allocation5 + $0x3e0] sm:$0xff]
    %v3467 = vld [vmem:[#allocation5 + $0x3e8] sm:$0xff]
    %v3468 = vld [vmem:[#allocation5 + $0x3f0] sm:$0xff]
    %v3469 = vld [vmem:[#allocation5 + $0x3f8] sm:$0xff]
    %v3471 = vsel %vm2547, %v3461, 0
    %3473 = vmatpush.msra.mxu0 0.0
    %3474 = vmatpush.msra.mxu0 0.0
    %3475 = vmatpush.msra.mxu0 0.0
    %3476 = vmatpush.msra.mxu0 0.0
    %3477 = vmatpush.msra.mxu0 0.0
    %3478 = vmatpush.msra.mxu0 0.0
    %3479 = vmatpush.msra.mxu0 0.0
    %3480 = vmatpush.msra.mxu0 0.0
    %3481 = vmatpush.msra.mxu0 %v3469
    %3482 = vmatpush.msra.mxu0 %v3468
    %3483 = vmatpush.msra.mxu0 %v3467
    %3484 = vmatpush.msra.mxu0 %v3466
    %3485 = vmatpush.msra.mxu0 %v3465
    %3486 = vmatpush.msra.mxu0 %v3464
    %3487 = vmatpush.msra.mxu0 %v3463
    %3488 = vmatpush.msra.mxu0 %v3462
    %3489 = vmatmul.f32.gmra.mxu0 %v3471
    %v3490 = vpop.f32.mrf.mxu0
    %v3491 = vadd.f32 0.0, %v3490
    %3492 = vdwg.mxu0
    %v3493 = vadd.f32 %v3455, %v3491
    %v3494 = vld [vmem:[#allocation4 + $0x48] sm:$0x1]
    %v3495 = vld [vmem:[#allocation4 + $0x148] sm:$0x1]
    %v3497 = vrot.slane %v3495, 7
    %v3499 = vsel %vm2892, %v3494, %v3497
    %v3500 = vld [vmem:[#allocation5 + $0x400] sm:$0xff]
    %v3501 = vld [vmem:[#allocation5 + $0x408] sm:$0xff]
    %v3502 = vld [vmem:[#allocation5 + $0x410] sm:$0xff]
    %v3503 = vld [vmem:[#allocation5 + $0x418] sm:$0xff]
    %v3504 = vld [vmem:[#allocation5 + $0x420] sm:$0xff]
    %v3505 = vld [vmem:[#allocation5 + $0x428] sm:$0xff]
    %v3506 = vld [vmem:[#allocation5 + $0x430] sm:$0xff]
    %v3507 = vld [vmem:[#allocation5 + $0x438] sm:$0xff]
    %v3509 = vsel %vm2547, %v3499, 0
    %3511 = vmatpush.msra.mxu0 0.0
    %3512 = vmatpush.msra.mxu0 0.0
    %3513 = vmatpush.msra.mxu0 0.0
    %3514 = vmatpush.msra.mxu0 0.0
    %3515 = vmatpush.msra.mxu0 0.0
    %3516 = vmatpush.msra.mxu0 0.0
    %3517 = vmatpush.msra.mxu0 0.0
    %3518 = vmatpush.msra.mxu0 0.0
    %3519 = vmatpush.msra.mxu0 %v3507
    %3520 = vmatpush.msra.mxu0 %v3506
    %3521 = vmatpush.msra.mxu0 %v3505
    %3522 = vmatpush.msra.mxu0 %v3504
    %3523 = vmatpush.msra.mxu0 %v3503
    %3524 = vmatpush.msra.mxu0 %v3502
    %3525 = vmatpush.msra.mxu0 %v3501
    %3526 = vmatpush.msra.mxu0 %v3500
    %3527 = vmatmul.f32.gmra.mxu0 %v3509
    %v3528 = vpop.f32.mrf.mxu0
    %v3529 = vadd.f32 0.0, %v3528
    %3530 = vdwg.mxu0
    %v3531 = vadd.f32 %v3493, %v3529
    %v3532 = vld [vmem:[#allocation4 + $0x4a] sm:$0x1]
    %v3533 = vld [vmem:[#allocation4 + $0x14a] sm:$0x1]
    %v3535 = vrot.slane %v3533, 7
    %v3537 = vsel %vm2892, %v3532, %v3535
    %v3538 = vld [vmem:[#allocation5 + $0x440] sm:$0xff]
    %v3539 = vld [vmem:[#allocation5 + $0x448] sm:$0xff]
    %v3540 = vld [vmem:[#allocation5 + $0x450] sm:$0xff]
    %v3541 = vld [vmem:[#allocation5 + $0x458] sm:$0xff]
    %v3542 = vld [vmem:[#allocation5 + $0x460] sm:$0xff]
    %v3543 = vld [vmem:[#allocation5 + $0x468] sm:$0xff]
    %v3544 = vld [vmem:[#allocation5 + $0x470] sm:$0xff]
    %v3545 = vld [vmem:[#allocation5 + $0x478] sm:$0xff]
    %v3547 = vsel %vm2547, %v3537, 0
    %3549 = vmatpush.msra.mxu0 0.0
    %3550 = vmatpush.msra.mxu0 0.0
    %3551 = vmatpush.msra.mxu0 0.0
    %3552 = vmatpush.msra.mxu0 0.0
    %3553 = vmatpush.msra.mxu0 0.0
    %3554 = vmatpush.msra.mxu0 0.0
    %3555 = vmatpush.msra.mxu0 0.0
    %3556 = vmatpush.msra.mxu0 0.0
    %3557 = vmatpush.msra.mxu0 %v3545
    %3558 = vmatpush.msra.mxu0 %v3544
    %3559 = vmatpush.msra.mxu0 %v3543
    %3560 = vmatpush.msra.mxu0 %v3542
    %3561 = vmatpush.msra.mxu0 %v3541
    %3562 = vmatpush.msra.mxu0 %v3540
    %3563 = vmatpush.msra.mxu0 %v3539
    %3564 = vmatpush.msra.mxu0 %v3538
    %3565 = vmatmul.f32.gmra.mxu0 %v3547
    %v3566 = vpop.f32.mrf.mxu0
    %v3567 = vadd.f32 0.0, %v3566
    %3568 = vdwg.mxu0
    %v3569 = vadd.f32 %v3531, %v3567
    %v3570 = vld [vmem:[#allocation4 + $0x60] sm:$0x1]
    %v3571 = vld [vmem:[#allocation4 + $0x160] sm:$0x1]
    %v3573 = vrot.slane %v3571, 7
    %v3575 = vsel %vm2892, %v3570, %v3573
    %v3576 = vld [vmem:[#allocation5 + $0x480] sm:$0xff]
    %v3577 = vld [vmem:[#allocation5 + $0x488] sm:$0xff]
    %v3578 = vld [vmem:[#allocation5 + $0x490] sm:$0xff]
    %v3579 = vld [vmem:[#allocation5 + $0x498] sm:$0xff]
    %v3580 = vld [vmem:[#allocation5 + $0x4a0] sm:$0xff]
    %v3581 = vld [vmem:[#allocation5 + $0x4a8] sm:$0xff]
    %v3582 = vld [vmem:[#allocation5 + $0x4b0] sm:$0xff]
    %v3583 = vld [vmem:[#allocation5 + $0x4b8] sm:$0xff]
    %v3585 = vsel %vm2547, %v3575, 0
    %3587 = vmatpush.msra.mxu0 0.0
    %3588 = vmatpush.msra.mxu0 0.0
    %3589 = vmatpush.msra.mxu0 0.0
    %3590 = vmatpush.msra.mxu0 0.0
    %3591 = vmatpush.msra.mxu0 0.0
    %3592 = vmatpush.msra.mxu0 0.0
    %3593 = vmatpush.msra.mxu0 0.0
    %3594 = vmatpush.msra.mxu0 0.0
    %3595 = vmatpush.msra.mxu0 %v3583
    %3596 = vmatpush.msra.mxu0 %v3582
    %3597 = vmatpush.msra.mxu0 %v3581
    %3598 = vmatpush.msra.mxu0 %v3580
    %3599 = vmatpush.msra.mxu0 %v3579
    %3600 = vmatpush.msra.mxu0 %v3578
    %3601 = vmatpush.msra.mxu0 %v3577
    %3602 = vmatpush.msra.mxu0 %v3576
    %3603 = vmatmul.f32.gmra.mxu0 %v3585
    %v3604 = vpop.f32.mrf.mxu0
    %v3605 = vadd.f32 0.0, %v3604
    %3606 = vdwg.mxu0
    %v3607 = vadd.f32 %v3569, %v3605
    %v3608 = vld [vmem:[#allocation4 + $0x62] sm:$0x1]
    %v3609 = vld [vmem:[#allocation4 + $0x162] sm:$0x1]
    %v3611 = vrot.slane %v3609, 7
    %v3613 = vsel %vm2892, %v3608, %v3611
    %v3614 = vld [vmem:[#allocation5 + $0x4c0] sm:$0xff]
    %v3615 = vld [vmem:[#allocation5 + $0x4c8] sm:$0xff]
    %v3616 = vld [vmem:[#allocation5 + $0x4d0] sm:$0xff]
    %v3617 = vld [vmem:[#allocation5 + $0x4d8] sm:$0xff]
    %v3618 = vld [vmem:[#allocation5 + $0x4e0] sm:$0xff]
    %v3619 = vld [vmem:[#allocation5 + $0x4e8] sm:$0xff]
    %v3620 = vld [vmem:[#allocation5 + $0x4f0] sm:$0xff]
    %v3621 = vld [vmem:[#allocation5 + $0x4f8] sm:$0xff]
    %v3623 = vsel %vm2547, %v3613, 0
    %3625 = vmatpush.msra.mxu0 0.0
    %3626 = vmatpush.msra.mxu0 0.0
    %3627 = vmatpush.msra.mxu0 0.0
    %3628 = vmatpush.msra.mxu0 0.0
    %3629 = vmatpush.msra.mxu0 0.0
    %3630 = vmatpush.msra.mxu0 0.0
    %3631 = vmatpush.msra.mxu0 0.0
    %3632 = vmatpush.msra.mxu0 0.0
    %3633 = vmatpush.msra.mxu0 %v3621
    %3634 = vmatpush.msra.mxu0 %v3620
    %3635 = vmatpush.msra.mxu0 %v3619
    %3636 = vmatpush.msra.mxu0 %v3618
    %3637 = vmatpush.msra.mxu0 %v3617
    %3638 = vmatpush.msra.mxu0 %v3616
    %3639 = vmatpush.msra.mxu0 %v3615
    %3640 = vmatpush.msra.mxu0 %v3614
    %3641 = vmatmul.f32.gmra.mxu0 %v3623
    %v3642 = vpop.f32.mrf.mxu0
    %v3643 = vadd.f32 0.0, %v3642
    %3644 = vdwg.mxu0
    %v3645 = vadd.f32 %v3607, %v3643
    %v3646 = vld [vmem:[#allocation4 + $0x64] sm:$0x1]
    %v3647 = vld [vmem:[#allocation4 + $0x164] sm:$0x1]
    %v3649 = vrot.slane %v3647, 7
    %v3651 = vsel %vm2892, %v3646, %v3649
    %v3652 = vld [vmem:[#allocation5 + $0x500] sm:$0xff]
    %v3653 = vld [vmem:[#allocation5 + $0x508] sm:$0xff]
    %v3654 = vld [vmem:[#allocation5 + $0x510] sm:$0xff]
    %v3655 = vld [vmem:[#allocation5 + $0x518] sm:$0xff]
    %v3656 = vld [vmem:[#allocation5 + $0x520] sm:$0xff]
    %v3657 = vld [vmem:[#allocation5 + $0x528] sm:$0xff]
    %v3658 = vld [vmem:[#allocation5 + $0x530] sm:$0xff]
    %v3659 = vld [vmem:[#allocation5 + $0x538] sm:$0xff]
    %v3661 = vsel %vm2547, %v3651, 0
    %3663 = vmatpush.msra.mxu0 0.0
    %3664 = vmatpush.msra.mxu0 0.0
    %3665 = vmatpush.msra.mxu0 0.0
    %3666 = vmatpush.msra.mxu0 0.0
    %3667 = vmatpush.msra.mxu0 0.0
    %3668 = vmatpush.msra.mxu0 0.0
    %3669 = vmatpush.msra.mxu0 0.0
    %3670 = vmatpush.msra.mxu0 0.0
    %3671 = vmatpush.msra.mxu0 %v3659
    %3672 = vmatpush.msra.mxu0 %v3658
    %3673 = vmatpush.msra.mxu0 %v3657
    %3674 = vmatpush.msra.mxu0 %v3656
    %3675 = vmatpush.msra.mxu0 %v3655
    %3676 = vmatpush.msra.mxu0 %v3654
    %3677 = vmatpush.msra.mxu0 %v3653
    %3678 = vmatpush.msra.mxu0 %v3652
    %3679 = vmatmul.f32.gmra.mxu0 %v3661
    %v3680 = vpop.f32.mrf.mxu0
    %v3681 = vadd.f32 0.0, %v3680
    %3682 = vdwg.mxu0
    %v3683 = vadd.f32 %v3645, %v3681
    %v3684 = vld [vmem:[#allocation4 + $0x66] sm:$0x1]
    %v3685 = vld [vmem:[#allocation4 + $0x166] sm:$0x1]
    %v3687 = vrot.slane %v3685, 7
    %v3689 = vsel %vm2892, %v3684, %v3687
    %v3690 = vld [vmem:[#allocation5 + $0x540] sm:$0xff]
    %v3691 = vld [vmem:[#allocation5 + $0x548] sm:$0xff]
    %v3692 = vld [vmem:[#allocation5 + $0x550] sm:$0xff]
    %v3693 = vld [vmem:[#allocation5 + $0x558] sm:$0xff]
    %v3694 = vld [vmem:[#allocation5 + $0x560] sm:$0xff]
    %v3695 = vld [vmem:[#allocation5 + $0x568] sm:$0xff]
    %v3696 = vld [vmem:[#allocation5 + $0x570] sm:$0xff]
    %v3697 = vld [vmem:[#allocation5 + $0x578] sm:$0xff]
    %v3699 = vsel %vm2547, %v3689, 0
    %3701 = vmatpush.msra.mxu0 0.0
    %3702 = vmatpush.msra.mxu0 0.0
    %3703 = vmatpush.msra.mxu0 0.0
    %3704 = vmatpush.msra.mxu0 0.0
    %3705 = vmatpush.msra.mxu0 0.0
    %3706 = vmatpush.msra.mxu0 0.0
    %3707 = vmatpush.msra.mxu0 0.0
    %3708 = vmatpush.msra.mxu0 0.0
    %3709 = vmatpush.msra.mxu0 %v3697
    %3710 = vmatpush.msra.mxu0 %v3696
    %3711 = vmatpush.msra.mxu0 %v3695
    %3712 = vmatpush.msra.mxu0 %v3694
    %3713 = vmatpush.msra.mxu0 %v3693
    %3714 = vmatpush.msra.mxu0 %v3692
    %3715 = vmatpush.msra.mxu0 %v3691
    %3716 = vmatpush.msra.mxu0 %v3690
    %3717 = vmatmul.f32.gmra.mxu0 %v3699
    %v3718 = vpop.f32.mrf.mxu0
    %v3719 = vadd.f32 0.0, %v3718
    %3720 = vdwg.mxu0
    %v3721 = vadd.f32 %v3683, %v3719
    %v3722 = vld [vmem:[#allocation4 + $0x68] sm:$0x1]
    %v3723 = vld [vmem:[#allocation4 + $0x168] sm:$0x1]
    %v3725 = vrot.slane %v3723, 7
    %v3727 = vsel %vm2892, %v3722, %v3725
    %v3728 = vld [vmem:[#allocation5 + $0x580] sm:$0xff]
    %v3729 = vld [vmem:[#allocation5 + $0x588] sm:$0xff]
    %v3730 = vld [vmem:[#allocation5 + $0x590] sm:$0xff]
    %v3731 = vld [vmem:[#allocation5 + $0x598] sm:$0xff]
    %v3732 = vld [vmem:[#allocation5 + $0x5a0] sm:$0xff]
    %v3733 = vld [vmem:[#allocation5 + $0x5a8] sm:$0xff]
    %v3734 = vld [vmem:[#allocation5 + $0x5b0] sm:$0xff]
    %v3735 = vld [vmem:[#allocation5 + $0x5b8] sm:$0xff]
    %v3737 = vsel %vm2547, %v3727, 0
    %3739 = vmatpush.msra.mxu0 0.0
    %3740 = vmatpush.msra.mxu0 0.0
    %3741 = vmatpush.msra.mxu0 0.0
    %3742 = vmatpush.msra.mxu0 0.0
    %3743 = vmatpush.msra.mxu0 0.0
    %3744 = vmatpush.msra.mxu0 0.0
    %3745 = vmatpush.msra.mxu0 0.0
    %3746 = vmatpush.msra.mxu0 0.0
    %3747 = vmatpush.msra.mxu0 %v3735
    %3748 = vmatpush.msra.mxu0 %v3734
    %3749 = vmatpush.msra.mxu0 %v3733
    %3750 = vmatpush.msra.mxu0 %v3732
    %3751 = vmatpush.msra.mxu0 %v3731
    %3752 = vmatpush.msra.mxu0 %v3730
    %3753 = vmatpush.msra.mxu0 %v3729
    %3754 = vmatpush.msra.mxu0 %v3728
    %3755 = vmatmul.f32.gmra.mxu0 %v3737
    %v3756 = vpop.f32.mrf.mxu0
    %v3757 = vadd.f32 0.0, %v3756
    %3758 = vdwg.mxu0
    %v3759 = vadd.f32 %v3721, %v3757
    %v3760 = vld [vmem:[#allocation4 + $0x6a] sm:$0x1]
    %v3761 = vld [vmem:[#allocation4 + $0x16a] sm:$0x1]
    %v3763 = vrot.slane %v3761, 7
    %v3765 = vsel %vm2892, %v3760, %v3763
    %v3766 = vld [vmem:[#allocation5 + $0x5c0] sm:$0xff]
    %v3767 = vld [vmem:[#allocation5 + $0x5c8] sm:$0xff]
    %v3768 = vld [vmem:[#allocation5 + $0x5d0] sm:$0xff]
    %v3769 = vld [vmem:[#allocation5 + $0x5d8] sm:$0xff]
    %v3770 = vld [vmem:[#allocation5 + $0x5e0] sm:$0xff]
    %v3771 = vld [vmem:[#allocation5 + $0x5e8] sm:$0xff]
    %v3772 = vld [vmem:[#allocation5 + $0x5f0] sm:$0xff]
    %v3773 = vld [vmem:[#allocation5 + $0x5f8] sm:$0xff]
    %v3775 = vsel %vm2547, %v3765, 0
    %3777 = vmatpush.msra.mxu0 0.0
    %3778 = vmatpush.msra.mxu0 0.0
    %3779 = vmatpush.msra.mxu0 0.0
    %3780 = vmatpush.msra.mxu0 0.0
    %3781 = vmatpush.msra.mxu0 0.0
    %3782 = vmatpush.msra.mxu0 0.0
    %3783 = vmatpush.msra.mxu0 0.0
    %3784 = vmatpush.msra.mxu0 0.0
    %3785 = vmatpush.msra.mxu0 %v3773
    %3786 = vmatpush.msra.mxu0 %v3772
    %3787 = vmatpush.msra.mxu0 %v3771
    %3788 = vmatpush.msra.mxu0 %v3770
    %3789 = vmatpush.msra.mxu0 %v3769
    %3790 = vmatpush.msra.mxu0 %v3768
    %3791 = vmatpush.msra.mxu0 %v3767
    %3792 = vmatpush.msra.mxu0 %v3766
    %3793 = vmatmul.f32.gmra.mxu0 %v3775
    %v3794 = vpop.f32.mrf.mxu0
    %v3795 = vadd.f32 0.0, %v3794
    %3796 = vdwg.mxu0
    %v3797 = vadd.f32 %v3759, %v3795
    %v3798 = vld [vmem:[#allocation4 + $0x80] sm:$0x1]
    %v3799 = vld [vmem:[#allocation4 + $0x180] sm:$0x1]
    %v3801 = vrot.slane %v3799, 7
    %v3803 = vsel %vm2892, %v3798, %v3801
    %v3804 = vld [vmem:[#allocation5 + $0x600] sm:$0xff]
    %v3805 = vld [vmem:[#allocation5 + $0x608] sm:$0xff]
    %v3806 = vld [vmem:[#allocation5 + $0x610] sm:$0xff]
    %v3807 = vld [vmem:[#allocation5 + $0x618] sm:$0xff]
    %v3808 = vld [vmem:[#allocation5 + $0x620] sm:$0xff]
    %v3809 = vld [vmem:[#allocation5 + $0x628] sm:$0xff]
    %v3810 = vld [vmem:[#allocation5 + $0x630] sm:$0xff]
    %v3811 = vld [vmem:[#allocation5 + $0x638] sm:$0xff]
    %v3813 = vsel %vm2547, %v3803, 0
    %3815 = vmatpush.msra.mxu0 0.0
    %3816 = vmatpush.msra.mxu0 0.0
    %3817 = vmatpush.msra.mxu0 0.0
    %3818 = vmatpush.msra.mxu0 0.0
    %3819 = vmatpush.msra.mxu0 0.0
    %3820 = vmatpush.msra.mxu0 0.0
    %3821 = vmatpush.msra.mxu0 0.0
    %3822 = vmatpush.msra.mxu0 0.0
    %3823 = vmatpush.msra.mxu0 %v3811
    %3824 = vmatpush.msra.mxu0 %v3810
    %3825 = vmatpush.msra.mxu0 %v3809
    %3826 = vmatpush.msra.mxu0 %v3808
    %3827 = vmatpush.msra.mxu0 %v3807
    %3828 = vmatpush.msra.mxu0 %v3806
    %3829 = vmatpush.msra.mxu0 %v3805
    %3830 = vmatpush.msra.mxu0 %v3804
    %3831 = vmatmul.f32.gmra.mxu0 %v3813
    %v3832 = vpop.f32.mrf.mxu0
    %v3833 = vadd.f32 0.0, %v3832
    %3834 = vdwg.mxu0
    %v3835 = vadd.f32 %v3797, %v3833
    %v3836 = vld [vmem:[#allocation4 + $0x82] sm:$0x1]
    %v3837 = vld [vmem:[#allocation4 + $0x182] sm:$0x1]
    %v3839 = vrot.slane %v3837, 7
    %v3841 = vsel %vm2892, %v3836, %v3839
    %v3842 = vld [vmem:[#allocation5 + $0x640] sm:$0xff]
    %v3843 = vld [vmem:[#allocation5 + $0x648] sm:$0xff]
    %v3844 = vld [vmem:[#allocation5 + $0x650] sm:$0xff]
    %v3845 = vld [vmem:[#allocation5 + $0x658] sm:$0xff]
    %v3846 = vld [vmem:[#allocation5 + $0x660] sm:$0xff]
    %v3847 = vld [vmem:[#allocation5 + $0x668] sm:$0xff]
    %v3848 = vld [vmem:[#allocation5 + $0x670] sm:$0xff]
    %v3849 = vld [vmem:[#allocation5 + $0x678] sm:$0xff]
    %v3851 = vsel %vm2547, %v3841, 0
    %3853 = vmatpush.msra.mxu0 0.0
    %3854 = vmatpush.msra.mxu0 0.0
    %3855 = vmatpush.msra.mxu0 0.0
    %3856 = vmatpush.msra.mxu0 0.0
    %3857 = vmatpush.msra.mxu0 0.0
    %3858 = vmatpush.msra.mxu0 0.0
    %3859 = vmatpush.msra.mxu0 0.0
    %3860 = vmatpush.msra.mxu0 0.0
    %3861 = vmatpush.msra.mxu0 %v3849
    %3862 = vmatpush.msra.mxu0 %v3848
    %3863 = vmatpush.msra.mxu0 %v3847
    %3864 = vmatpush.msra.mxu0 %v3846
    %3865 = vmatpush.msra.mxu0 %v3845
    %3866 = vmatpush.msra.mxu0 %v3844
    %3867 = vmatpush.msra.mxu0 %v3843
    %3868 = vmatpush.msra.mxu0 %v3842
    %3869 = vmatmul.f32.gmra.mxu0 %v3851
    %v3870 = vpop.f32.mrf.mxu0
    %v3871 = vadd.f32 0.0, %v3870
    %3872 = vdwg.mxu0
    %v3873 = vadd.f32 %v3835, %v3871
    %v3874 = vld [vmem:[#allocation4 + $0x84] sm:$0x1]
    %v3875 = vld [vmem:[#allocation4 + $0x184] sm:$0x1]
    %v3877 = vrot.slane %v3875, 7
    %v3879 = vsel %vm2892, %v3874, %v3877
    %v3880 = vld [vmem:[#allocation5 + $0x680] sm:$0xff]
    %v3881 = vld [vmem:[#allocation5 + $0x688] sm:$0xff]
    %v3882 = vld [vmem:[#allocation5 + $0x690] sm:$0xff]
    %v3883 = vld [vmem:[#allocation5 + $0x698] sm:$0xff]
    %v3884 = vld [vmem:[#allocation5 + $0x6a0] sm:$0xff]
    %v3885 = vld [vmem:[#allocation5 + $0x6a8] sm:$0xff]
    %v3886 = vld [vmem:[#allocation5 + $0x6b0] sm:$0xff]
    %v3887 = vld [vmem:[#allocation5 + $0x6b8] sm:$0xff]
    %v3889 = vsel %vm2547, %v3879, 0
    %3891 = vmatpush.msra.mxu0 0.0
    %3892 = vmatpush.msra.mxu0 0.0
    %3893 = vmatpush.msra.mxu0 0.0
    %3894 = vmatpush.msra.mxu0 0.0
    %3895 = vmatpush.msra.mxu0 0.0
    %3896 = vmatpush.msra.mxu0 0.0
    %3897 = vmatpush.msra.mxu0 0.0
    %3898 = vmatpush.msra.mxu0 0.0
    %3899 = vmatpush.msra.mxu0 %v3887
    %3900 = vmatpush.msra.mxu0 %v3886
    %3901 = vmatpush.msra.mxu0 %v3885
    %3902 = vmatpush.msra.mxu0 %v3884
    %3903 = vmatpush.msra.mxu0 %v3883
    %3904 = vmatpush.msra.mxu0 %v3882
    %3905 = vmatpush.msra.mxu0 %v3881
    %3906 = vmatpush.msra.mxu0 %v3880
    %3907 = vmatmul.f32.gmra.mxu0 %v3889
    %v3908 = vpop.f32.mrf.mxu0
    %v3909 = vadd.f32 0.0, %v3908
    %3910 = vdwg.mxu0
    %v3911 = vadd.f32 %v3873, %v3909
    %v3912 = vld [vmem:[#allocation4 + $0x86] sm:$0x1]
    %v3913 = vld [vmem:[#allocation4 + $0x186] sm:$0x1]
    %v3915 = vrot.slane %v3913, 7
    %v3917 = vsel %vm2892, %v3912, %v3915
    %v3918 = vld [vmem:[#allocation5 + $0x6c0] sm:$0xff]
    %v3919 = vld [vmem:[#allocation5 + $0x6c8] sm:$0xff]
    %v3920 = vld [vmem:[#allocation5 + $0x6d0] sm:$0xff]
    %v3921 = vld [vmem:[#allocation5 + $0x6d8] sm:$0xff]
    %v3922 = vld [vmem:[#allocation5 + $0x6e0] sm:$0xff]
    %v3923 = vld [vmem:[#allocation5 + $0x6e8] sm:$0xff]
    %v3924 = vld [vmem:[#allocation5 + $0x6f0] sm:$0xff]
    %v3925 = vld [vmem:[#allocation5 + $0x6f8] sm:$0xff]
    %v3927 = vsel %vm2547, %v3917, 0
    %3929 = vmatpush.msra.mxu0 0.0
    %3930 = vmatpush.msra.mxu0 0.0
    %3931 = vmatpush.msra.mxu0 0.0
    %3932 = vmatpush.msra.mxu0 0.0
    %3933 = vmatpush.msra.mxu0 0.0
    %3934 = vmatpush.msra.mxu0 0.0
    %3935 = vmatpush.msra.mxu0 0.0
    %3936 = vmatpush.msra.mxu0 0.0
    %3937 = vmatpush.msra.mxu0 %v3925
    %3938 = vmatpush.msra.mxu0 %v3924
    %3939 = vmatpush.msra.mxu0 %v3923
    %3940 = vmatpush.msra.mxu0 %v3922
    %3941 = vmatpush.msra.mxu0 %v3921
    %3942 = vmatpush.msra.mxu0 %v3920
    %3943 = vmatpush.msra.mxu0 %v3919
    %3944 = vmatpush.msra.mxu0 %v3918
    %3945 = vmatmul.f32.gmra.mxu0 %v3927
    %v3946 = vpop.f32.mrf.mxu0
    %v3947 = vadd.f32 0.0, %v3946
    %3948 = vdwg.mxu0
    %v3949 = vadd.f32 %v3911, %v3947
    %v3950 = vld [vmem:[#allocation4 + $0x88] sm:$0x1]
    %v3951 = vld [vmem:[#allocation4 + $0x188] sm:$0x1]
    %v3953 = vrot.slane %v3951, 7
    %v3955 = vsel %vm2892, %v3950, %v3953
    %v3956 = vld [vmem:[#allocation5 + $0x700] sm:$0xff]
    %v3957 = vld [vmem:[#allocation5 + $0x708] sm:$0xff]
    %v3958 = vld [vmem:[#allocation5 + $0x710] sm:$0xff]
    %v3959 = vld [vmem:[#allocation5 + $0x718] sm:$0xff]
    %v3960 = vld [vmem:[#allocation5 + $0x720] sm:$0xff]
    %v3961 = vld [vmem:[#allocation5 + $0x728] sm:$0xff]
    %v3962 = vld [vmem:[#allocation5 + $0x730] sm:$0xff]
    %v3963 = vld [vmem:[#allocation5 + $0x738] sm:$0xff]
    %v3965 = vsel %vm2547, %v3955, 0
    %3967 = vmatpush.msra.mxu0 0.0
    %3968 = vmatpush.msra.mxu0 0.0
    %3969 = vmatpush.msra.mxu0 0.0
    %3970 = vmatpush.msra.mxu0 0.0
    %3971 = vmatpush.msra.mxu0 0.0
    %3972 = vmatpush.msra.mxu0 0.0
    %3973 = vmatpush.msra.mxu0 0.0
    %3974 = vmatpush.msra.mxu0 0.0
    %3975 = vmatpush.msra.mxu0 %v3963
    %3976 = vmatpush.msra.mxu0 %v3962
    %3977 = vmatpush.msra.mxu0 %v3961
    %3978 = vmatpush.msra.mxu0 %v3960
    %3979 = vmatpush.msra.mxu0 %v3959
    %3980 = vmatpush.msra.mxu0 %v3958
    %3981 = vmatpush.msra.mxu0 %v3957
    %3982 = vmatpush.msra.mxu0 %v3956
    %3983 = vmatmul.f32.gmra.mxu0 %v3965
    %v3984 = vpop.f32.mrf.mxu0
    %v3985 = vadd.f32 0.0, %v3984
    %3986 = vdwg.mxu0
    %v3987 = vadd.f32 %v3949, %v3985
    %v3988 = vld [vmem:[#allocation4 + $0x8a] sm:$0x1]
    %v3989 = vld [vmem:[#allocation4 + $0x18a] sm:$0x1]
    %v3991 = vrot.slane %v3989, 7
    %v3993 = vsel %vm2892, %v3988, %v3991
    %v3994 = vld [vmem:[#allocation5 + $0x740] sm:$0xff]
    %v3995 = vld [vmem:[#allocation5 + $0x748] sm:$0xff]
    %v3996 = vld [vmem:[#allocation5 + $0x750] sm:$0xff]
    %v3997 = vld [vmem:[#allocation5 + $0x758] sm:$0xff]
    %v3998 = vld [vmem:[#allocation5 + $0x760] sm:$0xff]
    %v3999 = vld [vmem:[#allocation5 + $0x768] sm:$0xff]
    %v4000 = vld [vmem:[#allocation5 + $0x770] sm:$0xff]
    %v4001 = vld [vmem:[#allocation5 + $0x778] sm:$0xff]
    %v4003 = vsel %vm2547, %v3993, 0
    %4005 = vmatpush.msra.mxu0 0.0
    %4006 = vmatpush.msra.mxu0 0.0
    %4007 = vmatpush.msra.mxu0 0.0
    %4008 = vmatpush.msra.mxu0 0.0
    %4009 = vmatpush.msra.mxu0 0.0
    %4010 = vmatpush.msra.mxu0 0.0
    %4011 = vmatpush.msra.mxu0 0.0
    %4012 = vmatpush.msra.mxu0 0.0
    %4013 = vmatpush.msra.mxu0 %v4001
    %4014 = vmatpush.msra.mxu0 %v4000
    %4015 = vmatpush.msra.mxu0 %v3999
    %4016 = vmatpush.msra.mxu0 %v3998
    %4017 = vmatpush.msra.mxu0 %v3997
    %4018 = vmatpush.msra.mxu0 %v3996
    %4019 = vmatpush.msra.mxu0 %v3995
    %4020 = vmatpush.msra.mxu0 %v3994
    %4021 = vmatmul.f32.gmra.mxu0 %v4003
    %v4022 = vpop.f32.mrf.mxu0
    %v4023 = vadd.f32 0.0, %v4022
    %4024 = vdwg.mxu0
    %v4025 = vadd.f32 %v3987, %v4023
    %v4026 = vld [vmem:[#allocation4 + $0xa0] sm:$0x1]
    %v4027 = vld [vmem:[#allocation4 + $0x1a0] sm:$0x1]
    %v4029 = vrot.slane %v4027, 7
    %v4031 = vsel %vm2892, %v4026, %v4029
    %v4032 = vld [vmem:[#allocation5 + $0x780] sm:$0xff]
    %v4033 = vld [vmem:[#allocation5 + $0x788] sm:$0xff]
    %v4034 = vld [vmem:[#allocation5 + $0x790] sm:$0xff]
    %v4035 = vld [vmem:[#allocation5 + $0x798] sm:$0xff]
    %v4036 = vld [vmem:[#allocation5 + $0x7a0] sm:$0xff]
    %v4037 = vld [vmem:[#allocation5 + $0x7a8] sm:$0xff]
    %v4038 = vld [vmem:[#allocation5 + $0x7b0] sm:$0xff]
    %v4039 = vld [vmem:[#allocation5 + $0x7b8] sm:$0xff]
    %v4041 = vsel %vm2547, %v4031, 0
    %4043 = vmatpush.msra.mxu0 0.0
    %4044 = vmatpush.msra.mxu0 0.0
    %4045 = vmatpush.msra.mxu0 0.0
    %4046 = vmatpush.msra.mxu0 0.0
    %4047 = vmatpush.msra.mxu0 0.0
    %4048 = vmatpush.msra.mxu0 0.0
    %4049 = vmatpush.msra.mxu0 0.0
    %4050 = vmatpush.msra.mxu0 0.0
    %4051 = vmatpush.msra.mxu0 %v4039
    %4052 = vmatpush.msra.mxu0 %v4038
    %4053 = vmatpush.msra.mxu0 %v4037
    %4054 = vmatpush.msra.mxu0 %v4036
    %4055 = vmatpush.msra.mxu0 %v4035
    %4056 = vmatpush.msra.mxu0 %v4034
    %4057 = vmatpush.msra.mxu0 %v4033
    %4058 = vmatpush.msra.mxu0 %v4032
    %4059 = vmatmul.f32.gmra.mxu0 %v4041
    %v4060 = vpop.f32.mrf.mxu0
    %v4061 = vadd.f32 0.0, %v4060
    %4062 = vdwg.mxu0
    %v4063 = vadd.f32 %v4025, %v4061
    %v4064 = vld [vmem:[#allocation4 + $0xa2] sm:$0x1]
    %v4065 = vld [vmem:[#allocation4 + $0x1a2] sm:$0x1]
    %v4067 = vrot.slane %v4065, 7
    %v4069 = vsel %vm2892, %v4064, %v4067
    %v4070 = vld [vmem:[#allocation5 + $0x7c0] sm:$0xff]
    %v4071 = vld [vmem:[#allocation5 + $0x7c8] sm:$0xff]
    %v4072 = vld [vmem:[#allocation5 + $0x7d0] sm:$0xff]
    %v4073 = vld [vmem:[#allocation5 + $0x7d8] sm:$0xff]
    %v4074 = vld [vmem:[#allocation5 + $0x7e0] sm:$0xff]
    %v4075 = vld [vmem:[#allocation5 + $0x7e8] sm:$0xff]
    %v4076 = vld [vmem:[#allocation5 + $0x7f0] sm:$0xff]
    %v4077 = vld [vmem:[#allocation5 + $0x7f8] sm:$0xff]
    %v4079 = vsel %vm2547, %v4069, 0
    %4081 = vmatpush.msra.mxu0 0.0
    %4082 = vmatpush.msra.mxu0 0.0
    %4083 = vmatpush.msra.mxu0 0.0
    %4084 = vmatpush.msra.mxu0 0.0
    %4085 = vmatpush.msra.mxu0 0.0
    %4086 = vmatpush.msra.mxu0 0.0
    %4087 = vmatpush.msra.mxu0 0.0
    %4088 = vmatpush.msra.mxu0 0.0
    %4089 = vmatpush.msra.mxu0 %v4077
    %4090 = vmatpush.msra.mxu0 %v4076
    %4091 = vmatpush.msra.mxu0 %v4075
    %4092 = vmatpush.msra.mxu0 %v4074
    %4093 = vmatpush.msra.mxu0 %v4073
    %4094 = vmatpush.msra.mxu0 %v4072
    %4095 = vmatpush.msra.mxu0 %v4071
    %4096 = vmatpush.msra.mxu0 %v4070
    %4097 = vmatmul.f32.gmra.mxu0 %v4079
    %v4098 = vpop.f32.mrf.mxu0
    %v4099 = vadd.f32 0.0, %v4098
    %4100 = vdwg.mxu0
    %v4101 = vadd.f32 %v4063, %v4099
    %v4102 = vld [vmem:[#allocation4 + $0xa4] sm:$0x1]
    %v4103 = vld [vmem:[#allocation4 + $0x1a4] sm:$0x1]
    %v4105 = vrot.slane %v4103, 7
    %v4107 = vsel %vm2892, %v4102, %v4105
    %v4108 = vld [vmem:[#allocation5 + $0x800] sm:$0xff]
    %v4109 = vld [vmem:[#allocation5 + $0x808] sm:$0xff]
    %v4110 = vld [vmem:[#allocation5 + $0x810] sm:$0xff]
    %v4111 = vld [vmem:[#allocation5 + $0x818] sm:$0xff]
    %v4112 = vld [vmem:[#allocation5 + $0x820] sm:$0xff]
    %v4113 = vld [vmem:[#allocation5 + $0x828] sm:$0xff]
    %v4114 = vld [vmem:[#allocation5 + $0x830] sm:$0xff]
    %v4115 = vld [vmem:[#allocation5 + $0x838] sm:$0xff]
    %v4117 = vsel %vm2547, %v4107, 0
    %4119 = vmatpush.msra.mxu0 0.0
    %4120 = vmatpush.msra.mxu0 0.0
    %4121 = vmatpush.msra.mxu0 0.0
    %4122 = vmatpush.msra.mxu0 0.0
    %4123 = vmatpush.msra.mxu0 0.0
    %4124 = vmatpush.msra.mxu0 0.0
    %4125 = vmatpush.msra.mxu0 0.0
    %4126 = vmatpush.msra.mxu0 0.0
    %4127 = vmatpush.msra.mxu0 %v4115
    %4128 = vmatpush.msra.mxu0 %v4114
    %4129 = vmatpush.msra.mxu0 %v4113
    %4130 = vmatpush.msra.mxu0 %v4112
    %4131 = vmatpush.msra.mxu0 %v4111
    %4132 = vmatpush.msra.mxu0 %v4110
    %4133 = vmatpush.msra.mxu0 %v4109
    %4134 = vmatpush.msra.mxu0 %v4108
    %4135 = vmatmul.f32.gmra.mxu0 %v4117
    %v4136 = vpop.f32.mrf.mxu0
    %v4137 = vadd.f32 0.0, %v4136
    %4138 = vdwg.mxu0
    %v4139 = vadd.f32 %v4101, %v4137
    %v4140 = vld [vmem:[#allocation4 + $0xa6] sm:$0x1]
    %v4141 = vld [vmem:[#allocation4 + $0x1a6] sm:$0x1]
    %v4143 = vrot.slane %v4141, 7
    %v4145 = vsel %vm2892, %v4140, %v4143
    %v4146 = vld [vmem:[#allocation5 + $0x840] sm:$0xff]
    %v4147 = vld [vmem:[#allocation5 + $0x848] sm:$0xff]
    %v4148 = vld [vmem:[#allocation5 + $0x850] sm:$0xff]
    %v4149 = vld [vmem:[#allocation5 + $0x858] sm:$0xff]
    %v4150 = vld [vmem:[#allocation5 + $0x860] sm:$0xff]
    %v4151 = vld [vmem:[#allocation5 + $0x868] sm:$0xff]
    %v4152 = vld [vmem:[#allocation5 + $0x870] sm:$0xff]
    %v4153 = vld [vmem:[#allocation5 + $0x878] sm:$0xff]
    %v4155 = vsel %vm2547, %v4145, 0
    %4157 = vmatpush.msra.mxu0 0.0
    %4158 = vmatpush.msra.mxu0 0.0
    %4159 = vmatpush.msra.mxu0 0.0
    %4160 = vmatpush.msra.mxu0 0.0
    %4161 = vmatpush.msra.mxu0 0.0
    %4162 = vmatpush.msra.mxu0 0.0
    %4163 = vmatpush.msra.mxu0 0.0
    %4164 = vmatpush.msra.mxu0 0.0
    %4165 = vmatpush.msra.mxu0 %v4153
    %4166 = vmatpush.msra.mxu0 %v4152
    %4167 = vmatpush.msra.mxu0 %v4151
    %4168 = vmatpush.msra.mxu0 %v4150
    %4169 = vmatpush.msra.mxu0 %v4149
    %4170 = vmatpush.msra.mxu0 %v4148
    %4171 = vmatpush.msra.mxu0 %v4147
    %4172 = vmatpush.msra.mxu0 %v4146
    %4173 = vmatmul.f32.gmra.mxu0 %v4155
    %v4174 = vpop.f32.mrf.mxu0
    %v4175 = vadd.f32 0.0, %v4174
    %4176 = vdwg.mxu0
    %v4177 = vadd.f32 %v4139, %v4175
    %v4178 = vld [vmem:[#allocation4 + $0xa8] sm:$0x1]
    %v4179 = vld [vmem:[#allocation4 + $0x1a8] sm:$0x1]
    %v4181 = vrot.slane %v4179, 7
    %v4183 = vsel %vm2892, %v4178, %v4181
    %v4184 = vld [vmem:[#allocation5 + $0x880] sm:$0xff]
    %v4185 = vld [vmem:[#allocation5 + $0x888] sm:$0xff]
    %v4186 = vld [vmem:[#allocation5 + $0x890] sm:$0xff]
    %v4187 = vld [vmem:[#allocation5 + $0x898] sm:$0xff]
    %v4188 = vld [vmem:[#allocation5 + $0x8a0] sm:$0xff]
    %v4189 = vld [vmem:[#allocation5 + $0x8a8] sm:$0xff]
    %v4190 = vld [vmem:[#allocation5 + $0x8b0] sm:$0xff]
    %v4191 = vld [vmem:[#allocation5 + $0x8b8] sm:$0xff]
    %v4193 = vsel %vm2547, %v4183, 0
    %4195 = vmatpush.msra.mxu0 0.0
    %4196 = vmatpush.msra.mxu0 0.0
    %4197 = vmatpush.msra.mxu0 0.0
    %4198 = vmatpush.msra.mxu0 0.0
    %4199 = vmatpush.msra.mxu0 0.0
    %4200 = vmatpush.msra.mxu0 0.0
    %4201 = vmatpush.msra.mxu0 0.0
    %4202 = vmatpush.msra.mxu0 0.0
    %4203 = vmatpush.msra.mxu0 %v4191
    %4204 = vmatpush.msra.mxu0 %v4190
    %4205 = vmatpush.msra.mxu0 %v4189
    %4206 = vmatpush.msra.mxu0 %v4188
    %4207 = vmatpush.msra.mxu0 %v4187
    %4208 = vmatpush.msra.mxu0 %v4186
    %4209 = vmatpush.msra.mxu0 %v4185
    %4210 = vmatpush.msra.mxu0 %v4184
    %4211 = vmatmul.f32.gmra.mxu0 %v4193
    %v4212 = vpop.f32.mrf.mxu0
    %v4213 = vadd.f32 0.0, %v4212
    %4214 = vdwg.mxu0
    %v4215 = vadd.f32 %v4177, %v4213
    %v4216 = vld [vmem:[#allocation4 + $0xaa] sm:$0x1]
    %v4217 = vld [vmem:[#allocation4 + $0x1aa] sm:$0x1]
    %v4219 = vrot.slane %v4217, 7
    %v4221 = vsel %vm2892, %v4216, %v4219
    %v4222 = vld [vmem:[#allocation5 + $0x8c0] sm:$0xff]
    %v4223 = vld [vmem:[#allocation5 + $0x8c8] sm:$0xff]
    %v4224 = vld [vmem:[#allocation5 + $0x8d0] sm:$0xff]
    %v4225 = vld [vmem:[#allocation5 + $0x8d8] sm:$0xff]
    %v4226 = vld [vmem:[#allocation5 + $0x8e0] sm:$0xff]
    %v4227 = vld [vmem:[#allocation5 + $0x8e8] sm:$0xff]
    %v4228 = vld [vmem:[#allocation5 + $0x8f0] sm:$0xff]
    %v4229 = vld [vmem:[#allocation5 + $0x8f8] sm:$0xff]
    %v4231 = vsel %vm2547, %v4221, 0
    %4233 = vmatpush.msra.mxu0 0.0
    %4234 = vmatpush.msra.mxu0 0.0
    %4235 = vmatpush.msra.mxu0 0.0
    %4236 = vmatpush.msra.mxu0 0.0
    %4237 = vmatpush.msra.mxu0 0.0
    %4238 = vmatpush.msra.mxu0 0.0
    %4239 = vmatpush.msra.mxu0 0.0
    %4240 = vmatpush.msra.mxu0 0.0
    %4241 = vmatpush.msra.mxu0 %v4229
    %4242 = vmatpush.msra.mxu0 %v4228
    %4243 = vmatpush.msra.mxu0 %v4227
    %4244 = vmatpush.msra.mxu0 %v4226
    %4245 = vmatpush.msra.mxu0 %v4225
    %4246 = vmatpush.msra.mxu0 %v4224
    %4247 = vmatpush.msra.mxu0 %v4223
    %4248 = vmatpush.msra.mxu0 %v4222
    %4249 = vmatmul.f32.gmra.mxu0 %v4231
    %v4250 = vpop.f32.mrf.mxu0
    %v4251 = vadd.f32 0.0, %v4250
    %4252 = vdwg.mxu0
    %v4253 = vadd.f32 %v4215, %v4251
    %v4254 = vld [vmem:[%s6] sm:$0x1]
    %v4256 = vperm.slane %v4254, 0
    %v4258 = vadd.f32 %v4253, %v4256
    %v4259 = vmax.f32 %v4258, 0.0
    %v4260 = vld [vmem:[%s7] sm:$0xff]
    %v4261 = vld [vmem:[%s7 + $0x8] sm:$0xff]
    %v4262 = vld [vmem:[%s7 + $0x10] sm:$0xff]
    %v4263 = vld [vmem:[%s7 + $0x18] sm:$0xff]
    %v4264 = vld [vmem:[%s7 + $0x20] sm:$0xff]
    %v4265 = vld [vmem:[%s7 + $0x28] sm:$0xff]
    %v4266 = vld [vmem:[%s7 + $0x30] sm:$0xff]
    %v4267 = vld [vmem:[%s7 + $0x38] sm:$0xff]
    %v4268 = vld [vmem:[%s7 + $0x40] sm:$0xff]
    %v4269 = vld [vmem:[%s7 + $0x48] sm:$0xff]
    %v4270 = vld [vmem:[%s7 + $0x50] sm:$0xff]
    %v4271 = vld [vmem:[%s7 + $0x58] sm:$0xff]
    %v4272 = vld [vmem:[%s7 + $0x60] sm:$0xff]
    %v4273 = vld [vmem:[%s7 + $0x68] sm:$0xff]
    %v4274 = vld [vmem:[%s7 + $0x70] sm:$0xff]
    %v4275 = vld [vmem:[%s7 + $0x78] sm:$0xff]
    %v4276 = vld [vmem:[%s8] sm:$0x1]
    %v4278 = vperm.slane %v4276, 0
    %4280 = vmatpush.msra.mxu0 %v4275
    %4281 = vmatpush.msra.mxu0 %v4274
    %4282 = vmatpush.msra.mxu0 %v4273
    %4283 = vmatpush.msra.mxu0 %v4272
    %4284 = vmatpush.msra.mxu0 %v4271
    %4285 = vmatpush.msra.mxu0 %v4270
    %4286 = vmatpush.msra.mxu0 %v4269
    %4287 = vmatpush.msra.mxu0 %v4268
    %4288 = vmatpush.msra.mxu0 %v4267
    %4289 = vmatpush.msra.mxu0 %v4266
    %4290 = vmatpush.msra.mxu0 %v4265
    %4291 = vmatpush.msra.mxu0 %v4264
    %4292 = vmatpush.msra.mxu0 %v4263
    %4293 = vmatpush.msra.mxu0 %v4262
    %4294 = vmatpush.msra.mxu0 %v4261
    %4295 = vmatpush.msra.mxu0 %v4260
    %4296 = vmatmul.f32.gmra.mxu0 %v4259
    %v4297 = vpop.f32.mrf.mxu0
    %v4298 = vadd.f32 %v4278, %v4297
    %4299 = vdwg.mxu0
    %vm4300 = vcmask 74752
    %v4301 = vsel %vm4300, %v4298, -inf
    %4302 = vmax.xlane.f32.xlu0 %v4301
    %v4303 = vpop.xlane.xlu0 %4302
    %v4304 = vsub.f32 %v4298, %v4303
    %v4305 = vmul.f32 %v4304, 1.442695
    %v4306 = vpow.pop %v4305
    %v4307 = vsel %vm4300, %v4306, 0.0
    %4308 = vadd.xlane.f32.xlu0 %v4307
    %v4309 = vpop.xlane.xlu0 %4308
    %v4310 = vlog2.pop %v4309
    %v4311 = vmul.f32 %v4310, 0.6931472
    %v4312 = vsub.f32 %v4304, %v4311
    %4313 = vst.msk [vmem:[#allocation10] sm:$0x3] %vm4300, %v4312
    // Predicated region
    $region57: #{cnn_forward.1} parent=1 // pred_check
      _
    $region58: #{cnn_forward.1} parent=1 // pred_check_branch
      %4315 = sbr.rel (0) target = $region60
    $region59: #{cnn_forward.1} parent=1 // pred_region
      %4317 = vsyncadd [#allocation9], 0
      %s4319 = sshll.u32 [#allocation10], 4
      %s4320 = int_to_ptr.vmem [resolvable:$true] %s4319
      %s4321 = sshll.u32 %s9, 4
      %s4322 = int_to_ptr.hbm [resolvable:$true] %s4321
      %4324 = dma.vmem_to_hbm [thread:$0]  %s4320, 32, %s4322, [#allocation9]
    $region60: #{cnn_forward.1} parent=1 // pred_fallthru
      _
    // Predicated region
    $region61: #{cnn_forward.1} parent=1 // pred_check
      _
    $region62: #{cnn_forward.1} parent=1 // pred_check_branch
      %4326 = sbr.rel (0) target = $region64
    $region63: #{cnn_forward.1} parent=1 // pred_region
      %4328 = dma.done [#allocation9], 32
    $region64: #{cnn_forward.1} parent=1 // pred_fallthru
      _
    %4329 = vsyncpa [#allocation8], 1
    %4330 = vsyncpa [#allocation9], 1
  %4331 = vsyncmov [#allocation6]
  %s4332 = vpop.sfrf %4331
  %p4333 = scmp.eq.s32.totalorder %s4332, 0
  %p4334 = pneg %p4333
  %4336 = shalt.err (%p4334)

</llo_original>
